<compile_context>
chip_gen: v5e
topology: v5e:2x2
jax: 0.10.0
libtpu: 0.0.40
codegen_flags: <defaults>
</compile_context>

<pallas_src>
import jax
import jax.numpy as jnp
from jax.experimental import pallas as pl
from jax.experimental.pallas import tpu as pltpu

STATE_DIM = 24    # BipedalWalker-v3 observation dim
ACTION_DIM = 4    # BipedalWalker-v3 action dim
H1 = 400
H2 = 300


def _round_up(x, m):
    return ((x + m - 1) // m) * m


def critic_kernel(s_ref, a_ref, w1s_ref, w1a_ref, b1_ref, w2_ref, b2_ref,
                  w3_ref, b3_ref, q_ref):
    # s_ref: [TB, STATE_DIM], a_ref: [TB, ACTION_DIM] -- one batch tile per grid step.
    # Weights/biases use constant index_maps, so they are VMEM-resident across steps.

    # layer 1: split matmul == concat([state, action], 1) @ W1, then bias + ReLU.
    h1 = jnp.dot(s_ref[...], w1s_ref[...], preferred_element_type=jnp.float32)
    h1 = h1 + jnp.dot(a_ref[...], w1a_ref[...], preferred_element_type=jnp.float32)
    h1 = jnp.maximum(h1 + b1_ref[...], 0.0)

    # layer 2: Linear + ReLU
    h2 = jnp.dot(h1, w2_ref[...], preferred_element_type=jnp.float32) + b2_ref[...]
    h2 = jnp.maximum(h2, 0.0)

    # layer 3: Linear (no activation) -> Q value; b3 is a scalar read from SMEM.
    q = jnp.dot(h2, w3_ref[...], preferred_element_type=jnp.float32) + b3_ref[0, 0]
    q_ref[...] = q.astype(q_ref.dtype)


def critic_forward(state, action, params, *, tb=256):
    """state: [B, STATE_DIM], action: [B, ACTION_DIM] -> q: [B, 1]"""
    w1, b1, w2, b2, w3, b3 = params
    # Split W1 at trace time so the kernel never needs a concatenated [B, 28] array.
    w1_s = w1[:STATE_DIM]      # [STATE_DIM, H1]
    w1_a = w1[STATE_DIM:]      # [ACTION_DIM, H1]

    B = state.shape[0]
    tb = min(tb, _round_up(B, 8))          # keep sublane (8) divisibility
    bp = _round_up(B, tb)                  # pad batch to a whole number of tiles
    if bp != B:
        state = jnp.pad(state, ((0, bp - B), (0, 0)))
        action = jnp.pad(action, ((0, bp - B), (0, 0)))
    num_tiles = bp // tb

    def resident(arr):  # full-array block, constant index_map -> DMA'd once
        ndim = arr.ndim
        return pl.BlockSpec(arr.shape, lambda i, _n=ndim: (0,) * _n)

    q = pl.pallas_call(
        critic_kernel,
        out_shape=jax.ShapeDtypeStruct((bp, 1), jnp.float32),
        grid=(num_tiles,),
        in_specs=[
            pl.BlockSpec((tb, STATE_DIM), lambda i: (i, 0)),
            pl.BlockSpec((tb, ACTION_DIM), lambda i: (i, 0)),
            resident(w1_s), resident(w1_a), resident(b1),
            resident(w2), resident(b2),
            resident(w3),
            pl.BlockSpec(memory_space=pltpu.MemorySpace.SMEM),   # b3 scalar
        ],
        out_specs=pl.BlockSpec((tb, 1), lambda i: (i, 0)),
        compiler_params=pltpu.CompilerParams(
            dimension_semantics=("parallel",),      # shards batch tiles across TCs on v7x
            vmem_limit_bytes=32 << 20,              # real footprint is ~2 MiB; leave headroom
        ),
    )(state, action, w1_s, w1_a, b1, w2, b2, w3, b3)

    return q[:B]


def init_params(key):
    """Deterministic init mimicking nn.Linear default U(-1/sqrt(fan_in), 1/sqrt(fan_in)).

    Weights are stored [in, out] (transposed vs. PyTorch) for direct x @ W matmul.
    Biases are stored [1, out] so they broadcast over the batch inside the kernel.
    """
    keys = jax.random.split(key, 6)
    in1 = STATE_DIM + ACTION_DIM
    lim1 = 1.0 / jnp.sqrt(jnp.float32(in1))
    lim2 = 1.0 / jnp.sqrt(jnp.float32(H1))
    lim3 = 1.0 / jnp.sqrt(jnp.float32(H2))

    w1 = jax.random.uniform(keys[0], (in1, H1), jnp.float32, -lim1, lim1)
    b1 = jax.random.uniform(keys[1], (1, H1), jnp.float32, -lim1, lim1)
    w2 = jax.random.uniform(keys[2], (H1, H2), jnp.float32, -lim2, lim2)
    b2 = jax.random.uniform(keys[3], (1, H2), jnp.float32, -lim2, lim2)
    w3 = jax.random.uniform(keys[4], (H2, 1), jnp.float32, -lim3, lim3)
    b3 = jax.random.uniform(keys[5], (1, 1), jnp.float32, -lim3, lim3)
    return (w1, b1, w2, b2, w3, b3)


def critic_reference(state, action, params):
    w1, b1, w2, b2, w3, b3 = params
    sa = jnp.concatenate([state, action], axis=1)
    h1 = jnp.maximum(sa @ w1 + b1, 0.0)
    h2 = jnp.maximum(h1 @ w2 + b2, 0.0)
    return h2 @ w3 + b3


if __name__ == "__main__":
    key = jax.random.PRNGKey(0)
    k_params, k_state, k_action = jax.random.split(key, 3)

    # Deliberately not a multiple of the batch tile to exercise the padding path
    # (grid has 2 steps at tb=256; the remainder tile is zero-padded then sliced off).
    batch = 300
    params = init_params(k_params)
    state = jax.random.normal(k_state, (batch, STATE_DIM), jnp.float32)
    action = jax.random.uniform(k_action, (batch, ACTION_DIM), jnp.float32, -1.0, 1.0)

    q = critic_forward(state, action, params)
    q = jax.block_until_ready(q)

    q_ref = critic_reference(state, action, params)
    assert q.shape == (batch, 1), q.shape
    assert jnp.allclose(q, q_ref, atol=1e-4, rtol=1e-4), (q, q_ref)

    print("KERNEL_OK")
</pallas_src>

<mosaic_0001>
module attributes {stable_mosaic.version = 11 : i64} {
  func.func @critic_kernel(%arg0: i32, %arg1: memref<256x24xf32, #tpu.memory_space<vmem>>, %arg2: memref<256x4xf32, #tpu.memory_space<vmem>>, %arg3: memref<24x400xf32, #tpu.memory_space<vmem>>, %arg4: memref<4x400xf32, #tpu.memory_space<vmem>>, %arg5: memref<1x400xf32, #tpu.memory_space<vmem>>, %arg6: memref<400x300xf32, #tpu.memory_space<vmem>>, %arg7: memref<1x300xf32, #tpu.memory_space<vmem>>, %arg8: memref<300x1xf32, #tpu.memory_space<vmem>>, %arg9: memref<1x1xf32, #tpu.memory_space<smem>>, %arg10: memref<256x1xf32, #tpu.memory_space<vmem>>) attributes {dimension_semantics = [#tpu.dimension_semantics<parallel>], iteration_bounds = array<i64: 2>, scalar_prefetch = 0 : i64, scratch_operands = 0 : i64, tpu.core_type = #tpu.core_type<tc>, window_params = [{transform_indices = @transform_0, window_bounds = array<i64: 256, 24>}, {transform_indices = @transform_1, window_bounds = array<i64: 256, 4>}, {pipeline_mode = #tpu.pipeline_mode<synchronous>, transform_indices = @transform_2, window_bounds = array<i64: 24, 400>}, {pipeline_mode = #tpu.pipeline_mode<synchronous>, transform_indices = @transform_3, window_bounds = array<i64: 4, 400>}, {pipeline_mode = #tpu.pipeline_mode<synchronous>, transform_indices = @transform_4, window_bounds = array<i64: 1, 400>}, {pipeline_mode = #tpu.pipeline_mode<synchronous>, transform_indices = @transform_5, window_bounds = array<i64: 400, 300>}, {pipeline_mode = #tpu.pipeline_mode<synchronous>, transform_indices = @transform_6, window_bounds = array<i64: 1, 300>}, {pipeline_mode = #tpu.pipeline_mode<synchronous>, transform_indices = @transform_7, window_bounds = array<i64: 300, 1>}, {transform_indices = @transform_8, window_bounds = array<i64: 1, 1>}, {transform_indices = @transform_9, window_bounds = array<i64: 256, 1>}]} {
    %c0 = arith.constant 0 : index
    %c0_0 = arith.constant 0 : index
    %0 = vector.load %arg1[%c0, %c0_0] : memref<256x24xf32, #tpu.memory_space<vmem>>, vector<256x24xf32>
    %c0_1 = arith.constant 0 : index
    %c0_2 = arith.constant 0 : index
    %1 = vector.load %arg3[%c0_1, %c0_2] : memref<24x400xf32, #tpu.memory_space<vmem>>, vector<24x400xf32>
    %cst = arith.constant dense<0.000000e+00> : vector<256x400xf32>
    %2 = tpu.matmul %0, %1, %cst {dimension_numbers = #tpu.dot_dimension_numbers<[1], [0], [0], [1], [0, 0, 1, 1], [], []>} : vector<256x24xf32>, vector<24x400xf32>, vector<256x400xf32> -> vector<256x400xf32>
    %c0_3 = arith.constant 0 : index
    %c0_4 = arith.constant 0 : index
    %3 = vector.load %arg2[%c0_3, %c0_4] : memref<256x4xf32, #tpu.memory_space<vmem>>, vector<256x4xf32>
    %c0_5 = arith.constant 0 : index
    %c0_6 = arith.constant 0 : index
    %4 = vector.load %arg4[%c0_5, %c0_6] : memref<4x400xf32, #tpu.memory_space<vmem>>, vector<4x400xf32>
    %cst_7 = arith.constant dense<0.000000e+00> : vector<256x400xf32>
    %5 = tpu.matmul %3, %4, %cst_7 {dimension_numbers = #tpu.dot_dimension_numbers<[1], [0], [0], [1], [0, 0, 1, 1], [], []>} : vector<256x4xf32>, vector<4x400xf32>, vector<256x400xf32> -> vector<256x400xf32>
    %6 = arith.addf %2, %5 : vector<256x400xf32>
    %c0_8 = arith.constant 0 : index
    %c0_9 = arith.constant 0 : index
    %7 = vector.load %arg5[%c0_8, %c0_9] : memref<1x400xf32, #tpu.memory_space<vmem>>, vector<1x400xf32>
    %8 = vector.broadcast %7 : vector<1x400xf32> to vector<256x400xf32>
    %9 = arith.addf %6, %8 : vector<256x400xf32>
    %cst_10 = arith.constant 0.000000e+00 : f32
    %10 = vector.broadcast %cst_10 : f32 to vector<256x400xf32>
    %11 = arith.maximumf %9, %10 : vector<256x400xf32>
    %c0_11 = arith.constant 0 : index
    %c0_12 = arith.constant 0 : index
    %12 = vector.load %arg6[%c0_11, %c0_12] : memref<400x300xf32, #tpu.memory_space<vmem>>, vector<400x300xf32>
    %cst_13 = arith.constant dense<0.000000e+00> : vector<256x300xf32>
    %13 = tpu.matmul %11, %12, %cst_13 {dimension_numbers = #tpu.dot_dimension_numbers<[1], [0], [0], [1], [0, 0, 1, 1], [], []>} : vector<256x400xf32>, vector<400x300xf32>, vector<256x300xf32> -> vector<256x300xf32>
    %c0_14 = arith.constant 0 : index
    %c0_15 = arith.constant 0 : index
    %14 = vector.load %arg7[%c0_14, %c0_15] : memref<1x300xf32, #tpu.memory_space<vmem>>, vector<1x300xf32>
    %15 = vector.broadcast %14 : vector<1x300xf32> to vector<256x300xf32>
    %16 = arith.addf %13, %15 : vector<256x300xf32>
    %cst_16 = arith.constant 0.000000e+00 : f32
    %17 = vector.broadcast %cst_16 : f32 to vector<256x300xf32>
    %18 = arith.maximumf %16, %17 : vector<256x300xf32>
    %c0_17 = arith.constant 0 : index
    %c0_18 = arith.constant 0 : index
    %19 = vector.load %arg8[%c0_17, %c0_18] : memref<300x1xf32, #tpu.memory_space<vmem>>, vector<300x1xf32>
    %cst_19 = arith.constant dense<0.000000e+00> : vector<256x1xf32>
    %20 = tpu.matmul %18, %19, %cst_19 {dimension_numbers = #tpu.dot_dimension_numbers<[1], [0], [0], [1], [0, 0, 1, 1], [], []>} : vector<256x300xf32>, vector<300x1xf32>, vector<256x1xf32> -> vector<256x1xf32>
    %c0_20 = arith.constant 0 : index
    %c0_21 = arith.constant 0 : index
    %21 = memref.load %arg9[%c0_20, %c0_21] : memref<1x1xf32, #tpu.memory_space<smem>>
    %22 = vector.broadcast %21 : f32 to vector<256x1xf32>
    %23 = arith.addf %20, %22 : vector<256x1xf32>
    %c0_22 = arith.constant 0 : index
    %c0_23 = arith.constant 0 : index
    %24 = vector.load %arg10[%c0_22, %c0_23] : memref<256x1xf32, #tpu.memory_space<vmem>>, vector<256x1xf32>
    tpu.vector_store %arg10[%c0_22, %c0_23], %23 {strides = array<i32>} : memref<256x1xf32, #tpu.memory_space<vmem>>, vector<256x1xf32>,
    return
  }
  func.func @transform_0(%arg0: i32) -> (i32, i32) {
    %c0_i32 = arith.constant 0 : i32
    %c0_i32_0 = arith.constant 0 : i32
    return %arg0, %c0_i32 : i32, i32
  }
  func.func @transform_1(%arg0: i32) -> (i32, i32) {
    %c0_i32 = arith.constant 0 : i32
    %c0_i32_0 = arith.constant 0 : i32
    return %arg0, %c0_i32 : i32, i32
  }
  func.func @transform_2(%arg0: i32) -> (i32, i32) {
    %c0_i32 = arith.constant 0 : i32
    %c0_i32_0 = arith.constant 0 : i32
    %c0_i32_1 = arith.constant 0 : i32
    return %c0_i32, %c0_i32_0 : i32, i32
  }
  func.func @transform_3(%arg0: i32) -> (i32, i32) {
    %c0_i32 = arith.constant 0 : i32
    %c0_i32_0 = arith.constant 0 : i32
    %c0_i32_1 = arith.constant 0 : i32
    return %c0_i32, %c0_i32_0 : i32, i32
  }
  func.func @transform_4(%arg0: i32) -> (i32, i32) {
    %c0_i32 = arith.constant 0 : i32
    %c0_i32_0 = arith.constant 0 : i32
    %c0_i32_1 = arith.constant 0 : i32
    return %c0_i32, %c0_i32_0 : i32, i32
  }
  func.func @transform_5(%arg0: i32) -> (i32, i32) {
    %c0_i32 = arith.constant 0 : i32
    %c0_i32_0 = arith.constant 0 : i32
    %c0_i32_1 = arith.constant 0 : i32
    return %c0_i32, %c0_i32_0 : i32, i32
  }
  func.func @transform_6(%arg0: i32) -> (i32, i32) {
    %c0_i32 = arith.constant 0 : i32
    %c0_i32_0 = arith.constant 0 : i32
    %c0_i32_1 = arith.constant 0 : i32
    return %c0_i32, %c0_i32_0 : i32, i32
  }
  func.func @transform_7(%arg0: i32) -> (i32, i32) {
    %c0_i32 = arith.constant 0 : i32
    %c0_i32_0 = arith.constant 0 : i32
    %c0_i32_1 = arith.constant 0 : i32
    return %c0_i32, %c0_i32_0 : i32, i32
  }
  func.func @transform_8(%arg0: i32) -> (i32, i32) {
    %c0_i32 = arith.constant 0 : i32
    %c0_i32_0 = arith.constant 0 : i32
    %c0_i32_1 = arith.constant 0 : i32
    return %c0_i32, %c0_i32_0 : i32, i32
  }
  func.func @transform_9(%arg0: i32) -> (i32, i32) {
    %c0_i32 = arith.constant 0 : i32
    %c0_i32_0 = arith.constant 0 : i32
    return %arg0, %c0_i32 : i32, i32
  }
}

</mosaic_0001>

<llo_original>
// kernel: tpu_custom_call.1
$region0: #{tpu_custom_call.1}
  #allocation0 [shape = 'u32[]', space=smem, size = 0x4, offset = 0x4, fixed_abs, tag = 'smem constant byte address 0x4 - core index']
  #allocation1 [shape = 'u32[72,128]{1,0:T(1,128)}', space=vmem, size = 0x9000, scoped, tag = 'internal scratch']
  #allocation2 [shape = 'f32[1,1]{1,0:T(1,128)S(6)}', space=smem, size = 0x200, scoped, tag = 'scoped memory for tpu_custom_call.1']
  %s0 = inlined_call_operand.vmem [shape: f32[512,24], index: 0, kind: input, shape index: {}]
  %s1 = inlined_call_operand.vmem [shape: f32[512,4], index: 1, kind: input, shape index: {}]
  %s2 = inlined_call_operand.vmem [shape: f32[24,400], index: 2, kind: input, shape index: {}]
  %s3 = inlined_call_operand.vmem [shape: f32[4,400], index: 3, kind: input, shape index: {}]
  %s4 = inlined_call_operand.vmem [shape: f32[1,400], index: 4, kind: input, shape index: {}]
  %s5 = inlined_call_operand.hbm [shape: f32[400,300], index: 5, kind: input, shape index: {}]
  %s6 = inlined_call_operand.vmem [shape: f32[1,300], index: 6, kind: input, shape index: {}]
  %s7 = inlined_call_operand.vmem [shape: f32[300,1], index: 7, kind: input, shape index: {}]
  %s8 = inlined_call_operand.<no memory space> [shape: f32[1,1], index: 8, kind: input, shape index: {}]
  %s9 = inlined_call_operand.vmem [shape: f32[512,1], index: 9, kind: output, shape index: {}]
  %s10 = sld [smem:[#allocation0]]
  $region73: #{tpu_custom_call.1} parent=0
    _
  %s12 = ssub.s32 1, %s10
  %s13 = scalar_select 0, %s12, %s10
  %14 = sst [smem:[#allocation2]] %s8
  $region1: #{tpu_custom_call.1} parent=0
    #allocation3 [shape = 'u8[614400]{0}', space=vmem, size = 0x96000, scoped, tag = 'input window, operand 5, single buffered']
    #allocation4 [shape = 's32[2]{0}', space=sflag, size = 0x8, scoped, tag = 'scoped memory for tpu_custom_call.1']
    %15 = vsyncpa [#allocation4], 0
    loop: start=0, step=1, limit=4
    $region2: #{tpu_custom_call.1} parent=1 // loop_pre_header
      _
    $region3: #{tpu_custom_call.1} parent=1 // loop_header
      %s17 = sphi 0, %s21
      %p18 = scmp.ge.s32.totalorder %s17, 4
      %s27 = sphi 0, %s29
      %s30 = sphi 0, %s27
      %s31 = sphi 0, %s30
      %s47 = sphi 0, %s31
      %s53 = sphi 0, %s55
      %s56 = sphi 0, %s53
      %s57 = sphi 0, %s56
      %s73 = sphi 0, %s57
      %s77 = sphi 0, %s77
      %s79 = sphi 0, %s77
      %s80 = sphi 0, %s79
      %s94 = sphi 0, %s80
      %s98 = sphi 0, %s98
      %s100 = sphi 0, %s98
      %s101 = sphi 0, %s100
      %s115 = sphi 0, %s101
      %s119 = sphi 0, %s119
      %s121 = sphi 0, %s119
      %s122 = sphi 0, %s121
      %s136 = sphi 0, %s122
      %s140 = sphi 0, %s140
      %s142 = sphi 0, %s140
      %s143 = sphi 0, %s142
      %s157 = sphi 0, %s143
      %s161 = sphi 0, %s161
      %s163 = sphi 0, %s161
      %s164 = sphi 0, %s163
      %s178 = sphi 0, %s164
      %s182 = sphi 0, %s182
      %s184 = sphi 0, %s182
      %s185 = sphi 0, %s184
      %s199 = sphi 0, %s185
      %s203 = sphi 0, %s203
      %s205 = sphi 0, %s203
      %s206 = sphi 0, %s205
      %s220 = sphi 0, %s206
      %s226 = sphi 0, %s228
      %s229 = sphi 0, %s226
      %s230 = sphi 0, %s229
      %s246 = sphi 0, %s230
    $region4: #{tpu_custom_call.1} parent=1 // loop_header_branch
      %20 = sbr.rel (%p18) target = $region8
    $region5: #{tpu_custom_call.1} parent=1 // loop_body
      %s22 = ssub.s32 %s17, 1
      %s23 = ssub.s32 %s17, 2
      %s24 = sadd.s32 %s17, 1
      %s25 = ssub.s32 %s17, %s24
      %p26 = scmp.eq.s32.totalorder %s25, 0
      %s28 = sadd.s32 %s27, 1
      %s29 = scalar_select %p26, %s27, %s28
      %p32 = pneg %p26
      %p33 = scmp.eq.s32.totalorder %s17, 1
      %p34 = por %p32, %p33
      %p35 = scmp.ne.s32.totalorder %s27, %s30
      %p36 = scmp.eq.s32.totalorder %s17, 0
      %p37 = por %p35, %p36
      %p38 = scmp.ne.s32.totalorder %s27, %s30
      %p39 = scmp.eq.s32.totalorder %s22, 1
      %p40 = por %p38, %p39
      %p41 = scmp.ne.s32.totalorder %s30, %s31
      %p42 = scmp.eq.s32.totalorder %s22, 0
      %p43 = por %p41, %p42
      %p44 = scmp.ne.s32.totalorder %s30, %s31
      %p45 = scmp.eq.s32.totalorder %s23, 1
      %p46 = por %p44, %p45
      %p48 = scmp.ne.s32.totalorder %s31, %s47
      %p49 = scmp.eq.s32.totalorder %s23, 0
      %p50 = por %p48, %p49
      %s51 = ssub.s32 %s17, %s24
      %p52 = scmp.eq.s32.totalorder %s51, 0
      %s54 = sadd.s32 %s53, 1
      %s55 = scalar_select %p52, %s53, %s54
      %p58 = pneg %p52
      %p59 = scmp.eq.s32.totalorder %s17, 1
      %p60 = por %p58, %p59
      %p61 = scmp.ne.s32.totalorder %s53, %s56
      %p62 = scmp.eq.s32.totalorder %s17, 0
      %p63 = por %p61, %p62
      %p64 = scmp.ne.s32.totalorder %s53, %s56
      %p65 = scmp.eq.s32.totalorder %s22, 1
      %p66 = por %p64, %p65
      %p67 = scmp.ne.s32.totalorder %s56, %s57
      %p68 = scmp.eq.s32.totalorder %s22, 0
      %p69 = por %p67, %p68
      %p70 = scmp.ne.s32.totalorder %s56, %s57
      %p71 = scmp.eq.s32.totalorder %s23, 1
      %p72 = por %p70, %p71
      %p74 = scmp.ne.s32.totalorder %s57, %s73
      %p75 = scmp.eq.s32.totalorder %s23, 0
      %p76 = por %p74, %p75
      %s78 = sadd.s32 %s77, 1
      %p81 = scmp.eq.s32.totalorder %s17, 1
      %p82 = scmp.ne.s32.totalorder %s77, %s79
      %p83 = scmp.eq.s32.totalorder %s17, 0
      %p84 = por %p82, %p83
      %p85 = scmp.ne.s32.totalorder %s77, %s79
      %p86 = scmp.eq.s32.totalorder %s22, 1
      %p87 = por %p85, %p86
      %p88 = scmp.ne.s32.totalorder %s79, %s80
      %p89 = scmp.eq.s32.totalorder %s22, 0
      %p90 = por %p88, %p89
      %p91 = scmp.ne.s32.totalorder %s79, %s80
      %p92 = scmp.eq.s32.totalorder %s23, 1
      %p93 = por %p91, %p92
      %p95 = scmp.ne.s32.totalorder %s80, %s94
      %p96 = scmp.eq.s32.totalorder %s23, 0
      %p97 = por %p95, %p96
      %s99 = sadd.s32 %s98, 1
      %p102 = scmp.eq.s32.totalorder %s17, 1
      %p103 = scmp.ne.s32.totalorder %s98, %s100
      %p104 = scmp.eq.s32.totalorder %s17, 0
      %p105 = por %p103, %p104
      %p106 = scmp.ne.s32.totalorder %s98, %s100
      %p107 = scmp.eq.s32.totalorder %s22, 1
      %p108 = por %p106, %p107
      %p109 = scmp.ne.s32.totalorder %s100, %s101
      %p110 = scmp.eq.s32.totalorder %s22, 0
      %p111 = por %p109, %p110
      %p112 = scmp.ne.s32.totalorder %s100, %s101
      %p113 = scmp.eq.s32.totalorder %s23, 1
      %p114 = por %p112, %p113
      %p116 = scmp.ne.s32.totalorder %s101, %s115
      %p117 = scmp.eq.s32.totalorder %s23, 0
      %p118 = por %p116, %p117
      %s120 = sadd.s32 %s119, 1
      %p123 = scmp.eq.s32.totalorder %s17, 1
      %p124 = scmp.ne.s32.totalorder %s119, %s121
      %p125 = scmp.eq.s32.totalorder %s17, 0
      %p126 = por %p124, %p125
      %p127 = scmp.ne.s32.totalorder %s119, %s121
      %p128 = scmp.eq.s32.totalorder %s22, 1
      %p129 = por %p127, %p128
      %p130 = scmp.ne.s32.totalorder %s121, %s122
      %p131 = scmp.eq.s32.totalorder %s22, 0
      %p132 = por %p130, %p131
      %p133 = scmp.ne.s32.totalorder %s121, %s122
      %p134 = scmp.eq.s32.totalorder %s23, 1
      %p135 = por %p133, %p134
      %p137 = scmp.ne.s32.totalorder %s122, %s136
      %p138 = scmp.eq.s32.totalorder %s23, 0
      %p139 = por %p137, %p138
      %s141 = sadd.s32 %s140, 1
      %p144 = scmp.eq.s32.totalorder %s17, 1
      %p145 = scmp.ne.s32.totalorder %s140, %s142
      %p146 = scmp.eq.s32.totalorder %s17, 0
      %p147 = por %p145, %p146
      %p148 = scmp.ne.s32.totalorder %s140, %s142
      %p149 = scmp.eq.s32.totalorder %s22, 1
      %p150 = por %p148, %p149
      %p151 = scmp.ne.s32.totalorder %s142, %s143
      %p152 = scmp.eq.s32.totalorder %s22, 0
      %p153 = por %p151, %p152
      %p154 = scmp.ne.s32.totalorder %s142, %s143
      %p155 = scmp.eq.s32.totalorder %s23, 1
      %p156 = por %p154, %p155
      %p158 = scmp.ne.s32.totalorder %s143, %s157
      %p159 = scmp.eq.s32.totalorder %s23, 0
      %p160 = por %p158, %p159
      %s162 = sadd.s32 %s161, 1
      %p165 = scmp.eq.s32.totalorder %s17, 1
      %p166 = scmp.ne.s32.totalorder %s161, %s163
      %p167 = scmp.eq.s32.totalorder %s17, 0
      %p168 = por %p166, %p167
      %p169 = scmp.ne.s32.totalorder %s161, %s163
      %p170 = scmp.eq.s32.totalorder %s22, 1
      %p171 = por %p169, %p170
      %p172 = scmp.ne.s32.totalorder %s163, %s164
      %p173 = scmp.eq.s32.totalorder %s22, 0
      %p174 = por %p172, %p173
      %p175 = scmp.ne.s32.totalorder %s163, %s164
      %p176 = scmp.eq.s32.totalorder %s23, 1
      %p177 = por %p175, %p176
      %p179 = scmp.ne.s32.totalorder %s164, %s178
      %p180 = scmp.eq.s32.totalorder %s23, 0
      %p181 = por %p179, %p180
      %s183 = sadd.s32 %s182, 1
      %p186 = scmp.eq.s32.totalorder %s17, 1
      %p187 = scmp.ne.s32.totalorder %s182, %s184
      %p188 = scmp.eq.s32.totalorder %s17, 0
      %p189 = por %p187, %p188
      %p190 = scmp.ne.s32.totalorder %s182, %s184
      %p191 = scmp.eq.s32.totalorder %s22, 1
      %p192 = por %p190, %p191
      %p193 = scmp.ne.s32.totalorder %s184, %s185
      %p194 = scmp.eq.s32.totalorder %s22, 0
      %p195 = por %p193, %p194
      %p196 = scmp.ne.s32.totalorder %s184, %s185
      %p197 = scmp.eq.s32.totalorder %s23, 1
      %p198 = por %p196, %p197
      %p200 = scmp.ne.s32.totalorder %s185, %s199
      %p201 = scmp.eq.s32.totalorder %s23, 0
      %p202 = por %p200, %p201
      %s204 = sadd.s32 %s203, 1
      %p207 = scmp.eq.s32.totalorder %s17, 1
      %p208 = scmp.ne.s32.totalorder %s203, %s205
      %p209 = scmp.eq.s32.totalorder %s17, 0
      %p210 = por %p208, %p209
      %p211 = scmp.ne.s32.totalorder %s203, %s205
      %p212 = scmp.eq.s32.totalorder %s22, 1
      %p213 = por %p211, %p212
      %p214 = scmp.ne.s32.totalorder %s205, %s206
      %p215 = scmp.eq.s32.totalorder %s22, 0
      %p216 = por %p214, %p215
      %p217 = scmp.ne.s32.totalorder %s205, %s206
      %p218 = scmp.eq.s32.totalorder %s23, 1
      %p219 = por %p217, %p218
      %p221 = scmp.ne.s32.totalorder %s206, %s220
      %p222 = scmp.eq.s32.totalorder %s23, 0
      %p223 = por %p221, %p222
      %s224 = ssub.s32 %s17, %s24
      %p225 = scmp.eq.s32.totalorder %s224, 0
      %s227 = sadd.s32 %s226, 1
      %s228 = scalar_select %p225, %s226, %s227
      %p231 = pneg %p225
      %p232 = scmp.eq.s32.totalorder %s17, 1
      %p233 = por %p231, %p232
      %p234 = scmp.ne.s32.totalorder %s226, %s229
      %p235 = scmp.eq.s32.totalorder %s17, 0
      %p236 = por %p234, %p235
      %p237 = scmp.ne.s32.totalorder %s226, %s229
      %p238 = scmp.eq.s32.totalorder %s22, 1
      %p239 = por %p237, %p238
      %p240 = scmp.ne.s32.totalorder %s229, %s230
      %p241 = scmp.eq.s32.totalorder %s22, 0
      %p242 = por %p240, %p241
      %p243 = scmp.ne.s32.totalorder %s229, %s230
      %p244 = scmp.eq.s32.totalorder %s23, 1
      %p245 = por %p243, %p244
      %p247 = scmp.ne.s32.totalorder %s230, %s246
      %p248 = scmp.eq.s32.totalorder %s23, 0
      %p249 = por %p247, %p248
      %p250 = scmp.le.s32.totalorder 1, %s17
      %p251 = scmp.lt.s32.totalorder %s17, 3
      %p252 = pnand %p250, %p251
      %p253 = pneg %p252
      // Predicated region
      $region9: #{tpu_custom_call.1} parent=5 // pred_check
        _
      $region10: #{tpu_custom_call.1} parent=5 // pred_check_branch
        %255 = sbr.rel (%p252) target = $region12
      $region11: #{tpu_custom_call.1} parent=5 // pred_region
        %s256 = ssub.s32 %s17, 1
        // Predicated region
        $region13: #{tpu_custom_call.1} parent=11 // pred_check
          %p257 = pneg %p90
        $region14: #{tpu_custom_call.1} parent=11 // pred_check_branch
          %259 = sbr.rel (%p257) target = $region16
        $region15: #{tpu_custom_call.1} parent=11 // pred_region
          _
        $region16: #{tpu_custom_call.1} parent=11 // pred_fallthru
          _
        // Predicated region
        $region17: #{tpu_custom_call.1} parent=11 // pred_check
          %p260 = pneg %p111
        $region18: #{tpu_custom_call.1} parent=11 // pred_check_branch
          %262 = sbr.rel (%p260) target = $region20
        $region19: #{tpu_custom_call.1} parent=11 // pred_region
          _
        $region20: #{tpu_custom_call.1} parent=11 // pred_fallthru
          _
        // Predicated region
        $region21: #{tpu_custom_call.1} parent=11 // pred_check
          %p263 = pneg %p132
        $region22: #{tpu_custom_call.1} parent=11 // pred_check_branch
          %265 = sbr.rel (%p263) target = $region24
        $region23: #{tpu_custom_call.1} parent=11 // pred_region
          _
        $region24: #{tpu_custom_call.1} parent=11 // pred_fallthru
          _
        // Predicated region
        $region25: #{tpu_custom_call.1} parent=11 // pred_check
          %p266 = pneg %p153
        $region26: #{tpu_custom_call.1} parent=11 // pred_check_branch
          %268 = sbr.rel (%p266) target = $region28
        $region27: #{tpu_custom_call.1} parent=11 // pred_region
          %270 = vsyncadd [#allocation4], 0
          %s271 = sshll.u32 %s5, 4
          %s272 = int_to_ptr.hbm [resolvable:$true] %s271
          %s273 = sshll.u32 [#allocation3], 4
          %s274 = int_to_ptr.vmem [resolvable:$true] %s273
          %279 = dma.hbm_to_vmem [thread:$0]  %s272, 19200, %s274, [#allocation4], 384, 384, 24
        $region28: #{tpu_custom_call.1} parent=11 // pred_fallthru
          _
        // Predicated region
        $region29: #{tpu_custom_call.1} parent=11 // pred_check
          %p280 = pneg %p174
        $region30: #{tpu_custom_call.1} parent=11 // pred_check_branch
          %282 = sbr.rel (%p280) target = $region32
        $region31: #{tpu_custom_call.1} parent=11 // pred_region
          _
        $region32: #{tpu_custom_call.1} parent=11 // pred_fallthru
          _
        // Predicated region
        $region33: #{tpu_custom_call.1} parent=11 // pred_check
          %p283 = pneg %p195
        $region34: #{tpu_custom_call.1} parent=11 // pred_check_branch
          %285 = sbr.rel (%p283) target = $region36
        $region35: #{tpu_custom_call.1} parent=11 // pred_region
          _
        $region36: #{tpu_custom_call.1} parent=11 // pred_fallthru
          _
        // Predicated region
        $region37: #{tpu_custom_call.1} parent=11 // pred_check
          %p286 = pneg %p216
        $region38: #{tpu_custom_call.1} parent=11 // pred_check_branch
          %288 = sbr.rel (%p286) target = $region40
        $region39: #{tpu_custom_call.1} parent=11 // pred_region
          _
        $region40: #{tpu_custom_call.1} parent=11 // pred_fallthru
          _
      $region12: #{tpu_custom_call.1} parent=5 // pred_fallthru
        _
      %p289 = scmp.lt.s32.totalorder %s17, 2
      // Predicated region
      $region41: #{tpu_custom_call.1} parent=5 // pred_check
        %p290 = pneg %p289
      $region42: #{tpu_custom_call.1} parent=5 // pred_check_branch
        %292 = sbr.rel (%p290) target = $region44
      $region43: #{tpu_custom_call.1} parent=5 // pred_region
        // Predicated region
        $region45: #{tpu_custom_call.1} parent=43 // pred_check
          %p293 = pneg %p37
        $region46: #{tpu_custom_call.1} parent=43 // pred_check_branch
          %295 = sbr.rel (%p293) target = $region48
        $region47: #{tpu_custom_call.1} parent=43 // pred_region
          %s296 = smul.u32 32, %s17
          %p297 = scmp.lt.s32.totalorder %s296, 63
          %s298 = scalar_select %p297, %s296, 63
          %s299 = smul.addr %s298, 8
          %s300 = scalar_lea.vmem %s0, %s299
          %s301 = smul.u32 32, %s17
        $region48: #{tpu_custom_call.1} parent=43 // pred_fallthru
          _
        // Predicated region
        $region49: #{tpu_custom_call.1} parent=43 // pred_check
          %p302 = pneg %p63
        $region50: #{tpu_custom_call.1} parent=43 // pred_check_branch
          %304 = sbr.rel (%p302) target = $region52
        $region51: #{tpu_custom_call.1} parent=43 // pred_region
          %s305 = smul.u32 32, %s17
          %p306 = scmp.lt.s32.totalorder %s305, 63
          %s307 = scalar_select %p306, %s305, 63
          %s308 = smul.addr %s307, 8
          %s309 = scalar_lea.vmem %s1, %s308
          %s310 = smul.u32 32, %s17
        $region52: #{tpu_custom_call.1} parent=43 // pred_fallthru
          _
      $region44: #{tpu_custom_call.1} parent=5 // pred_fallthru
        _
      %p311 = scmp.le.s32.totalorder 1, %s17
      %p312 = scmp.lt.s32.totalorder %s17, 3
      %p313 = pnand %p311, %p312
      %p314 = pneg %p313
      // Predicated region
      $region53: #{tpu_custom_call.1} parent=5 // pred_check
        _
      $region54: #{tpu_custom_call.1} parent=5 // pred_check_branch
        %316 = sbr.rel (%p313) target = $region56
      $region55: #{tpu_custom_call.1} parent=5 // pred_region
        %s317 = ssub.s32 %s17, 1
        // Predicated region
        $region57: #{tpu_custom_call.1} parent=55 // pred_check
          %p318 = pneg %p153
        $region58: #{tpu_custom_call.1} parent=55 // pred_check_branch
          %320 = sbr.rel (%p318) target = $region60
        $region59: #{tpu_custom_call.1} parent=55 // pred_region
          %322 = dma.done [#allocation4], 19200
        $region60: #{tpu_custom_call.1} parent=55 // pred_fallthru
          _
        %s323 = smul.u32 32, %s22
        %p324 = scmp.lt.s32.totalorder %s323, 63
        %s325 = scalar_select %p324, %s323, 63
        %s326 = smul.addr %s325, 8
        %s327 = scalar_lea.vmem %s0, %s326
        %p328 = pneg %p43
        %p329 = pneg %p40
        %s330 = smul.u32 32, %s22
        %p331 = scmp.lt.s32.totalorder %s330, 63
        %s332 = scalar_select %p331, %s330, 63
        %s333 = smul.addr %s332, 8
        %s334 = scalar_lea.vmem %s1, %s333
        %p335 = pneg %p69
        %p336 = pneg %p66
        %p337 = pneg %p90
        %p338 = pneg %p87
        %p339 = pneg %p111
        %p340 = pneg %p108
        %p341 = pneg %p132
        %p342 = pneg %p129
        %p343 = pneg %p153
        %p344 = pneg %p150
        %p345 = pneg %p174
        %p346 = pneg %p171
        %p347 = pneg %p195
        %p348 = pneg %p192
        %p349 = pneg %p216
        %p350 = pneg %p213
        %p351 = pneg %p242
        %p352 = pneg %p239
        %s353 = smul.u32 32, %s22
        %p354 = scmp.lt.s32.totalorder %s353, 63
        %s355 = scalar_select %p354, %s353, 63
        %s356 = smul.addr %s355, 8
        %s357 = scalar_lea.vmem %s9, %s356
        %s358 = smul.u32 32, %s22
        %p359 = scmp.lt.s32.totalorder %s358, 63
        %s360 = scalar_select %p359, %s358, 63
        %s361 = smul.addr %s360, 8
        %s362 = scalar_lea.vmem %s0, %s361
        %s363 = smul.u32 32, %s22
        %s364 = smul.u32 32, %s22
        %p365 = scmp.lt.s32.totalorder %s364, 63
        %s366 = scalar_select %p365, %s364, 63
        %s367 = smul.addr %s366, 8
        %s368 = scalar_lea.vmem %s1, %s367
        %s369 = smul.u32 32, %s22
        %s370 = smul.u32 32, %s22
        %p371 = scmp.lt.s32.totalorder %s370, 63
        %s372 = scalar_select %p371, %s370, 63
        %s373 = smul.addr %s372, 8
        %s374 = scalar_lea.vmem %s9, %s373
        %s375 = smul.u32 32, %s22
        %v376 = vld [vmem:[%s362] sm:$0xff]
        %v377 = vld [vmem:[%s362 + $0x8] sm:$0xff]
        %v378 = vld [vmem:[%s362 + $0x10] sm:$0xff]
        %v379 = vld [vmem:[%s362 + $0x18] sm:$0xff]
        %v380 = vld [vmem:[%s362 + $0x20] sm:$0xff]
        %v381 = vld [vmem:[%s362 + $0x28] sm:$0xff]
        %v382 = vld [vmem:[%s362 + $0x30] sm:$0xff]
        %v383 = vld [vmem:[%s362 + $0x38] sm:$0xff]
        %v384 = vld [vmem:[%s362 + $0x40] sm:$0xff]
        %v385 = vld [vmem:[%s362 + $0x48] sm:$0xff]
        %v386 = vld [vmem:[%s362 + $0x50] sm:$0xff]
        %v387 = vld [vmem:[%s362 + $0x58] sm:$0xff]
        %v388 = vld [vmem:[%s362 + $0x60] sm:$0xff]
        %v389 = vld [vmem:[%s362 + $0x68] sm:$0xff]
        %v390 = vld [vmem:[%s362 + $0x70] sm:$0xff]
        %v391 = vld [vmem:[%s362 + $0x78] sm:$0xff]
        %v392 = vld [vmem:[%s362 + $0x80] sm:$0xff]
        %v393 = vld [vmem:[%s362 + $0x88] sm:$0xff]
        %v394 = vld [vmem:[%s362 + $0x90] sm:$0xff]
        %v395 = vld [vmem:[%s362 + $0x98] sm:$0xff]
        %v396 = vld [vmem:[%s362 + $0xa0] sm:$0xff]
        %v397 = vld [vmem:[%s362 + $0xa8] sm:$0xff]
        %v398 = vld [vmem:[%s362 + $0xb0] sm:$0xff]
        %v399 = vld [vmem:[%s362 + $0xb8] sm:$0xff]
        %v400 = vld [vmem:[%s362 + $0xc0] sm:$0xff]
        %v401 = vld [vmem:[%s362 + $0xc8] sm:$0xff]
        %v402 = vld [vmem:[%s362 + $0xd0] sm:$0xff]
        %v403 = vld [vmem:[%s362 + $0xd8] sm:$0xff]
        %v404 = vld [vmem:[%s362 + $0xe0] sm:$0xff]
        %v405 = vld [vmem:[%s362 + $0xe8] sm:$0xff]
        %v406 = vld [vmem:[%s362 + $0xf0] sm:$0xff]
        %v407 = vld [vmem:[%s362 + $0xf8] sm:$0xff]
        %v408 = vld [vmem:[%s2] sm:$0xff]
        %v409 = vld [vmem:[%s2 + $0x8] sm:$0xff]
        %v410 = vld [vmem:[%s2 + $0x10] sm:$0xff]
        %v411 = vld [vmem:[%s2 + $0x18] sm:$0xff]
        %v412 = vld [vmem:[%s2 + $0x20] sm:$0xff]
        %v413 = vld [vmem:[%s2 + $0x28] sm:$0xff]
        %v414 = vld [vmem:[%s2 + $0x30] sm:$0xff]
        %v415 = vld [vmem:[%s2 + $0x38] sm:$0xff]
        %v416 = vld [vmem:[%s2 + $0x40] sm:$0xff]
        %v417 = vld [vmem:[%s2 + $0x48] sm:$0xff]
        %v418 = vld [vmem:[%s2 + $0x50] sm:$0xff]
        %v419 = vld [vmem:[%s2 + $0x58] sm:$0xff]
        %v420 = vld [vmem:[%s368] sm:$0xff]
        %v421 = vld [vmem:[%s368 + $0x8] sm:$0xff]
        %v422 = vld [vmem:[%s368 + $0x10] sm:$0xff]
        %v423 = vld [vmem:[%s368 + $0x18] sm:$0xff]
        %v424 = vld [vmem:[%s368 + $0x20] sm:$0xff]
        %v425 = vld [vmem:[%s368 + $0x28] sm:$0xff]
        %v426 = vld [vmem:[%s368 + $0x30] sm:$0xff]
        %v427 = vld [vmem:[%s368 + $0x38] sm:$0xff]
        %v428 = vld [vmem:[%s368 + $0x40] sm:$0xff]
        %v429 = vld [vmem:[%s368 + $0x48] sm:$0xff]
        %v430 = vld [vmem:[%s368 + $0x50] sm:$0xff]
        %v431 = vld [vmem:[%s368 + $0x58] sm:$0xff]
        %v432 = vld [vmem:[%s368 + $0x60] sm:$0xff]
        %v433 = vld [vmem:[%s368 + $0x68] sm:$0xff]
        %v434 = vld [vmem:[%s368 + $0x70] sm:$0xff]
        %v435 = vld [vmem:[%s368 + $0x78] sm:$0xff]
        %v436 = vld [vmem:[%s368 + $0x80] sm:$0xff]
        %v437 = vld [vmem:[%s368 + $0x88] sm:$0xff]
        %v438 = vld [vmem:[%s368 + $0x90] sm:$0xff]
        %v439 = vld [vmem:[%s368 + $0x98] sm:$0xff]
        %v440 = vld [vmem:[%s368 + $0xa0] sm:$0xff]
        %v441 = vld [vmem:[%s368 + $0xa8] sm:$0xff]
        %v442 = vld [vmem:[%s368 + $0xb0] sm:$0xff]
        %v443 = vld [vmem:[%s368 + $0xb8] sm:$0xff]
        %v444 = vld [vmem:[%s368 + $0xc0] sm:$0xff]
        %v445 = vld [vmem:[%s368 + $0xc8] sm:$0xff]
        %v446 = vld [vmem:[%s368 + $0xd0] sm:$0xff]
        %v447 = vld [vmem:[%s368 + $0xd8] sm:$0xff]
        %v448 = vld [vmem:[%s368 + $0xe0] sm:$0xff]
        %v449 = vld [vmem:[%s368 + $0xe8] sm:$0xff]
        %v450 = vld [vmem:[%s368 + $0xf0] sm:$0xff]
        %v451 = vld [vmem:[%s368 + $0xf8] sm:$0xff]
        %v452 = vld [vmem:[%s3] sm:$0xff]
        %v453 = vld [vmem:[%s3 + $0x8] sm:$0xff]
        %456 = vst [vmem:[#allocation1] ss:$2 sm:$0xff] %v452
        %s457 = scalar_lea.vmem [#allocation1], 16
        %458 = vst [vmem:[%s457] ss:$2 sm:$0xff] %v453
        %v459 = vld.sshfl [vmem:[#allocation1] sm:$0xff pattern:$0x75316420]
        %v460 = vld.sshfl [vmem:[#allocation1 + $0x8] sm:$0xff pattern:$0x75316420]
        %v461 = vld.sshfl [vmem:[#allocation1 + $0x10] sm:$0xff pattern:$0x75316420]
        %v462 = vld.sshfl [vmem:[#allocation1 + $0x18] sm:$0xff pattern:$0x75316420]
        %vm463 = vcmask 31744
        %v465 = vsel %vm463, %v420, 0
        %v468 = vsel %vm463, %v421, 0
        %v471 = vsel %vm463, %v422, 0
        %v474 = vsel %vm463, %v423, 0
        %v477 = vsel %vm463, %v424, 0
        %v480 = vsel %vm463, %v425, 0
        %v483 = vsel %vm463, %v426, 0
        %v486 = vsel %vm463, %v427, 0
        %v489 = vsel %vm463, %v428, 0
        %v492 = vsel %vm463, %v429, 0
        %v495 = vsel %vm463, %v430, 0
        %v498 = vsel %vm463, %v431, 0
        %v501 = vsel %vm463, %v432, 0
        %v504 = vsel %vm463, %v433, 0
        %v507 = vsel %vm463, %v434, 0
        %v510 = vsel %vm463, %v435, 0
        %v513 = vsel %vm463, %v436, 0
        %v516 = vsel %vm463, %v437, 0
        %v519 = vsel %vm463, %v438, 0
        %v522 = vsel %vm463, %v439, 0
        %v525 = vsel %vm463, %v440, 0
        %v528 = vsel %vm463, %v441, 0
        %v531 = vsel %vm463, %v442, 0
        %v534 = vsel %vm463, %v443, 0
        %v537 = vsel %vm463, %v444, 0
        %v540 = vsel %vm463, %v445, 0
        %v543 = vsel %vm463, %v446, 0
        %v546 = vsel %vm463, %v447, 0
        %v549 = vsel %vm463, %v448, 0
        %v552 = vsel %vm463, %v449, 0
        %v555 = vsel %vm463, %v450, 0
        %v558 = vsel %vm463, %v451, 0
        %vm560 = vcmask 1043456
        %v561 = vsel %vm560, %v459, 0
        %v563 = vsel %vm560, %v460, 0
        %v565 = vsel %vm560, %v461, 0
        %v567 = vsel %vm560, %v462, 0
        %569 = vmatpush.msra.mxu0 0.0
        %570 = vmatpush.msra.mxu0 0.0
        %571 = vmatpush.msra.mxu0 0.0
        %572 = vmatpush.msra.mxu0 0.0
        %573 = vmatpush.msra.mxu0 0.0
        %574 = vmatpush.msra.mxu0 0.0
        %575 = vmatpush.msra.mxu0 0.0
        %576 = vmatpush.msra.mxu0 0.0
        %577 = vmatpush.msra.mxu0 0.0
        %578 = vmatpush.msra.mxu0 0.0
        %579 = vmatpush.msra.mxu0 0.0
        %580 = vmatpush.msra.mxu0 0.0
        %581 = vmatpush.msra.mxu0 0.0
        %582 = vmatpush.msra.mxu0 0.0
        %583 = vmatpush.msra.mxu0 0.0
        %584 = vmatpush.msra.mxu0 %v561
        %585 = vmatmul.f32.gmra.mxu0 %v465
        %v586 = vpop.f32.mrf.mxu0
        %v587 = vadd.f32 0.0, %v586
        %588 = vmatmul.f32.gmra.mxu0 %v468
        %v589 = vpop.f32.mrf.mxu0
        %v590 = vadd.f32 0.0, %v589
        %591 = vmatmul.f32.gmra.mxu0 %v471
        %v592 = vpop.f32.mrf.mxu0
        %v593 = vadd.f32 0.0, %v592
        %594 = vmatmul.f32.gmra.mxu0 %v474
        %v595 = vpop.f32.mrf.mxu0
        %v596 = vadd.f32 0.0, %v595
        %597 = vmatmul.f32.gmra.mxu0 %v477
        %v598 = vpop.f32.mrf.mxu0
        %v599 = vadd.f32 0.0, %v598
        %600 = vmatmul.f32.gmra.mxu0 %v480
        %v601 = vpop.f32.mrf.mxu0
        %v602 = vadd.f32 0.0, %v601
        %603 = vmatmul.f32.gmra.mxu0 %v483
        %v604 = vpop.f32.mrf.mxu0
        %v605 = vadd.f32 0.0, %v604
        %606 = vmatmul.f32.gmra.mxu0 %v486
        %v607 = vpop.f32.mrf.mxu0
        %v608 = vadd.f32 0.0, %v607
        %609 = vmatmul.f32.gmra.mxu0 %v489
        %v610 = vpop.f32.mrf.mxu0
        %v611 = vadd.f32 0.0, %v610
        %612 = vmatmul.f32.gmra.mxu0 %v492
        %v613 = vpop.f32.mrf.mxu0
        %v614 = vadd.f32 0.0, %v613
        %615 = vmatmul.f32.gmra.mxu0 %v495
        %v616 = vpop.f32.mrf.mxu0
        %v617 = vadd.f32 0.0, %v616
        %618 = vmatmul.f32.gmra.mxu0 %v498
        %v619 = vpop.f32.mrf.mxu0
        %v620 = vadd.f32 0.0, %v619
        %621 = vmatmul.f32.gmra.mxu0 %v501
        %v622 = vpop.f32.mrf.mxu0
        %v623 = vadd.f32 0.0, %v622
        %624 = vmatmul.f32.gmra.mxu0 %v504
        %v625 = vpop.f32.mrf.mxu0
        %v626 = vadd.f32 0.0, %v625
        %627 = vmatmul.f32.gmra.mxu0 %v507
        %v628 = vpop.f32.mrf.mxu0
        %v629 = vadd.f32 0.0, %v628
        %630 = vmatmul.f32.gmra.mxu0 %v510
        %v631 = vpop.f32.mrf.mxu0
        %v632 = vadd.f32 0.0, %v631
        %633 = vmatmul.f32.gmra.mxu0 %v513
        %v634 = vpop.f32.mrf.mxu0
        %v635 = vadd.f32 0.0, %v634
        %636 = vmatmul.f32.gmra.mxu0 %v516
        %v637 = vpop.f32.mrf.mxu0
        %v638 = vadd.f32 0.0, %v637
        %639 = vmatmul.f32.gmra.mxu0 %v519
        %v640 = vpop.f32.mrf.mxu0
        %v641 = vadd.f32 0.0, %v640
        %642 = vmatmul.f32.gmra.mxu0 %v522
        %v643 = vpop.f32.mrf.mxu0
        %v644 = vadd.f32 0.0, %v643
        %645 = vmatmul.f32.gmra.mxu0 %v525
        %v646 = vpop.f32.mrf.mxu0
        %v647 = vadd.f32 0.0, %v646
        %648 = vmatmul.f32.gmra.mxu0 %v528
        %v649 = vpop.f32.mrf.mxu0
        %v650 = vadd.f32 0.0, %v649
        %651 = vmatmul.f32.gmra.mxu0 %v531
        %v652 = vpop.f32.mrf.mxu0
        %v653 = vadd.f32 0.0, %v652
        %654 = vmatmul.f32.gmra.mxu0 %v534
        %v655 = vpop.f32.mrf.mxu0
        %v656 = vadd.f32 0.0, %v655
        %657 = vmatmul.f32.gmra.mxu0 %v537
        %v658 = vpop.f32.mrf.mxu0
        %v659 = vadd.f32 0.0, %v658
        %660 = vmatmul.f32.gmra.mxu0 %v540
        %v661 = vpop.f32.mrf.mxu0
        %v662 = vadd.f32 0.0, %v661
        %663 = vmatmul.f32.gmra.mxu0 %v543
        %v664 = vpop.f32.mrf.mxu0
        %v665 = vadd.f32 0.0, %v664
        %666 = vmatmul.f32.gmra.mxu0 %v546
        %v667 = vpop.f32.mrf.mxu0
        %v668 = vadd.f32 0.0, %v667
        %669 = vmatmul.f32.gmra.mxu0 %v549
        %v670 = vpop.f32.mrf.mxu0
        %v671 = vadd.f32 0.0, %v670
        %672 = vmatmul.f32.gmra.mxu0 %v552
        %v673 = vpop.f32.mrf.mxu0
        %v674 = vadd.f32 0.0, %v673
        %675 = vmatmul.f32.gmra.mxu0 %v555
        %v676 = vpop.f32.mrf.mxu0
        %v677 = vadd.f32 0.0, %v676
        %678 = vmatmul.f32.gmra.mxu0 %v558
        %v679 = vpop.f32.mrf.mxu0
        %v680 = vadd.f32 0.0, %v679
        %681 = vdwg.mxu0
        %682 = vmatpush.msra.mxu0 0.0
        %683 = vmatpush.msra.mxu0 0.0
        %684 = vmatpush.msra.mxu0 0.0
        %685 = vmatpush.msra.mxu0 0.0
        %686 = vmatpush.msra.mxu0 0.0
        %687 = vmatpush.msra.mxu0 0.0
        %688 = vmatpush.msra.mxu0 0.0
        %689 = vmatpush.msra.mxu0 0.0
        %690 = vmatpush.msra.mxu0 0.0
        %691 = vmatpush.msra.mxu0 0.0
        %692 = vmatpush.msra.mxu0 0.0
        %693 = vmatpush.msra.mxu0 0.0
        %694 = vmatpush.msra.mxu0 0.0
        %695 = vmatpush.msra.mxu0 0.0
        %696 = vmatpush.msra.mxu0 0.0
        %697 = vmatpush.msra.mxu0 %v563
        %698 = vmatmul.f32.gmra.mxu0 %v465
        %v699 = vpop.f32.mrf.mxu0
        %v700 = vadd.f32 0.0, %v699
        %701 = vmatmul.f32.gmra.mxu0 %v468
        %v702 = vpop.f32.mrf.mxu0
        %v703 = vadd.f32 0.0, %v702
        %704 = vmatmul.f32.gmra.mxu0 %v471
        %v705 = vpop.f32.mrf.mxu0
        %v706 = vadd.f32 0.0, %v705
        %707 = vmatmul.f32.gmra.mxu0 %v474
        %v708 = vpop.f32.mrf.mxu0
        %v709 = vadd.f32 0.0, %v708
        %710 = vmatmul.f32.gmra.mxu0 %v477
        %v711 = vpop.f32.mrf.mxu0
        %v712 = vadd.f32 0.0, %v711
        %713 = vmatmul.f32.gmra.mxu0 %v480
        %v714 = vpop.f32.mrf.mxu0
        %v715 = vadd.f32 0.0, %v714
        %716 = vmatmul.f32.gmra.mxu0 %v483
        %v717 = vpop.f32.mrf.mxu0
        %v718 = vadd.f32 0.0, %v717
        %719 = vmatmul.f32.gmra.mxu0 %v486
        %v720 = vpop.f32.mrf.mxu0
        %v721 = vadd.f32 0.0, %v720
        %722 = vmatmul.f32.gmra.mxu0 %v489
        %v723 = vpop.f32.mrf.mxu0
        %v724 = vadd.f32 0.0, %v723
        %725 = vmatmul.f32.gmra.mxu0 %v492
        %v726 = vpop.f32.mrf.mxu0
        %v727 = vadd.f32 0.0, %v726
        %728 = vmatmul.f32.gmra.mxu0 %v495
        %v729 = vpop.f32.mrf.mxu0
        %v730 = vadd.f32 0.0, %v729
        %731 = vmatmul.f32.gmra.mxu0 %v498
        %v732 = vpop.f32.mrf.mxu0
        %v733 = vadd.f32 0.0, %v732
        %734 = vmatmul.f32.gmra.mxu0 %v501
        %v735 = vpop.f32.mrf.mxu0
        %v736 = vadd.f32 0.0, %v735
        %737 = vmatmul.f32.gmra.mxu0 %v504
        %v738 = vpop.f32.mrf.mxu0
        %v739 = vadd.f32 0.0, %v738
        %740 = vmatmul.f32.gmra.mxu0 %v507
        %v741 = vpop.f32.mrf.mxu0
        %v742 = vadd.f32 0.0, %v741
        %743 = vmatmul.f32.gmra.mxu0 %v510
        %v744 = vpop.f32.mrf.mxu0
        %v745 = vadd.f32 0.0, %v744
        %746 = vmatmul.f32.gmra.mxu0 %v513
        %v747 = vpop.f32.mrf.mxu0
        %v748 = vadd.f32 0.0, %v747
        %749 = vmatmul.f32.gmra.mxu0 %v516
        %v750 = vpop.f32.mrf.mxu0
        %v751 = vadd.f32 0.0, %v750
        %752 = vmatmul.f32.gmra.mxu0 %v519
        %v753 = vpop.f32.mrf.mxu0
        %v754 = vadd.f32 0.0, %v753
        %755 = vmatmul.f32.gmra.mxu0 %v522
        %v756 = vpop.f32.mrf.mxu0
        %v757 = vadd.f32 0.0, %v756
        %758 = vmatmul.f32.gmra.mxu0 %v525
        %v759 = vpop.f32.mrf.mxu0
        %v760 = vadd.f32 0.0, %v759
        %761 = vmatmul.f32.gmra.mxu0 %v528
        %v762 = vpop.f32.mrf.mxu0
        %v763 = vadd.f32 0.0, %v762
        %764 = vmatmul.f32.gmra.mxu0 %v531
        %v765 = vpop.f32.mrf.mxu0
        %v766 = vadd.f32 0.0, %v765
        %767 = vmatmul.f32.gmra.mxu0 %v534
        %v768 = vpop.f32.mrf.mxu0
        %v769 = vadd.f32 0.0, %v768
        %770 = vmatmul.f32.gmra.mxu0 %v537
        %v771 = vpop.f32.mrf.mxu0
        %v772 = vadd.f32 0.0, %v771
        %773 = vmatmul.f32.gmra.mxu0 %v540
        %v774 = vpop.f32.mrf.mxu0
        %v775 = vadd.f32 0.0, %v774
        %776 = vmatmul.f32.gmra.mxu0 %v543
        %v777 = vpop.f32.mrf.mxu0
        %v778 = vadd.f32 0.0, %v777
        %779 = vmatmul.f32.gmra.mxu0 %v546
        %v780 = vpop.f32.mrf.mxu0
        %v781 = vadd.f32 0.0, %v780
        %782 = vmatmul.f32.gmra.mxu0 %v549
        %v783 = vpop.f32.mrf.mxu0
        %v784 = vadd.f32 0.0, %v783
        %785 = vmatmul.f32.gmra.mxu0 %v552
        %v786 = vpop.f32.mrf.mxu0
        %v787 = vadd.f32 0.0, %v786
        %788 = vmatmul.f32.gmra.mxu0 %v555
        %v789 = vpop.f32.mrf.mxu0
        %v790 = vadd.f32 0.0, %v789
        %791 = vmatmul.f32.gmra.mxu0 %v558
        %v792 = vpop.f32.mrf.mxu0
        %v793 = vadd.f32 0.0, %v792
        %794 = vdwg.mxu0
        %795 = vmatpush.msra.mxu0 0.0
        %796 = vmatpush.msra.mxu0 0.0
        %797 = vmatpush.msra.mxu0 0.0
        %798 = vmatpush.msra.mxu0 0.0
        %799 = vmatpush.msra.mxu0 0.0
        %800 = vmatpush.msra.mxu0 0.0
        %801 = vmatpush.msra.mxu0 0.0
        %802 = vmatpush.msra.mxu0 0.0
        %803 = vmatpush.msra.mxu0 0.0
        %804 = vmatpush.msra.mxu0 0.0
        %805 = vmatpush.msra.mxu0 0.0
        %806 = vmatpush.msra.mxu0 0.0
        %807 = vmatpush.msra.mxu0 0.0
        %808 = vmatpush.msra.mxu0 0.0
        %809 = vmatpush.msra.mxu0 0.0
        %810 = vmatpush.msra.mxu0 %v565
        %811 = vmatmul.f32.gmra.mxu0 %v465
        %v812 = vpop.f32.mrf.mxu0
        %v813 = vadd.f32 0.0, %v812
        %814 = vmatmul.f32.gmra.mxu0 %v468
        %v815 = vpop.f32.mrf.mxu0
        %v816 = vadd.f32 0.0, %v815
        %817 = vmatmul.f32.gmra.mxu0 %v471
        %v818 = vpop.f32.mrf.mxu0
        %v819 = vadd.f32 0.0, %v818
        %820 = vmatmul.f32.gmra.mxu0 %v474
        %v821 = vpop.f32.mrf.mxu0
        %v822 = vadd.f32 0.0, %v821
        %823 = vmatmul.f32.gmra.mxu0 %v477
        %v824 = vpop.f32.mrf.mxu0
        %v825 = vadd.f32 0.0, %v824
        %826 = vmatmul.f32.gmra.mxu0 %v480
        %v827 = vpop.f32.mrf.mxu0
        %v828 = vadd.f32 0.0, %v827
        %829 = vmatmul.f32.gmra.mxu0 %v483
        %v830 = vpop.f32.mrf.mxu0
        %v831 = vadd.f32 0.0, %v830
        %832 = vmatmul.f32.gmra.mxu0 %v486
        %v833 = vpop.f32.mrf.mxu0
        %v834 = vadd.f32 0.0, %v833
        %835 = vmatmul.f32.gmra.mxu0 %v489
        %v836 = vpop.f32.mrf.mxu0
        %v837 = vadd.f32 0.0, %v836
        %838 = vmatmul.f32.gmra.mxu0 %v492
        %v839 = vpop.f32.mrf.mxu0
        %v840 = vadd.f32 0.0, %v839
        %841 = vmatmul.f32.gmra.mxu0 %v495
        %v842 = vpop.f32.mrf.mxu0
        %v843 = vadd.f32 0.0, %v842
        %844 = vmatmul.f32.gmra.mxu0 %v498
        %v845 = vpop.f32.mrf.mxu0
        %v846 = vadd.f32 0.0, %v845
        %847 = vmatmul.f32.gmra.mxu0 %v501
        %v848 = vpop.f32.mrf.mxu0
        %v849 = vadd.f32 0.0, %v848
        %850 = vmatmul.f32.gmra.mxu0 %v504
        %v851 = vpop.f32.mrf.mxu0
        %v852 = vadd.f32 0.0, %v851
        %853 = vmatmul.f32.gmra.mxu0 %v507
        %v854 = vpop.f32.mrf.mxu0
        %v855 = vadd.f32 0.0, %v854
        %856 = vmatmul.f32.gmra.mxu0 %v510
        %v857 = vpop.f32.mrf.mxu0
        %v858 = vadd.f32 0.0, %v857
        %859 = vmatmul.f32.gmra.mxu0 %v513
        %v860 = vpop.f32.mrf.mxu0
        %v861 = vadd.f32 0.0, %v860
        %862 = vmatmul.f32.gmra.mxu0 %v516
        %v863 = vpop.f32.mrf.mxu0
        %v864 = vadd.f32 0.0, %v863
        %865 = vmatmul.f32.gmra.mxu0 %v519
        %v866 = vpop.f32.mrf.mxu0
        %v867 = vadd.f32 0.0, %v866
        %868 = vmatmul.f32.gmra.mxu0 %v522
        %v869 = vpop.f32.mrf.mxu0
        %v870 = vadd.f32 0.0, %v869
        %871 = vmatmul.f32.gmra.mxu0 %v525
        %v872 = vpop.f32.mrf.mxu0
        %v873 = vadd.f32 0.0, %v872
        %874 = vmatmul.f32.gmra.mxu0 %v528
        %v875 = vpop.f32.mrf.mxu0
        %v876 = vadd.f32 0.0, %v875
        %877 = vmatmul.f32.gmra.mxu0 %v531
        %v878 = vpop.f32.mrf.mxu0
        %v879 = vadd.f32 0.0, %v878
        %880 = vmatmul.f32.gmra.mxu0 %v534
        %v881 = vpop.f32.mrf.mxu0
        %v882 = vadd.f32 0.0, %v881
        %883 = vmatmul.f32.gmra.mxu0 %v537
        %v884 = vpop.f32.mrf.mxu0
        %v885 = vadd.f32 0.0, %v884
        %886 = vmatmul.f32.gmra.mxu0 %v540
        %v887 = vpop.f32.mrf.mxu0
        %v888 = vadd.f32 0.0, %v887
        %889 = vmatmul.f32.gmra.mxu0 %v543
        %v890 = vpop.f32.mrf.mxu0
        %v891 = vadd.f32 0.0, %v890
        %892 = vmatmul.f32.gmra.mxu0 %v546
        %v893 = vpop.f32.mrf.mxu0
        %v894 = vadd.f32 0.0, %v893
        %895 = vmatmul.f32.gmra.mxu0 %v549
        %v896 = vpop.f32.mrf.mxu0
        %v897 = vadd.f32 0.0, %v896
        %898 = vmatmul.f32.gmra.mxu0 %v552
        %v899 = vpop.f32.mrf.mxu0
        %v900 = vadd.f32 0.0, %v899
        %901 = vmatmul.f32.gmra.mxu0 %v555
        %v902 = vpop.f32.mrf.mxu0
        %v903 = vadd.f32 0.0, %v902
        %904 = vmatmul.f32.gmra.mxu0 %v558
        %v905 = vpop.f32.mrf.mxu0
        %v906 = vadd.f32 0.0, %v905
        %907 = vdwg.mxu0
        %908 = vmatpush.msra.mxu0 0.0
        %909 = vmatpush.msra.mxu0 0.0
        %910 = vmatpush.msra.mxu0 0.0
        %911 = vmatpush.msra.mxu0 0.0
        %912 = vmatpush.msra.mxu0 0.0
        %913 = vmatpush.msra.mxu0 0.0
        %914 = vmatpush.msra.mxu0 0.0
        %915 = vmatpush.msra.mxu0 0.0
        %916 = vmatpush.msra.mxu0 0.0
        %917 = vmatpush.msra.mxu0 0.0
        %918 = vmatpush.msra.mxu0 0.0
        %919 = vmatpush.msra.mxu0 0.0
        %920 = vmatpush.msra.mxu0 0.0
        %921 = vmatpush.msra.mxu0 0.0
        %922 = vmatpush.msra.mxu0 0.0
        %923 = vmatpush.msra.mxu0 %v567
        %924 = vmatmul.f32.gmra.mxu0 %v465
        %v925 = vpop.f32.mrf.mxu0
        %v926 = vadd.f32 0.0, %v925
        %927 = vmatmul.f32.gmra.mxu0 %v468
        %v928 = vpop.f32.mrf.mxu0
        %v929 = vadd.f32 0.0, %v928
        %930 = vmatmul.f32.gmra.mxu0 %v471
        %v931 = vpop.f32.mrf.mxu0
        %v932 = vadd.f32 0.0, %v931
        %933 = vmatmul.f32.gmra.mxu0 %v474
        %v934 = vpop.f32.mrf.mxu0
        %v935 = vadd.f32 0.0, %v934
        %936 = vmatmul.f32.gmra.mxu0 %v477
        %v937 = vpop.f32.mrf.mxu0
        %v938 = vadd.f32 0.0, %v937
        %939 = vmatmul.f32.gmra.mxu0 %v480
        %v940 = vpop.f32.mrf.mxu0
        %v941 = vadd.f32 0.0, %v940
        %942 = vmatmul.f32.gmra.mxu0 %v483
        %v943 = vpop.f32.mrf.mxu0
        %v944 = vadd.f32 0.0, %v943
        %945 = vmatmul.f32.gmra.mxu0 %v486
        %v946 = vpop.f32.mrf.mxu0
        %v947 = vadd.f32 0.0, %v946
        %948 = vmatmul.f32.gmra.mxu0 %v489
        %v949 = vpop.f32.mrf.mxu0
        %v950 = vadd.f32 0.0, %v949
        %951 = vmatmul.f32.gmra.mxu0 %v492
        %v952 = vpop.f32.mrf.mxu0
        %v953 = vadd.f32 0.0, %v952
        %954 = vmatmul.f32.gmra.mxu0 %v495
        %v955 = vpop.f32.mrf.mxu0
        %v956 = vadd.f32 0.0, %v955
        %957 = vmatmul.f32.gmra.mxu0 %v498
        %v958 = vpop.f32.mrf.mxu0
        %v959 = vadd.f32 0.0, %v958
        %960 = vmatmul.f32.gmra.mxu0 %v501
        %v961 = vpop.f32.mrf.mxu0
        %v962 = vadd.f32 0.0, %v961
        %963 = vmatmul.f32.gmra.mxu0 %v504
        %v964 = vpop.f32.mrf.mxu0
        %v965 = vadd.f32 0.0, %v964
        %966 = vmatmul.f32.gmra.mxu0 %v507
        %v967 = vpop.f32.mrf.mxu0
        %v968 = vadd.f32 0.0, %v967
        %969 = vmatmul.f32.gmra.mxu0 %v510
        %v970 = vpop.f32.mrf.mxu0
        %v971 = vadd.f32 0.0, %v970
        %972 = vmatmul.f32.gmra.mxu0 %v513
        %v973 = vpop.f32.mrf.mxu0
        %v974 = vadd.f32 0.0, %v973
        %975 = vmatmul.f32.gmra.mxu0 %v516
        %v976 = vpop.f32.mrf.mxu0
        %v977 = vadd.f32 0.0, %v976
        %978 = vmatmul.f32.gmra.mxu0 %v519
        %v979 = vpop.f32.mrf.mxu0
        %v980 = vadd.f32 0.0, %v979
        %981 = vmatmul.f32.gmra.mxu0 %v522
        %v982 = vpop.f32.mrf.mxu0
        %v983 = vadd.f32 0.0, %v982
        %984 = vmatmul.f32.gmra.mxu0 %v525
        %v985 = vpop.f32.mrf.mxu0
        %v986 = vadd.f32 0.0, %v985
        %987 = vmatmul.f32.gmra.mxu0 %v528
        %v988 = vpop.f32.mrf.mxu0
        %v989 = vadd.f32 0.0, %v988
        %990 = vmatmul.f32.gmra.mxu0 %v531
        %v991 = vpop.f32.mrf.mxu0
        %v992 = vadd.f32 0.0, %v991
        %993 = vmatmul.f32.gmra.mxu0 %v534
        %v994 = vpop.f32.mrf.mxu0
        %v995 = vadd.f32 0.0, %v994
        %996 = vmatmul.f32.gmra.mxu0 %v537
        %v997 = vpop.f32.mrf.mxu0
        %v998 = vadd.f32 0.0, %v997
        %999 = vmatmul.f32.gmra.mxu0 %v540
        %v1000 = vpop.f32.mrf.mxu0
        %v1001 = vadd.f32 0.0, %v1000
        %1002 = vmatmul.f32.gmra.mxu0 %v543
        %v1003 = vpop.f32.mrf.mxu0
        %v1004 = vadd.f32 0.0, %v1003
        %1005 = vmatmul.f32.gmra.mxu0 %v546
        %v1006 = vpop.f32.mrf.mxu0
        %v1007 = vadd.f32 0.0, %v1006
        %1008 = vmatmul.f32.gmra.mxu0 %v549
        %v1009 = vpop.f32.mrf.mxu0
        %v1010 = vadd.f32 0.0, %v1009
        %1011 = vmatmul.f32.gmra.mxu0 %v552
        %v1012 = vpop.f32.mrf.mxu0
        %v1013 = vadd.f32 0.0, %v1012
        %1014 = vmatmul.f32.gmra.mxu0 %v555
        %v1015 = vpop.f32.mrf.mxu0
        %v1016 = vadd.f32 0.0, %v1015
        %1017 = vmatmul.f32.gmra.mxu0 %v558
        %v1018 = vpop.f32.mrf.mxu0
        %v1019 = vadd.f32 0.0, %v1018
        %1020 = vdwg.mxu0
        %vm1021 = vcmask 195584
        %v1023 = vsel %vm1021, %v376, 0
        %v1026 = vsel %vm1021, %v377, 0
        %v1029 = vsel %vm1021, %v378, 0
        %v1032 = vsel %vm1021, %v379, 0
        %v1035 = vsel %vm1021, %v380, 0
        %v1038 = vsel %vm1021, %v381, 0
        %v1041 = vsel %vm1021, %v382, 0
        %v1044 = vsel %vm1021, %v383, 0
        %v1047 = vsel %vm1021, %v384, 0
        %v1050 = vsel %vm1021, %v385, 0
        %v1053 = vsel %vm1021, %v386, 0
        %v1056 = vsel %vm1021, %v387, 0
        %v1059 = vsel %vm1021, %v388, 0
        %v1062 = vsel %vm1021, %v389, 0
        %v1065 = vsel %vm1021, %v390, 0
        %v1068 = vsel %vm1021, %v391, 0
        %v1071 = vsel %vm1021, %v392, 0
        %v1074 = vsel %vm1021, %v393, 0
        %v1077 = vsel %vm1021, %v394, 0
        %v1080 = vsel %vm1021, %v395, 0
        %v1083 = vsel %vm1021, %v396, 0
        %v1086 = vsel %vm1021, %v397, 0
        %v1089 = vsel %vm1021, %v398, 0
        %v1092 = vsel %vm1021, %v399, 0
        %v1095 = vsel %vm1021, %v400, 0
        %v1098 = vsel %vm1021, %v401, 0
        %v1101 = vsel %vm1021, %v402, 0
        %v1104 = vsel %vm1021, %v403, 0
        %v1107 = vsel %vm1021, %v404, 0
        %v1110 = vsel %vm1021, %v405, 0
        %v1113 = vsel %vm1021, %v406, 0
        %v1116 = vsel %vm1021, %v407, 0
        %1118 = vmatpush.msra.mxu0 0.0
        %1119 = vmatpush.msra.mxu0 0.0
        %1120 = vmatpush.msra.mxu0 0.0
        %1121 = vmatpush.msra.mxu0 0.0
        %1122 = vmatpush.msra.mxu0 0.0
        %1123 = vmatpush.msra.mxu0 0.0
        %1124 = vmatpush.msra.mxu0 0.0
        %1125 = vmatpush.msra.mxu0 0.0
        %1126 = vmatpush.msra.mxu0 0.0
        %1127 = vmatpush.msra.mxu0 0.0
        %1128 = vmatpush.msra.mxu0 0.0
        %1129 = vmatpush.msra.mxu0 0.0
        %1130 = vmatpush.msra.mxu0 0.0
        %1131 = vmatpush.msra.mxu0 %v416
        %1132 = vmatpush.msra.mxu0 %v412
        %1133 = vmatpush.msra.mxu0 %v408
        %1134 = vmatmul.f32.gmra.mxu0 %v1023
        %v1135 = vpop.f32.mrf.mxu0
        %v1136 = vadd.f32 %v587, %v1135
        %1137 = vmatmul.f32.gmra.mxu0 %v1026
        %v1138 = vpop.f32.mrf.mxu0
        %v1139 = vadd.f32 %v590, %v1138
        %1140 = vmatmul.f32.gmra.mxu0 %v1029
        %v1141 = vpop.f32.mrf.mxu0
        %v1142 = vadd.f32 %v593, %v1141
        %1143 = vmatmul.f32.gmra.mxu0 %v1032
        %v1144 = vpop.f32.mrf.mxu0
        %v1145 = vadd.f32 %v596, %v1144
        %1146 = vmatmul.f32.gmra.mxu0 %v1035
        %v1147 = vpop.f32.mrf.mxu0
        %v1148 = vadd.f32 %v599, %v1147
        %1149 = vmatmul.f32.gmra.mxu0 %v1038
        %v1150 = vpop.f32.mrf.mxu0
        %v1151 = vadd.f32 %v602, %v1150
        %1152 = vmatmul.f32.gmra.mxu0 %v1041
        %v1153 = vpop.f32.mrf.mxu0
        %v1154 = vadd.f32 %v605, %v1153
        %1155 = vmatmul.f32.gmra.mxu0 %v1044
        %v1156 = vpop.f32.mrf.mxu0
        %v1157 = vadd.f32 %v608, %v1156
        %1158 = vmatmul.f32.gmra.mxu0 %v1047
        %v1159 = vpop.f32.mrf.mxu0
        %v1160 = vadd.f32 %v611, %v1159
        %1161 = vmatmul.f32.gmra.mxu0 %v1050
        %v1162 = vpop.f32.mrf.mxu0
        %v1163 = vadd.f32 %v614, %v1162
        %1164 = vmatmul.f32.gmra.mxu0 %v1053
        %v1165 = vpop.f32.mrf.mxu0
        %v1166 = vadd.f32 %v617, %v1165
        %1167 = vmatmul.f32.gmra.mxu0 %v1056
        %v1168 = vpop.f32.mrf.mxu0
        %v1169 = vadd.f32 %v620, %v1168
        %1170 = vmatmul.f32.gmra.mxu0 %v1059
        %v1171 = vpop.f32.mrf.mxu0
        %v1172 = vadd.f32 %v623, %v1171
        %1173 = vmatmul.f32.gmra.mxu0 %v1062
        %v1174 = vpop.f32.mrf.mxu0
        %v1175 = vadd.f32 %v626, %v1174
        %1176 = vmatmul.f32.gmra.mxu0 %v1065
        %v1177 = vpop.f32.mrf.mxu0
        %v1178 = vadd.f32 %v629, %v1177
        %1179 = vmatmul.f32.gmra.mxu0 %v1068
        %v1180 = vpop.f32.mrf.mxu0
        %v1181 = vadd.f32 %v632, %v1180
        %1182 = vmatmul.f32.gmra.mxu0 %v1071
        %v1183 = vpop.f32.mrf.mxu0
        %v1184 = vadd.f32 %v635, %v1183
        %1185 = vmatmul.f32.gmra.mxu0 %v1074
        %v1186 = vpop.f32.mrf.mxu0
        %v1187 = vadd.f32 %v638, %v1186
        %1188 = vmatmul.f32.gmra.mxu0 %v1077
        %v1189 = vpop.f32.mrf.mxu0
        %v1190 = vadd.f32 %v641, %v1189
        %1191 = vmatmul.f32.gmra.mxu0 %v1080
        %v1192 = vpop.f32.mrf.mxu0
        %v1193 = vadd.f32 %v644, %v1192
        %1194 = vmatmul.f32.gmra.mxu0 %v1083
        %v1195 = vpop.f32.mrf.mxu0
        %v1196 = vadd.f32 %v647, %v1195
        %1197 = vmatmul.f32.gmra.mxu0 %v1086
        %v1198 = vpop.f32.mrf.mxu0
        %v1199 = vadd.f32 %v650, %v1198
        %1200 = vmatmul.f32.gmra.mxu0 %v1089
        %v1201 = vpop.f32.mrf.mxu0
        %v1202 = vadd.f32 %v653, %v1201
        %1203 = vmatmul.f32.gmra.mxu0 %v1092
        %v1204 = vpop.f32.mrf.mxu0
        %v1205 = vadd.f32 %v656, %v1204
        %1206 = vmatmul.f32.gmra.mxu0 %v1095
        %v1207 = vpop.f32.mrf.mxu0
        %v1208 = vadd.f32 %v659, %v1207
        %1209 = vmatmul.f32.gmra.mxu0 %v1098
        %v1210 = vpop.f32.mrf.mxu0
        %v1211 = vadd.f32 %v662, %v1210
        %1212 = vmatmul.f32.gmra.mxu0 %v1101
        %v1213 = vpop.f32.mrf.mxu0
        %v1214 = vadd.f32 %v665, %v1213
        %1215 = vmatmul.f32.gmra.mxu0 %v1104
        %v1216 = vpop.f32.mrf.mxu0
        %v1217 = vadd.f32 %v668, %v1216
        %1218 = vmatmul.f32.gmra.mxu0 %v1107
        %v1219 = vpop.f32.mrf.mxu0
        %v1220 = vadd.f32 %v671, %v1219
        %1221 = vmatmul.f32.gmra.mxu0 %v1110
        %v1222 = vpop.f32.mrf.mxu0
        %v1223 = vadd.f32 %v674, %v1222
        %1224 = vmatmul.f32.gmra.mxu0 %v1113
        %v1225 = vpop.f32.mrf.mxu0
        %v1226 = vadd.f32 %v677, %v1225
        %1227 = vmatmul.f32.gmra.mxu0 %v1116
        %v1228 = vpop.f32.mrf.mxu0
        %v1229 = vadd.f32 %v680, %v1228
        %1230 = vdwg.mxu0
        %1231 = vmatpush.msra.mxu0 0.0
        %1232 = vmatpush.msra.mxu0 0.0
        %1233 = vmatpush.msra.mxu0 0.0
        %1234 = vmatpush.msra.mxu0 0.0
        %1235 = vmatpush.msra.mxu0 0.0
        %1236 = vmatpush.msra.mxu0 0.0
        %1237 = vmatpush.msra.mxu0 0.0
        %1238 = vmatpush.msra.mxu0 0.0
        %1239 = vmatpush.msra.mxu0 0.0
        %1240 = vmatpush.msra.mxu0 0.0
        %1241 = vmatpush.msra.mxu0 0.0
        %1242 = vmatpush.msra.mxu0 0.0
        %1243 = vmatpush.msra.mxu0 0.0
        %1244 = vmatpush.msra.mxu0 %v417
        %1245 = vmatpush.msra.mxu0 %v413
        %1246 = vmatpush.msra.mxu0 %v409
        %1247 = vmatmul.f32.gmra.mxu0 %v1023
        %v1248 = vpop.f32.mrf.mxu0
        %v1249 = vadd.f32 %v700, %v1248
        %1250 = vmatmul.f32.gmra.mxu0 %v1026
        %v1251 = vpop.f32.mrf.mxu0
        %v1252 = vadd.f32 %v703, %v1251
        %1253 = vmatmul.f32.gmra.mxu0 %v1029
        %v1254 = vpop.f32.mrf.mxu0
        %v1255 = vadd.f32 %v706, %v1254
        %1256 = vmatmul.f32.gmra.mxu0 %v1032
        %v1257 = vpop.f32.mrf.mxu0
        %v1258 = vadd.f32 %v709, %v1257
        %1259 = vmatmul.f32.gmra.mxu0 %v1035
        %v1260 = vpop.f32.mrf.mxu0
        %v1261 = vadd.f32 %v712, %v1260
        %1262 = vmatmul.f32.gmra.mxu0 %v1038
        %v1263 = vpop.f32.mrf.mxu0
        %v1264 = vadd.f32 %v715, %v1263
        %1265 = vmatmul.f32.gmra.mxu0 %v1041
        %v1266 = vpop.f32.mrf.mxu0
        %v1267 = vadd.f32 %v718, %v1266
        %1268 = vmatmul.f32.gmra.mxu0 %v1044
        %v1269 = vpop.f32.mrf.mxu0
        %v1270 = vadd.f32 %v721, %v1269
        %1271 = vmatmul.f32.gmra.mxu0 %v1047
        %v1272 = vpop.f32.mrf.mxu0
        %v1273 = vadd.f32 %v724, %v1272
        %1274 = vmatmul.f32.gmra.mxu0 %v1050
        %v1275 = vpop.f32.mrf.mxu0
        %v1276 = vadd.f32 %v727, %v1275
        %1277 = vmatmul.f32.gmra.mxu0 %v1053
        %v1278 = vpop.f32.mrf.mxu0
        %v1279 = vadd.f32 %v730, %v1278
        %1280 = vmatmul.f32.gmra.mxu0 %v1056
        %v1281 = vpop.f32.mrf.mxu0
        %v1282 = vadd.f32 %v733, %v1281
        %1283 = vmatmul.f32.gmra.mxu0 %v1059
        %v1284 = vpop.f32.mrf.mxu0
        %v1285 = vadd.f32 %v736, %v1284
        %1286 = vmatmul.f32.gmra.mxu0 %v1062
        %v1287 = vpop.f32.mrf.mxu0
        %v1288 = vadd.f32 %v739, %v1287
        %1289 = vmatmul.f32.gmra.mxu0 %v1065
        %v1290 = vpop.f32.mrf.mxu0
        %v1291 = vadd.f32 %v742, %v1290
        %1292 = vmatmul.f32.gmra.mxu0 %v1068
        %v1293 = vpop.f32.mrf.mxu0
        %v1294 = vadd.f32 %v745, %v1293
        %1295 = vmatmul.f32.gmra.mxu0 %v1071
        %v1296 = vpop.f32.mrf.mxu0
        %v1297 = vadd.f32 %v748, %v1296
        %1298 = vmatmul.f32.gmra.mxu0 %v1074
        %v1299 = vpop.f32.mrf.mxu0
        %v1300 = vadd.f32 %v751, %v1299
        %1301 = vmatmul.f32.gmra.mxu0 %v1077
        %v1302 = vpop.f32.mrf.mxu0
        %v1303 = vadd.f32 %v754, %v1302
        %1304 = vmatmul.f32.gmra.mxu0 %v1080
        %v1305 = vpop.f32.mrf.mxu0
        %v1306 = vadd.f32 %v757, %v1305
        %1307 = vmatmul.f32.gmra.mxu0 %v1083
        %v1308 = vpop.f32.mrf.mxu0
        %v1309 = vadd.f32 %v760, %v1308
        %1310 = vmatmul.f32.gmra.mxu0 %v1086
        %v1311 = vpop.f32.mrf.mxu0
        %v1312 = vadd.f32 %v763, %v1311
        %1313 = vmatmul.f32.gmra.mxu0 %v1089
        %v1314 = vpop.f32.mrf.mxu0
        %v1315 = vadd.f32 %v766, %v1314
        %1316 = vmatmul.f32.gmra.mxu0 %v1092
        %v1317 = vpop.f32.mrf.mxu0
        %v1318 = vadd.f32 %v769, %v1317
        %1319 = vmatmul.f32.gmra.mxu0 %v1095
        %v1320 = vpop.f32.mrf.mxu0
        %v1321 = vadd.f32 %v772, %v1320
        %1322 = vmatmul.f32.gmra.mxu0 %v1098
        %v1323 = vpop.f32.mrf.mxu0
        %v1324 = vadd.f32 %v775, %v1323
        %1325 = vmatmul.f32.gmra.mxu0 %v1101
        %v1326 = vpop.f32.mrf.mxu0
        %v1327 = vadd.f32 %v778, %v1326
        %1328 = vmatmul.f32.gmra.mxu0 %v1104
        %v1329 = vpop.f32.mrf.mxu0
        %v1330 = vadd.f32 %v781, %v1329
        %1331 = vmatmul.f32.gmra.mxu0 %v1107
        %v1332 = vpop.f32.mrf.mxu0
        %v1333 = vadd.f32 %v784, %v1332
        %1334 = vmatmul.f32.gmra.mxu0 %v1110
        %v1335 = vpop.f32.mrf.mxu0
        %v1336 = vadd.f32 %v787, %v1335
        %1337 = vmatmul.f32.gmra.mxu0 %v1113
        %v1338 = vpop.f32.mrf.mxu0
        %v1339 = vadd.f32 %v790, %v1338
        %1340 = vmatmul.f32.gmra.mxu0 %v1116
        %v1341 = vpop.f32.mrf.mxu0
        %v1342 = vadd.f32 %v793, %v1341
        %1343 = vdwg.mxu0
        %1344 = vmatpush.msra.mxu0 0.0
        %1345 = vmatpush.msra.mxu0 0.0
        %1346 = vmatpush.msra.mxu0 0.0
        %1347 = vmatpush.msra.mxu0 0.0
        %1348 = vmatpush.msra.mxu0 0.0
        %1349 = vmatpush.msra.mxu0 0.0
        %1350 = vmatpush.msra.mxu0 0.0
        %1351 = vmatpush.msra.mxu0 0.0
        %1352 = vmatpush.msra.mxu0 0.0
        %1353 = vmatpush.msra.mxu0 0.0
        %1354 = vmatpush.msra.mxu0 0.0
        %1355 = vmatpush.msra.mxu0 0.0
        %1356 = vmatpush.msra.mxu0 0.0
        %1357 = vmatpush.msra.mxu0 %v418
        %1358 = vmatpush.msra.mxu0 %v414
        %1359 = vmatpush.msra.mxu0 %v410
        %1360 = vmatmul.f32.gmra.mxu0 %v1023
        %v1361 = vpop.f32.mrf.mxu0
        %v1362 = vadd.f32 %v813, %v1361
        %1363 = vmatmul.f32.gmra.mxu0 %v1026
        %v1364 = vpop.f32.mrf.mxu0
        %v1365 = vadd.f32 %v816, %v1364
        %1366 = vmatmul.f32.gmra.mxu0 %v1029
        %v1367 = vpop.f32.mrf.mxu0
        %v1368 = vadd.f32 %v819, %v1367
        %1369 = vmatmul.f32.gmra.mxu0 %v1032
        %v1370 = vpop.f32.mrf.mxu0
        %v1371 = vadd.f32 %v822, %v1370
        %1372 = vmatmul.f32.gmra.mxu0 %v1035
        %v1373 = vpop.f32.mrf.mxu0
        %v1374 = vadd.f32 %v825, %v1373
        %1375 = vmatmul.f32.gmra.mxu0 %v1038
        %v1376 = vpop.f32.mrf.mxu0
        %v1377 = vadd.f32 %v828, %v1376
        %1378 = vmatmul.f32.gmra.mxu0 %v1041
        %v1379 = vpop.f32.mrf.mxu0
        %v1380 = vadd.f32 %v831, %v1379
        %1381 = vmatmul.f32.gmra.mxu0 %v1044
        %v1382 = vpop.f32.mrf.mxu0
        %v1383 = vadd.f32 %v834, %v1382
        %1384 = vmatmul.f32.gmra.mxu0 %v1047
        %v1385 = vpop.f32.mrf.mxu0
        %v1386 = vadd.f32 %v837, %v1385
        %1387 = vmatmul.f32.gmra.mxu0 %v1050
        %v1388 = vpop.f32.mrf.mxu0
        %v1389 = vadd.f32 %v840, %v1388
        %1390 = vmatmul.f32.gmra.mxu0 %v1053
        %v1391 = vpop.f32.mrf.mxu0
        %v1392 = vadd.f32 %v843, %v1391
        %1393 = vmatmul.f32.gmra.mxu0 %v1056
        %v1394 = vpop.f32.mrf.mxu0
        %v1395 = vadd.f32 %v846, %v1394
        %1396 = vmatmul.f32.gmra.mxu0 %v1059
        %v1397 = vpop.f32.mrf.mxu0
        %v1398 = vadd.f32 %v849, %v1397
        %1399 = vmatmul.f32.gmra.mxu0 %v1062
        %v1400 = vpop.f32.mrf.mxu0
        %v1401 = vadd.f32 %v852, %v1400
        %1402 = vmatmul.f32.gmra.mxu0 %v1065
        %v1403 = vpop.f32.mrf.mxu0
        %v1404 = vadd.f32 %v855, %v1403
        %1405 = vmatmul.f32.gmra.mxu0 %v1068
        %v1406 = vpop.f32.mrf.mxu0
        %v1407 = vadd.f32 %v858, %v1406
        %1408 = vmatmul.f32.gmra.mxu0 %v1071
        %v1409 = vpop.f32.mrf.mxu0
        %v1410 = vadd.f32 %v861, %v1409
        %1411 = vmatmul.f32.gmra.mxu0 %v1074
        %v1412 = vpop.f32.mrf.mxu0
        %v1413 = vadd.f32 %v864, %v1412
        %1414 = vmatmul.f32.gmra.mxu0 %v1077
        %v1415 = vpop.f32.mrf.mxu0
        %v1416 = vadd.f32 %v867, %v1415
        %1417 = vmatmul.f32.gmra.mxu0 %v1080
        %v1418 = vpop.f32.mrf.mxu0
        %v1419 = vadd.f32 %v870, %v1418
        %1420 = vmatmul.f32.gmra.mxu0 %v1083
        %v1421 = vpop.f32.mrf.mxu0
        %v1422 = vadd.f32 %v873, %v1421
        %1423 = vmatmul.f32.gmra.mxu0 %v1086
        %v1424 = vpop.f32.mrf.mxu0
        %v1425 = vadd.f32 %v876, %v1424
        %1426 = vmatmul.f32.gmra.mxu0 %v1089
        %v1427 = vpop.f32.mrf.mxu0
        %v1428 = vadd.f32 %v879, %v1427
        %1429 = vmatmul.f32.gmra.mxu0 %v1092
        %v1430 = vpop.f32.mrf.mxu0
        %v1431 = vadd.f32 %v882, %v1430
        %1432 = vmatmul.f32.gmra.mxu0 %v1095
        %v1433 = vpop.f32.mrf.mxu0
        %v1434 = vadd.f32 %v885, %v1433
        %1435 = vmatmul.f32.gmra.mxu0 %v1098
        %v1436 = vpop.f32.mrf.mxu0
        %v1437 = vadd.f32 %v888, %v1436
        %1438 = vmatmul.f32.gmra.mxu0 %v1101
        %v1439 = vpop.f32.mrf.mxu0
        %v1440 = vadd.f32 %v891, %v1439
        %1441 = vmatmul.f32.gmra.mxu0 %v1104
        %v1442 = vpop.f32.mrf.mxu0
        %v1443 = vadd.f32 %v894, %v1442
        %1444 = vmatmul.f32.gmra.mxu0 %v1107
        %v1445 = vpop.f32.mrf.mxu0
        %v1446 = vadd.f32 %v897, %v1445
        %1447 = vmatmul.f32.gmra.mxu0 %v1110
        %v1448 = vpop.f32.mrf.mxu0
        %v1449 = vadd.f32 %v900, %v1448
        %1450 = vmatmul.f32.gmra.mxu0 %v1113
        %v1451 = vpop.f32.mrf.mxu0
        %v1452 = vadd.f32 %v903, %v1451
        %1453 = vmatmul.f32.gmra.mxu0 %v1116
        %v1454 = vpop.f32.mrf.mxu0
        %v1455 = vadd.f32 %v906, %v1454
        %1456 = vdwg.mxu0
        %1457 = vmatpush.msra.mxu0 0.0
        %1458 = vmatpush.msra.mxu0 0.0
        %1459 = vmatpush.msra.mxu0 0.0
        %1460 = vmatpush.msra.mxu0 0.0
        %1461 = vmatpush.msra.mxu0 0.0
        %1462 = vmatpush.msra.mxu0 0.0
        %1463 = vmatpush.msra.mxu0 0.0
        %1464 = vmatpush.msra.mxu0 0.0
        %1465 = vmatpush.msra.mxu0 0.0
        %1466 = vmatpush.msra.mxu0 0.0
        %1467 = vmatpush.msra.mxu0 0.0
        %1468 = vmatpush.msra.mxu0 0.0
        %1469 = vmatpush.msra.mxu0 0.0
        %1470 = vmatpush.msra.mxu0 %v419
        %1471 = vmatpush.msra.mxu0 %v415
        %1472 = vmatpush.msra.mxu0 %v411
        %1473 = vmatmul.f32.gmra.mxu0 %v1023
        %v1474 = vpop.f32.mrf.mxu0
        %v1475 = vadd.f32 %v926, %v1474
        %1476 = vmatmul.f32.gmra.mxu0 %v1026
        %v1477 = vpop.f32.mrf.mxu0
        %v1478 = vadd.f32 %v929, %v1477
        %1479 = vmatmul.f32.gmra.mxu0 %v1029
        %v1480 = vpop.f32.mrf.mxu0
        %v1481 = vadd.f32 %v932, %v1480
        %1482 = vmatmul.f32.gmra.mxu0 %v1032
        %v1483 = vpop.f32.mrf.mxu0
        %v1484 = vadd.f32 %v935, %v1483
        %1485 = vmatmul.f32.gmra.mxu0 %v1035
        %v1486 = vpop.f32.mrf.mxu0
        %v1487 = vadd.f32 %v938, %v1486
        %1488 = vmatmul.f32.gmra.mxu0 %v1038
        %v1489 = vpop.f32.mrf.mxu0
        %v1490 = vadd.f32 %v941, %v1489
        %1491 = vmatmul.f32.gmra.mxu0 %v1041
        %v1492 = vpop.f32.mrf.mxu0
        %v1493 = vadd.f32 %v944, %v1492
        %1494 = vmatmul.f32.gmra.mxu0 %v1044
        %v1495 = vpop.f32.mrf.mxu0
        %v1496 = vadd.f32 %v947, %v1495
        %1497 = vmatmul.f32.gmra.mxu0 %v1047
        %v1498 = vpop.f32.mrf.mxu0
        %v1499 = vadd.f32 %v950, %v1498
        %1500 = vmatmul.f32.gmra.mxu0 %v1050
        %v1501 = vpop.f32.mrf.mxu0
        %v1502 = vadd.f32 %v953, %v1501
        %1503 = vmatmul.f32.gmra.mxu0 %v1053
        %v1504 = vpop.f32.mrf.mxu0
        %v1505 = vadd.f32 %v956, %v1504
        %1506 = vmatmul.f32.gmra.mxu0 %v1056
        %v1507 = vpop.f32.mrf.mxu0
        %v1508 = vadd.f32 %v959, %v1507
        %1509 = vmatmul.f32.gmra.mxu0 %v1059
        %v1510 = vpop.f32.mrf.mxu0
        %v1511 = vadd.f32 %v962, %v1510
        %1512 = vmatmul.f32.gmra.mxu0 %v1062
        %v1513 = vpop.f32.mrf.mxu0
        %v1514 = vadd.f32 %v965, %v1513
        %1515 = vmatmul.f32.gmra.mxu0 %v1065
        %v1516 = vpop.f32.mrf.mxu0
        %v1517 = vadd.f32 %v968, %v1516
        %1518 = vmatmul.f32.gmra.mxu0 %v1068
        %v1519 = vpop.f32.mrf.mxu0
        %v1520 = vadd.f32 %v971, %v1519
        %1521 = vmatmul.f32.gmra.mxu0 %v1071
        %v1522 = vpop.f32.mrf.mxu0
        %v1523 = vadd.f32 %v974, %v1522
        %1524 = vmatmul.f32.gmra.mxu0 %v1074
        %v1525 = vpop.f32.mrf.mxu0
        %v1526 = vadd.f32 %v977, %v1525
        %1527 = vmatmul.f32.gmra.mxu0 %v1077
        %v1528 = vpop.f32.mrf.mxu0
        %v1529 = vadd.f32 %v980, %v1528
        %1530 = vmatmul.f32.gmra.mxu0 %v1080
        %v1531 = vpop.f32.mrf.mxu0
        %v1532 = vadd.f32 %v983, %v1531
        %1533 = vmatmul.f32.gmra.mxu0 %v1083
        %v1534 = vpop.f32.mrf.mxu0
        %v1535 = vadd.f32 %v986, %v1534
        %1536 = vmatmul.f32.gmra.mxu0 %v1086
        %v1537 = vpop.f32.mrf.mxu0
        %v1538 = vadd.f32 %v989, %v1537
        %1539 = vmatmul.f32.gmra.mxu0 %v1089
        %v1540 = vpop.f32.mrf.mxu0
        %v1541 = vadd.f32 %v992, %v1540
        %1542 = vmatmul.f32.gmra.mxu0 %v1092
        %v1543 = vpop.f32.mrf.mxu0
        %v1544 = vadd.f32 %v995, %v1543
        %1545 = vmatmul.f32.gmra.mxu0 %v1095
        %v1546 = vpop.f32.mrf.mxu0
        %v1547 = vadd.f32 %v998, %v1546
        %1548 = vmatmul.f32.gmra.mxu0 %v1098
        %v1549 = vpop.f32.mrf.mxu0
        %v1550 = vadd.f32 %v1001, %v1549
        %1551 = vmatmul.f32.gmra.mxu0 %v1101
        %v1552 = vpop.f32.mrf.mxu0
        %v1553 = vadd.f32 %v1004, %v1552
        %1554 = vmatmul.f32.gmra.mxu0 %v1104
        %v1555 = vpop.f32.mrf.mxu0
        %v1556 = vadd.f32 %v1007, %v1555
        %1557 = vmatmul.f32.gmra.mxu0 %v1107
        %v1558 = vpop.f32.mrf.mxu0
        %v1559 = vadd.f32 %v1010, %v1558
        %1560 = vmatmul.f32.gmra.mxu0 %v1110
        %v1561 = vpop.f32.mrf.mxu0
        %v1562 = vadd.f32 %v1013, %v1561
        %1563 = vmatmul.f32.gmra.mxu0 %v1113
        %v1564 = vpop.f32.mrf.mxu0
        %v1565 = vadd.f32 %v1016, %v1564
        %1566 = vmatmul.f32.gmra.mxu0 %v1116
        %v1567 = vpop.f32.mrf.mxu0
        %v1568 = vadd.f32 %v1019, %v1567
        %1569 = vdwg.mxu0
        %v1570 = vld [vmem:[%s4] sm:$0xf]
        %v1572 = vperm.slane %v1570, 0
        %v1573 = vperm.slane %v1570, 1
        %v1574 = vperm.slane %v1570, 2
        %v1575 = vperm.slane %v1570, 3
        %v1580 = vadd.f32 %v1136, %v1572
        %v1581 = vadd.f32 %v1249, %v1573
        %v1582 = vadd.f32 %v1362, %v1574
        %v1583 = vadd.f32 %v1475, %v1575
        %v1584 = vadd.f32 %v1139, %v1572
        %v1585 = vadd.f32 %v1252, %v1573
        %v1586 = vadd.f32 %v1365, %v1574
        %v1587 = vadd.f32 %v1478, %v1575
        %v1588 = vadd.f32 %v1142, %v1572
        %v1589 = vadd.f32 %v1255, %v1573
        %v1590 = vadd.f32 %v1368, %v1574
        %v1591 = vadd.f32 %v1481, %v1575
        %v1592 = vadd.f32 %v1145, %v1572
        %v1593 = vadd.f32 %v1258, %v1573
        %v1594 = vadd.f32 %v1371, %v1574
        %v1595 = vadd.f32 %v1484, %v1575
        %v1596 = vadd.f32 %v1148, %v1572
        %v1597 = vadd.f32 %v1261, %v1573
        %v1598 = vadd.f32 %v1374, %v1574
        %v1599 = vadd.f32 %v1487, %v1575
        %v1600 = vadd.f32 %v1151, %v1572
        %v1601 = vadd.f32 %v1264, %v1573
        %v1602 = vadd.f32 %v1377, %v1574
        %v1603 = vadd.f32 %v1490, %v1575
        %v1604 = vadd.f32 %v1154, %v1572
        %v1605 = vadd.f32 %v1267, %v1573
        %v1606 = vadd.f32 %v1380, %v1574
        %v1607 = vadd.f32 %v1493, %v1575
        %v1608 = vadd.f32 %v1157, %v1572
        %v1609 = vadd.f32 %v1270, %v1573
        %v1610 = vadd.f32 %v1383, %v1574
        %v1611 = vadd.f32 %v1496, %v1575
        %v1612 = vadd.f32 %v1160, %v1572
        %v1613 = vadd.f32 %v1273, %v1573
        %v1614 = vadd.f32 %v1386, %v1574
        %v1615 = vadd.f32 %v1499, %v1575
        %v1616 = vadd.f32 %v1163, %v1572
        %v1617 = vadd.f32 %v1276, %v1573
        %v1618 = vadd.f32 %v1389, %v1574
        %v1619 = vadd.f32 %v1502, %v1575
        %v1620 = vadd.f32 %v1166, %v1572
        %v1621 = vadd.f32 %v1279, %v1573
        %v1622 = vadd.f32 %v1392, %v1574
        %v1623 = vadd.f32 %v1505, %v1575
        %v1624 = vadd.f32 %v1169, %v1572
        %v1625 = vadd.f32 %v1282, %v1573
        %v1626 = vadd.f32 %v1395, %v1574
        %v1627 = vadd.f32 %v1508, %v1575
        %v1628 = vadd.f32 %v1172, %v1572
        %v1629 = vadd.f32 %v1285, %v1573
        %v1630 = vadd.f32 %v1398, %v1574
        %v1631 = vadd.f32 %v1511, %v1575
        %v1632 = vadd.f32 %v1175, %v1572
        %v1633 = vadd.f32 %v1288, %v1573
        %v1634 = vadd.f32 %v1401, %v1574
        %v1635 = vadd.f32 %v1514, %v1575
        %v1636 = vadd.f32 %v1178, %v1572
        %v1637 = vadd.f32 %v1291, %v1573
        %v1638 = vadd.f32 %v1404, %v1574
        %v1639 = vadd.f32 %v1517, %v1575
        %v1640 = vadd.f32 %v1181, %v1572
        %v1641 = vadd.f32 %v1294, %v1573
        %v1642 = vadd.f32 %v1407, %v1574
        %v1643 = vadd.f32 %v1520, %v1575
        %v1644 = vadd.f32 %v1184, %v1572
        %v1645 = vadd.f32 %v1297, %v1573
        %v1646 = vadd.f32 %v1410, %v1574
        %v1647 = vadd.f32 %v1523, %v1575
        %v1648 = vadd.f32 %v1187, %v1572
        %v1649 = vadd.f32 %v1300, %v1573
        %v1650 = vadd.f32 %v1413, %v1574
        %v1651 = vadd.f32 %v1526, %v1575
        %v1652 = vadd.f32 %v1190, %v1572
        %v1653 = vadd.f32 %v1303, %v1573
        %v1654 = vadd.f32 %v1416, %v1574
        %v1655 = vadd.f32 %v1529, %v1575
        %v1656 = vadd.f32 %v1193, %v1572
        %v1657 = vadd.f32 %v1306, %v1573
        %v1658 = vadd.f32 %v1419, %v1574
        %v1659 = vadd.f32 %v1532, %v1575
        %v1660 = vadd.f32 %v1196, %v1572
        %v1661 = vadd.f32 %v1309, %v1573
        %v1662 = vadd.f32 %v1422, %v1574
        %v1663 = vadd.f32 %v1535, %v1575
        %v1664 = vadd.f32 %v1199, %v1572
        %v1665 = vadd.f32 %v1312, %v1573
        %v1666 = vadd.f32 %v1425, %v1574
        %v1667 = vadd.f32 %v1538, %v1575
        %v1668 = vadd.f32 %v1202, %v1572
        %v1669 = vadd.f32 %v1315, %v1573
        %v1670 = vadd.f32 %v1428, %v1574
        %v1671 = vadd.f32 %v1541, %v1575
        %v1672 = vadd.f32 %v1205, %v1572
        %v1673 = vadd.f32 %v1318, %v1573
        %v1674 = vadd.f32 %v1431, %v1574
        %v1675 = vadd.f32 %v1544, %v1575
        %v1676 = vadd.f32 %v1208, %v1572
        %v1677 = vadd.f32 %v1321, %v1573
        %v1678 = vadd.f32 %v1434, %v1574
        %v1679 = vadd.f32 %v1547, %v1575
        %v1680 = vadd.f32 %v1211, %v1572
        %v1681 = vadd.f32 %v1324, %v1573
        %v1682 = vadd.f32 %v1437, %v1574
        %v1683 = vadd.f32 %v1550, %v1575
        %v1684 = vadd.f32 %v1214, %v1572
        %v1685 = vadd.f32 %v1327, %v1573
        %v1686 = vadd.f32 %v1440, %v1574
        %v1687 = vadd.f32 %v1553, %v1575
        %v1688 = vadd.f32 %v1217, %v1572
        %v1689 = vadd.f32 %v1330, %v1573
        %v1690 = vadd.f32 %v1443, %v1574
        %v1691 = vadd.f32 %v1556, %v1575
        %v1692 = vadd.f32 %v1220, %v1572
        %v1693 = vadd.f32 %v1333, %v1573
        %v1694 = vadd.f32 %v1446, %v1574
        %v1695 = vadd.f32 %v1559, %v1575
        %v1696 = vadd.f32 %v1223, %v1572
        %v1697 = vadd.f32 %v1336, %v1573
        %v1698 = vadd.f32 %v1449, %v1574
        %v1699 = vadd.f32 %v1562, %v1575
        %v1700 = vadd.f32 %v1226, %v1572
        %v1701 = vadd.f32 %v1339, %v1573
        %v1702 = vadd.f32 %v1452, %v1574
        %v1703 = vadd.f32 %v1565, %v1575
        %v1704 = vadd.f32 %v1229, %v1572
        %v1705 = vadd.f32 %v1342, %v1573
        %v1706 = vadd.f32 %v1455, %v1574
        %v1707 = vadd.f32 %v1568, %v1575
        %v1708 = vmax.f32 %v1580, 0.0
        %v1709 = vmax.f32 %v1581, 0.0
        %v1710 = vmax.f32 %v1582, 0.0
        %v1711 = vmax.f32 %v1583, 0.0
        %v1712 = vmax.f32 %v1584, 0.0
        %v1713 = vmax.f32 %v1585, 0.0
        %v1714 = vmax.f32 %v1586, 0.0
        %v1715 = vmax.f32 %v1587, 0.0
        %v1716 = vmax.f32 %v1588, 0.0
        %v1717 = vmax.f32 %v1589, 0.0
        %v1718 = vmax.f32 %v1590, 0.0
        %v1719 = vmax.f32 %v1591, 0.0
        %v1720 = vmax.f32 %v1592, 0.0
        %v1721 = vmax.f32 %v1593, 0.0
        %v1722 = vmax.f32 %v1594, 0.0
        %v1723 = vmax.f32 %v1595, 0.0
        %v1724 = vmax.f32 %v1596, 0.0
        %v1725 = vmax.f32 %v1597, 0.0
        %v1726 = vmax.f32 %v1598, 0.0
        %v1727 = vmax.f32 %v1599, 0.0
        %v1728 = vmax.f32 %v1600, 0.0
        %v1729 = vmax.f32 %v1601, 0.0
        %v1730 = vmax.f32 %v1602, 0.0
        %v1731 = vmax.f32 %v1603, 0.0
        %v1732 = vmax.f32 %v1604, 0.0
        %v1733 = vmax.f32 %v1605, 0.0
        %v1734 = vmax.f32 %v1606, 0.0
        %v1735 = vmax.f32 %v1607, 0.0
        %v1736 = vmax.f32 %v1608, 0.0
        %v1737 = vmax.f32 %v1609, 0.0
        %v1738 = vmax.f32 %v1610, 0.0
        %v1739 = vmax.f32 %v1611, 0.0
        %v1740 = vmax.f32 %v1612, 0.0
        %v1741 = vmax.f32 %v1613, 0.0
        %v1742 = vmax.f32 %v1614, 0.0
        %v1743 = vmax.f32 %v1615, 0.0
        %v1744 = vmax.f32 %v1616, 0.0
        %v1745 = vmax.f32 %v1617, 0.0
        %v1746 = vmax.f32 %v1618, 0.0
        %v1747 = vmax.f32 %v1619, 0.0
        %v1748 = vmax.f32 %v1620, 0.0
        %v1749 = vmax.f32 %v1621, 0.0
        %v1750 = vmax.f32 %v1622, 0.0
        %v1751 = vmax.f32 %v1623, 0.0
        %v1752 = vmax.f32 %v1624, 0.0
        %v1753 = vmax.f32 %v1625, 0.0
        %v1754 = vmax.f32 %v1626, 0.0
        %v1755 = vmax.f32 %v1627, 0.0
        %v1756 = vmax.f32 %v1628, 0.0
        %v1757 = vmax.f32 %v1629, 0.0
        %v1758 = vmax.f32 %v1630, 0.0
        %v1759 = vmax.f32 %v1631, 0.0
        %v1760 = vmax.f32 %v1632, 0.0
        %v1761 = vmax.f32 %v1633, 0.0
        %v1762 = vmax.f32 %v1634, 0.0
        %v1763 = vmax.f32 %v1635, 0.0
        %v1764 = vmax.f32 %v1636, 0.0
        %v1765 = vmax.f32 %v1637, 0.0
        %v1766 = vmax.f32 %v1638, 0.0
        %v1767 = vmax.f32 %v1639, 0.0
        %v1768 = vmax.f32 %v1640, 0.0
        %v1769 = vmax.f32 %v1641, 0.0
        %v1770 = vmax.f32 %v1642, 0.0
        %v1771 = vmax.f32 %v1643, 0.0
        %v1772 = vmax.f32 %v1644, 0.0
        %v1773 = vmax.f32 %v1645, 0.0
        %v1774 = vmax.f32 %v1646, 0.0
        %v1775 = vmax.f32 %v1647, 0.0
        %v1776 = vmax.f32 %v1648, 0.0
        %v1777 = vmax.f32 %v1649, 0.0
        %v1778 = vmax.f32 %v1650, 0.0
        %v1779 = vmax.f32 %v1651, 0.0
        %v1780 = vmax.f32 %v1652, 0.0
        %v1781 = vmax.f32 %v1653, 0.0
        %v1782 = vmax.f32 %v1654, 0.0
        %v1783 = vmax.f32 %v1655, 0.0
        %v1784 = vmax.f32 %v1656, 0.0
        %v1785 = vmax.f32 %v1657, 0.0
        %v1786 = vmax.f32 %v1658, 0.0
        %v1787 = vmax.f32 %v1659, 0.0
        %v1788 = vmax.f32 %v1660, 0.0
        %v1789 = vmax.f32 %v1661, 0.0
        %v1790 = vmax.f32 %v1662, 0.0
        %v1791 = vmax.f32 %v1663, 0.0
        %v1792 = vmax.f32 %v1664, 0.0
        %v1793 = vmax.f32 %v1665, 0.0
        %v1794 = vmax.f32 %v1666, 0.0
        %v1795 = vmax.f32 %v1667, 0.0
        %v1796 = vmax.f32 %v1668, 0.0
        %v1797 = vmax.f32 %v1669, 0.0
        %v1798 = vmax.f32 %v1670, 0.0
        %v1799 = vmax.f32 %v1671, 0.0
        %v1800 = vmax.f32 %v1672, 0.0
        %v1801 = vmax.f32 %v1673, 0.0
        %v1802 = vmax.f32 %v1674, 0.0
        %v1803 = vmax.f32 %v1675, 0.0
        %v1804 = vmax.f32 %v1676, 0.0
        %v1805 = vmax.f32 %v1677, 0.0
        %v1806 = vmax.f32 %v1678, 0.0
        %v1807 = vmax.f32 %v1679, 0.0
        %v1808 = vmax.f32 %v1680, 0.0
        %v1809 = vmax.f32 %v1681, 0.0
        %v1810 = vmax.f32 %v1682, 0.0
        %v1811 = vmax.f32 %v1683, 0.0
        %v1812 = vmax.f32 %v1684, 0.0
        %v1813 = vmax.f32 %v1685, 0.0
        %v1814 = vmax.f32 %v1686, 0.0
        %v1815 = vmax.f32 %v1687, 0.0
        %v1816 = vmax.f32 %v1688, 0.0
        %v1817 = vmax.f32 %v1689, 0.0
        %v1818 = vmax.f32 %v1690, 0.0
        %v1819 = vmax.f32 %v1691, 0.0
        %v1820 = vmax.f32 %v1692, 0.0
        %v1821 = vmax.f32 %v1693, 0.0
        %v1822 = vmax.f32 %v1694, 0.0
        %v1823 = vmax.f32 %v1695, 0.0
        %v1824 = vmax.f32 %v1696, 0.0
        %v1825 = vmax.f32 %v1697, 0.0
        %v1826 = vmax.f32 %v1698, 0.0
        %v1827 = vmax.f32 %v1699, 0.0
        %v1828 = vmax.f32 %v1700, 0.0
        %v1829 = vmax.f32 %v1701, 0.0
        %v1830 = vmax.f32 %v1702, 0.0
        %v1831 = vmax.f32 %v1703, 0.0
        %v1832 = vmax.f32 %v1704, 0.0
        %v1833 = vmax.f32 %v1705, 0.0
        %v1834 = vmax.f32 %v1706, 0.0
        %v1835 = vmax.f32 %v1707, 0.0
        %v1836 = vld [vmem:[#allocation3] sm:$0xff]
        %v1837 = vld [vmem:[#allocation3 + $0x8] sm:$0xff]
        %v1838 = vld [vmem:[#allocation3 + $0x10] sm:$0xff]
        %v1839 = vld [vmem:[#allocation3 + $0x18] sm:$0xff]
        %v1840 = vld [vmem:[#allocation3 + $0x20] sm:$0xff]
        %v1841 = vld [vmem:[#allocation3 + $0x28] sm:$0xff]
        %v1842 = vld [vmem:[#allocation3 + $0x30] sm:$0xff]
        %v1843 = vld [vmem:[#allocation3 + $0x38] sm:$0xff]
        %v1844 = vld [vmem:[#allocation3 + $0x40] sm:$0xff]
        %v1845 = vld [vmem:[#allocation3 + $0x48] sm:$0xff]
        %v1846 = vld [vmem:[#allocation3 + $0x50] sm:$0xff]
        %v1847 = vld [vmem:[#allocation3 + $0x58] sm:$0xff]
        %v1848 = vld [vmem:[#allocation3 + $0x60] sm:$0xff]
        %v1849 = vld [vmem:[#allocation3 + $0x68] sm:$0xff]
        %v1850 = vld [vmem:[#allocation3 + $0x70] sm:$0xff]
        %v1851 = vld [vmem:[#allocation3 + $0x78] sm:$0xff]
        %v1852 = vld [vmem:[#allocation3 + $0x80] sm:$0xff]
        %v1853 = vld [vmem:[#allocation3 + $0x88] sm:$0xff]
        %v1854 = vld [vmem:[#allocation3 + $0x90] sm:$0xff]
        %v1855 = vld [vmem:[#allocation3 + $0x98] sm:$0xff]
        %v1856 = vld [vmem:[#allocation3 + $0xa0] sm:$0xff]
        %v1857 = vld [vmem:[#allocation3 + $0xa8] sm:$0xff]
        %v1858 = vld [vmem:[#allocation3 + $0xb0] sm:$0xff]
        %v1859 = vld [vmem:[#allocation3 + $0xb8] sm:$0xff]
        %v1860 = vld [vmem:[#allocation3 + $0xc0] sm:$0xff]
        %v1861 = vld [vmem:[#allocation3 + $0xc8] sm:$0xff]
        %v1862 = vld [vmem:[#allocation3 + $0xd0] sm:$0xff]
        %v1863 = vld [vmem:[#allocation3 + $0xd8] sm:$0xff]
        %v1864 = vld [vmem:[#allocation3 + $0xe0] sm:$0xff]
        %v1865 = vld [vmem:[#allocation3 + $0xe8] sm:$0xff]
        %v1866 = vld [vmem:[#allocation3 + $0xf0] sm:$0xff]
        %v1867 = vld [vmem:[#allocation3 + $0xf8] sm:$0xff]
        %v1868 = vld [vmem:[#allocation3 + $0x100] sm:$0xff]
        %v1869 = vld [vmem:[#allocation3 + $0x108] sm:$0xff]
        %v1870 = vld [vmem:[#allocation3 + $0x110] sm:$0xff]
        %v1871 = vld [vmem:[#allocation3 + $0x118] sm:$0xff]
        %v1872 = vld [vmem:[#allocation3 + $0x120] sm:$0xff]
        %v1873 = vld [vmem:[#allocation3 + $0x128] sm:$0xff]
        %v1874 = vld [vmem:[#allocation3 + $0x130] sm:$0xff]
        %v1875 = vld [vmem:[#allocation3 + $0x138] sm:$0xff]
        %v1876 = vld [vmem:[#allocation3 + $0x140] sm:$0xff]
        %v1877 = vld [vmem:[#allocation3 + $0x148] sm:$0xff]
        %v1878 = vld [vmem:[#allocation3 + $0x150] sm:$0xff]
        %v1879 = vld [vmem:[#allocation3 + $0x158] sm:$0xff]
        %v1880 = vld [vmem:[#allocation3 + $0x160] sm:$0xff]
        %v1881 = vld [vmem:[#allocation3 + $0x168] sm:$0xff]
        %v1882 = vld [vmem:[#allocation3 + $0x170] sm:$0xff]
        %v1883 = vld [vmem:[#allocation3 + $0x178] sm:$0xff]
        %v1884 = vld [vmem:[#allocation3 + $0x180] sm:$0xff]
        %v1885 = vld [vmem:[#allocation3 + $0x188] sm:$0xff]
        %v1886 = vld [vmem:[#allocation3 + $0x190] sm:$0xff]
        %v1887 = vld [vmem:[#allocation3 + $0x198] sm:$0xff]
        %v1888 = vld [vmem:[#allocation3 + $0x1a0] sm:$0xff]
        %v1889 = vld [vmem:[#allocation3 + $0x1a8] sm:$0xff]
        %v1890 = vld [vmem:[#allocation3 + $0x1b0] sm:$0xff]
        %v1891 = vld [vmem:[#allocation3 + $0x1b8] sm:$0xff]
        %v1892 = vld [vmem:[#allocation3 + $0x1c0] sm:$0xff]
        %v1893 = vld [vmem:[#allocation3 + $0x1c8] sm:$0xff]
        %v1894 = vld [vmem:[#allocation3 + $0x1d0] sm:$0xff]
        %v1895 = vld [vmem:[#allocation3 + $0x1d8] sm:$0xff]
        %v1896 = vld [vmem:[#allocation3 + $0x1e0] sm:$0xff]
        %v1897 = vld [vmem:[#allocation3 + $0x1e8] sm:$0xff]
        %v1898 = vld [vmem:[#allocation3 + $0x1f0] sm:$0xff]
        %v1899 = vld [vmem:[#allocation3 + $0x1f8] sm:$0xff]
        %v1900 = vld [vmem:[#allocation3 + $0x200] sm:$0xff]
        %v1901 = vld [vmem:[#allocation3 + $0x208] sm:$0xff]
        %v1902 = vld [vmem:[#allocation3 + $0x210] sm:$0xff]
        %v1903 = vld [vmem:[#allocation3 + $0x218] sm:$0xff]
        %v1904 = vld [vmem:[#allocation3 + $0x220] sm:$0xff]
        %v1905 = vld [vmem:[#allocation3 + $0x228] sm:$0xff]
        %v1906 = vld [vmem:[#allocation3 + $0x230] sm:$0xff]
        %v1907 = vld [vmem:[#allocation3 + $0x238] sm:$0xff]
        %v1908 = vld [vmem:[#allocation3 + $0x240] sm:$0xff]
        %v1909 = vld [vmem:[#allocation3 + $0x248] sm:$0xff]
        %v1910 = vld [vmem:[#allocation3 + $0x250] sm:$0xff]
        %v1911 = vld [vmem:[#allocation3 + $0x258] sm:$0xff]
        %v1912 = vld [vmem:[#allocation3 + $0x260] sm:$0xff]
        %v1913 = vld [vmem:[#allocation3 + $0x268] sm:$0xff]
        %v1914 = vld [vmem:[#allocation3 + $0x270] sm:$0xff]
        %v1915 = vld [vmem:[#allocation3 + $0x278] sm:$0xff]
        %v1916 = vld [vmem:[#allocation3 + $0x280] sm:$0xff]
        %v1917 = vld [vmem:[#allocation3 + $0x288] sm:$0xff]
        %v1918 = vld [vmem:[#allocation3 + $0x290] sm:$0xff]
        %v1919 = vld [vmem:[#allocation3 + $0x298] sm:$0xff]
        %v1920 = vld [vmem:[#allocation3 + $0x2a0] sm:$0xff]
        %v1921 = vld [vmem:[#allocation3 + $0x2a8] sm:$0xff]
        %v1922 = vld [vmem:[#allocation3 + $0x2b0] sm:$0xff]
        %v1923 = vld [vmem:[#allocation3 + $0x2b8] sm:$0xff]
        %v1924 = vld [vmem:[#allocation3 + $0x2c0] sm:$0xff]
        %v1925 = vld [vmem:[#allocation3 + $0x2c8] sm:$0xff]
        %v1926 = vld [vmem:[#allocation3 + $0x2d0] sm:$0xff]
        %v1927 = vld [vmem:[#allocation3 + $0x2d8] sm:$0xff]
        %v1928 = vld [vmem:[#allocation3 + $0x2e0] sm:$0xff]
        %v1929 = vld [vmem:[#allocation3 + $0x2e8] sm:$0xff]
        %v1930 = vld [vmem:[#allocation3 + $0x2f0] sm:$0xff]
        %v1931 = vld [vmem:[#allocation3 + $0x2f8] sm:$0xff]
        %v1932 = vld [vmem:[#allocation3 + $0x300] sm:$0xff]
        %v1933 = vld [vmem:[#allocation3 + $0x308] sm:$0xff]
        %v1934 = vld [vmem:[#allocation3 + $0x310] sm:$0xff]
        %v1935 = vld [vmem:[#allocation3 + $0x318] sm:$0xff]
        %v1936 = vld [vmem:[#allocation3 + $0x320] sm:$0xff]
        %v1937 = vld [vmem:[#allocation3 + $0x328] sm:$0xff]
        %v1938 = vld [vmem:[#allocation3 + $0x330] sm:$0xff]
        %v1939 = vld [vmem:[#allocation3 + $0x338] sm:$0xff]
        %v1940 = vld [vmem:[#allocation3 + $0x340] sm:$0xff]
        %v1941 = vld [vmem:[#allocation3 + $0x348] sm:$0xff]
        %v1942 = vld [vmem:[#allocation3 + $0x350] sm:$0xff]
        %v1943 = vld [vmem:[#allocation3 + $0x358] sm:$0xff]
        %v1944 = vld [vmem:[#allocation3 + $0x360] sm:$0xff]
        %v1945 = vld [vmem:[#allocation3 + $0x368] sm:$0xff]
        %v1946 = vld [vmem:[#allocation3 + $0x370] sm:$0xff]
        %v1947 = vld [vmem:[#allocation3 + $0x378] sm:$0xff]
        %v1948 = vld [vmem:[#allocation3 + $0x380] sm:$0xff]
        %v1949 = vld [vmem:[#allocation3 + $0x388] sm:$0xff]
        %v1950 = vld [vmem:[#allocation3 + $0x390] sm:$0xff]
        %v1951 = vld [vmem:[#allocation3 + $0x398] sm:$0xff]
        %v1952 = vld [vmem:[#allocation3 + $0x3a0] sm:$0xff]
        %v1953 = vld [vmem:[#allocation3 + $0x3a8] sm:$0xff]
        %v1954 = vld [vmem:[#allocation3 + $0x3b0] sm:$0xff]
        %v1955 = vld [vmem:[#allocation3 + $0x3b8] sm:$0xff]
        %v1956 = vld [vmem:[#allocation3 + $0x3c0] sm:$0xff]
        %v1957 = vld [vmem:[#allocation3 + $0x3c8] sm:$0xff]
        %v1958 = vld [vmem:[#allocation3 + $0x3d0] sm:$0xff]
        %v1959 = vld [vmem:[#allocation3 + $0x3d8] sm:$0xff]
        %v1960 = vld [vmem:[#allocation3 + $0x3e0] sm:$0xff]
        %v1961 = vld [vmem:[#allocation3 + $0x3e8] sm:$0xff]
        %v1962 = vld [vmem:[#allocation3 + $0x3f0] sm:$0xff]
        %v1963 = vld [vmem:[#allocation3 + $0x3f8] sm:$0xff]
        %v1964 = vld [vmem:[#allocation3 + $0x400] sm:$0xff]
        %v1965 = vld [vmem:[#allocation3 + $0x408] sm:$0xff]
        %v1966 = vld [vmem:[#allocation3 + $0x410] sm:$0xff]
        %v1967 = vld [vmem:[#allocation3 + $0x418] sm:$0xff]
        %v1968 = vld [vmem:[#allocation3 + $0x420] sm:$0xff]
        %v1969 = vld [vmem:[#allocation3 + $0x428] sm:$0xff]
        %v1970 = vld [vmem:[#allocation3 + $0x430] sm:$0xff]
        %v1971 = vld [vmem:[#allocation3 + $0x438] sm:$0xff]
        %v1972 = vld [vmem:[#allocation3 + $0x440] sm:$0xff]
        %v1973 = vld [vmem:[#allocation3 + $0x448] sm:$0xff]
        %v1974 = vld [vmem:[#allocation3 + $0x450] sm:$0xff]
        %v1975 = vld [vmem:[#allocation3 + $0x458] sm:$0xff]
        %v1976 = vld [vmem:[#allocation3 + $0x460] sm:$0xff]
        %v1977 = vld [vmem:[#allocation3 + $0x468] sm:$0xff]
        %v1978 = vld [vmem:[#allocation3 + $0x470] sm:$0xff]
        %v1979 = vld [vmem:[#allocation3 + $0x478] sm:$0xff]
        %v1980 = vld [vmem:[#allocation3 + $0x480] sm:$0xff]
        %v1981 = vld [vmem:[#allocation3 + $0x488] sm:$0xff]
        %v1982 = vld [vmem:[#allocation3 + $0x490] sm:$0xff]
        %v1983 = vld [vmem:[#allocation3 + $0x498] sm:$0xff]
        %v1984 = vld [vmem:[#allocation3 + $0x4a0] sm:$0xff]
        %v1985 = vld [vmem:[#allocation3 + $0x4a8] sm:$0xff]
        %v1986 = vld [vmem:[%s6] sm:$0x7]
        %v1988 = vperm.slane %v1986, 0
        %v1989 = vperm.slane %v1986, 1
        %v1990 = vperm.slane %v1986, 2
        %vm1994 = vcmask 130048
        %v1996 = vsel %vm1994, %v1711, 0
        %v1999 = vsel %vm1994, %v1715, 0
        %v2002 = vsel %vm1994, %v1719, 0
        %v2005 = vsel %vm1994, %v1723, 0
        %v2008 = vsel %vm1994, %v1727, 0
        %v2011 = vsel %vm1994, %v1731, 0
        %v2014 = vsel %vm1994, %v1735, 0
        %v2017 = vsel %vm1994, %v1739, 0
        %v2020 = vsel %vm1994, %v1743, 0
        %v2023 = vsel %vm1994, %v1747, 0
        %v2026 = vsel %vm1994, %v1751, 0
        %v2029 = vsel %vm1994, %v1755, 0
        %v2032 = vsel %vm1994, %v1759, 0
        %v2035 = vsel %vm1994, %v1763, 0
        %v2038 = vsel %vm1994, %v1767, 0
        %v2041 = vsel %vm1994, %v1771, 0
        %v2044 = vsel %vm1994, %v1775, 0
        %v2047 = vsel %vm1994, %v1779, 0
        %v2050 = vsel %vm1994, %v1783, 0
        %v2053 = vsel %vm1994, %v1787, 0
        %v2056 = vsel %vm1994, %v1791, 0
        %v2059 = vsel %vm1994, %v1795, 0
        %v2062 = vsel %vm1994, %v1799, 0
        %v2065 = vsel %vm1994, %v1803, 0
        %v2068 = vsel %vm1994, %v1807, 0
        %v2071 = vsel %vm1994, %v1811, 0
        %v2074 = vsel %vm1994, %v1815, 0
        %v2077 = vsel %vm1994, %v1819, 0
        %v2080 = vsel %vm1994, %v1823, 0
        %v2083 = vsel %vm1994, %v1827, 0
        %v2086 = vsel %vm1994, %v1831, 0
        %v2089 = vsel %vm1994, %v1835, 0
        %2091 = vmatpush.msra.mxu0 %v1881
        %2092 = vmatpush.msra.mxu0 %v1878
        %2093 = vmatpush.msra.mxu0 %v1875
        %2094 = vmatpush.msra.mxu0 %v1872
        %2095 = vmatpush.msra.mxu0 %v1869
        %2096 = vmatpush.msra.mxu0 %v1866
        %2097 = vmatpush.msra.mxu0 %v1863
        %2098 = vmatpush.msra.mxu0 %v1860
        %2099 = vmatpush.msra.mxu0 %v1857
        %2100 = vmatpush.msra.mxu0 %v1854
        %2101 = vmatpush.msra.mxu0 %v1851
        %2102 = vmatpush.msra.mxu0 %v1848
        %2103 = vmatpush.msra.mxu0 %v1845
        %2104 = vmatpush.msra.mxu0 %v1842
        %2105 = vmatpush.msra.mxu0 %v1839
        %2106 = vmatpush.msra.mxu0 %v1836
        %2107 = vmatmul.f32.gmra.mxu0 %v1708
        %v2108 = vpop.f32.mrf.mxu0
        %v2109 = vadd.f32 %v1988, %v2108
        %2110 = vmatmul.f32.gmra.mxu0 %v1712
        %v2111 = vpop.f32.mrf.mxu0
        %v2112 = vadd.f32 %v1988, %v2111
        %2113 = vmatmul.f32.gmra.mxu0 %v1716
        %v2114 = vpop.f32.mrf.mxu0
        %v2115 = vadd.f32 %v1988, %v2114
        %2116 = vmatmul.f32.gmra.mxu0 %v1720
        %v2117 = vpop.f32.mrf.mxu0
        %v2118 = vadd.f32 %v1988, %v2117
        %2119 = vmatmul.f32.gmra.mxu0 %v1724
        %v2120 = vpop.f32.mrf.mxu0
        %v2121 = vadd.f32 %v1988, %v2120
        %2122 = vmatmul.f32.gmra.mxu0 %v1728
        %v2123 = vpop.f32.mrf.mxu0
        %v2124 = vadd.f32 %v1988, %v2123
        %2125 = vmatmul.f32.gmra.mxu0 %v1732
        %v2126 = vpop.f32.mrf.mxu0
        %v2127 = vadd.f32 %v1988, %v2126
        %2128 = vmatmul.f32.gmra.mxu0 %v1736
        %v2129 = vpop.f32.mrf.mxu0
        %v2130 = vadd.f32 %v1988, %v2129
        %2131 = vmatmul.f32.gmra.mxu0 %v1740
        %v2132 = vpop.f32.mrf.mxu0
        %v2133 = vadd.f32 %v1988, %v2132
        %2134 = vmatmul.f32.gmra.mxu0 %v1744
        %v2135 = vpop.f32.mrf.mxu0
        %v2136 = vadd.f32 %v1988, %v2135
        %2137 = vmatmul.f32.gmra.mxu0 %v1748
        %v2138 = vpop.f32.mrf.mxu0
        %v2139 = vadd.f32 %v1988, %v2138
        %2140 = vmatmul.f32.gmra.mxu0 %v1752
        %v2141 = vpop.f32.mrf.mxu0
        %v2142 = vadd.f32 %v1988, %v2141
        %2143 = vmatmul.f32.gmra.mxu0 %v1756
        %v2144 = vpop.f32.mrf.mxu0
        %v2145 = vadd.f32 %v1988, %v2144
        %2146 = vmatmul.f32.gmra.mxu0 %v1760
        %v2147 = vpop.f32.mrf.mxu0
        %v2148 = vadd.f32 %v1988, %v2147
        %2149 = vmatmul.f32.gmra.mxu0 %v1764
        %v2150 = vpop.f32.mrf.mxu0
        %v2151 = vadd.f32 %v1988, %v2150
        %2152 = vmatmul.f32.gmra.mxu0 %v1768
        %v2153 = vpop.f32.mrf.mxu0
        %v2154 = vadd.f32 %v1988, %v2153
        %2155 = vmatmul.f32.gmra.mxu0 %v1772
        %v2156 = vpop.f32.mrf.mxu0
        %v2157 = vadd.f32 %v1988, %v2156
        %2158 = vmatmul.f32.gmra.mxu0 %v1776
        %v2159 = vpop.f32.mrf.mxu0
        %v2160 = vadd.f32 %v1988, %v2159
        %2161 = vmatmul.f32.gmra.mxu0 %v1780
        %v2162 = vpop.f32.mrf.mxu0
        %v2163 = vadd.f32 %v1988, %v2162
        %2164 = vmatmul.f32.gmra.mxu0 %v1784
        %v2165 = vpop.f32.mrf.mxu0
        %v2166 = vadd.f32 %v1988, %v2165
        %2167 = vmatmul.f32.gmra.mxu0 %v1788
        %v2168 = vpop.f32.mrf.mxu0
        %v2169 = vadd.f32 %v1988, %v2168
        %2170 = vmatmul.f32.gmra.mxu0 %v1792
        %v2171 = vpop.f32.mrf.mxu0
        %v2172 = vadd.f32 %v1988, %v2171
        %2173 = vmatmul.f32.gmra.mxu0 %v1796
        %v2174 = vpop.f32.mrf.mxu0
        %v2175 = vadd.f32 %v1988, %v2174
        %2176 = vmatmul.f32.gmra.mxu0 %v1800
        %v2177 = vpop.f32.mrf.mxu0
        %v2178 = vadd.f32 %v1988, %v2177
        %2179 = vmatmul.f32.gmra.mxu0 %v1804
        %v2180 = vpop.f32.mrf.mxu0
        %v2181 = vadd.f32 %v1988, %v2180
        %2182 = vmatmul.f32.gmra.mxu0 %v1808
        %v2183 = vpop.f32.mrf.mxu0
        %v2184 = vadd.f32 %v1988, %v2183
        %2185 = vmatmul.f32.gmra.mxu0 %v1812
        %v2186 = vpop.f32.mrf.mxu0
        %v2187 = vadd.f32 %v1988, %v2186
        %2188 = vmatmul.f32.gmra.mxu0 %v1816
        %v2189 = vpop.f32.mrf.mxu0
        %v2190 = vadd.f32 %v1988, %v2189
        %2191 = vmatmul.f32.gmra.mxu0 %v1820
        %v2192 = vpop.f32.mrf.mxu0
        %v2193 = vadd.f32 %v1988, %v2192
        %2194 = vmatmul.f32.gmra.mxu0 %v1824
        %v2195 = vpop.f32.mrf.mxu0
        %v2196 = vadd.f32 %v1988, %v2195
        %2197 = vmatmul.f32.gmra.mxu0 %v1828
        %v2198 = vpop.f32.mrf.mxu0
        %v2199 = vadd.f32 %v1988, %v2198
        %2200 = vmatmul.f32.gmra.mxu0 %v1832
        %v2201 = vpop.f32.mrf.mxu0
        %v2202 = vadd.f32 %v1988, %v2201
        %2203 = vdwg.mxu0
        %2204 = vmatpush.msra.mxu0 %v1929
        %2205 = vmatpush.msra.mxu0 %v1926
        %2206 = vmatpush.msra.mxu0 %v1923
        %2207 = vmatpush.msra.mxu0 %v1920
        %2208 = vmatpush.msra.mxu0 %v1917
        %2209 = vmatpush.msra.mxu0 %v1914
        %2210 = vmatpush.msra.mxu0 %v1911
        %2211 = vmatpush.msra.mxu0 %v1908
        %2212 = vmatpush.msra.mxu0 %v1905
        %2213 = vmatpush.msra.mxu0 %v1902
        %2214 = vmatpush.msra.mxu0 %v1899
        %2215 = vmatpush.msra.mxu0 %v1896
        %2216 = vmatpush.msra.mxu0 %v1893
        %2217 = vmatpush.msra.mxu0 %v1890
        %2218 = vmatpush.msra.mxu0 %v1887
        %2219 = vmatpush.msra.mxu0 %v1884
        %2220 = vmatmul.f32.gmra.mxu0 %v1709
        %v2221 = vpop.f32.mrf.mxu0
        %v2222 = vadd.f32 %v2109, %v2221
        %2223 = vmatmul.f32.gmra.mxu0 %v1713
        %v2224 = vpop.f32.mrf.mxu0
        %v2225 = vadd.f32 %v2112, %v2224
        %2226 = vmatmul.f32.gmra.mxu0 %v1717
        %v2227 = vpop.f32.mrf.mxu0
        %v2228 = vadd.f32 %v2115, %v2227
        %2229 = vmatmul.f32.gmra.mxu0 %v1721
        %v2230 = vpop.f32.mrf.mxu0
        %v2231 = vadd.f32 %v2118, %v2230
        %2232 = vmatmul.f32.gmra.mxu0 %v1725
        %v2233 = vpop.f32.mrf.mxu0
        %v2234 = vadd.f32 %v2121, %v2233
        %2235 = vmatmul.f32.gmra.mxu0 %v1729
        %v2236 = vpop.f32.mrf.mxu0
        %v2237 = vadd.f32 %v2124, %v2236
        %2238 = vmatmul.f32.gmra.mxu0 %v1733
        %v2239 = vpop.f32.mrf.mxu0
        %v2240 = vadd.f32 %v2127, %v2239
        %2241 = vmatmul.f32.gmra.mxu0 %v1737
        %v2242 = vpop.f32.mrf.mxu0
        %v2243 = vadd.f32 %v2130, %v2242
        %2244 = vmatmul.f32.gmra.mxu0 %v1741
        %v2245 = vpop.f32.mrf.mxu0
        %v2246 = vadd.f32 %v2133, %v2245
        %2247 = vmatmul.f32.gmra.mxu0 %v1745
        %v2248 = vpop.f32.mrf.mxu0
        %v2249 = vadd.f32 %v2136, %v2248
        %2250 = vmatmul.f32.gmra.mxu0 %v1749
        %v2251 = vpop.f32.mrf.mxu0
        %v2252 = vadd.f32 %v2139, %v2251
        %2253 = vmatmul.f32.gmra.mxu0 %v1753
        %v2254 = vpop.f32.mrf.mxu0
        %v2255 = vadd.f32 %v2142, %v2254
        %2256 = vmatmul.f32.gmra.mxu0 %v1757
        %v2257 = vpop.f32.mrf.mxu0
        %v2258 = vadd.f32 %v2145, %v2257
        %2259 = vmatmul.f32.gmra.mxu0 %v1761
        %v2260 = vpop.f32.mrf.mxu0
        %v2261 = vadd.f32 %v2148, %v2260
        %2262 = vmatmul.f32.gmra.mxu0 %v1765
        %v2263 = vpop.f32.mrf.mxu0
        %v2264 = vadd.f32 %v2151, %v2263
        %2265 = vmatmul.f32.gmra.mxu0 %v1769
        %v2266 = vpop.f32.mrf.mxu0
        %v2267 = vadd.f32 %v2154, %v2266
        %2268 = vmatmul.f32.gmra.mxu0 %v1773
        %v2269 = vpop.f32.mrf.mxu0
        %v2270 = vadd.f32 %v2157, %v2269
        %2271 = vmatmul.f32.gmra.mxu0 %v1777
        %v2272 = vpop.f32.mrf.mxu0
        %v2273 = vadd.f32 %v2160, %v2272
        %2274 = vmatmul.f32.gmra.mxu0 %v1781
        %v2275 = vpop.f32.mrf.mxu0
        %v2276 = vadd.f32 %v2163, %v2275
        %2277 = vmatmul.f32.gmra.mxu0 %v1785
        %v2278 = vpop.f32.mrf.mxu0
        %v2279 = vadd.f32 %v2166, %v2278
        %2280 = vmatmul.f32.gmra.mxu0 %v1789
        %v2281 = vpop.f32.mrf.mxu0
        %v2282 = vadd.f32 %v2169, %v2281
        %2283 = vmatmul.f32.gmra.mxu0 %v1793
        %v2284 = vpop.f32.mrf.mxu0
        %v2285 = vadd.f32 %v2172, %v2284
        %2286 = vmatmul.f32.gmra.mxu0 %v1797
        %v2287 = vpop.f32.mrf.mxu0
        %v2288 = vadd.f32 %v2175, %v2287
        %2289 = vmatmul.f32.gmra.mxu0 %v1801
        %v2290 = vpop.f32.mrf.mxu0
        %v2291 = vadd.f32 %v2178, %v2290
        %2292 = vmatmul.f32.gmra.mxu0 %v1805
        %v2293 = vpop.f32.mrf.mxu0
        %v2294 = vadd.f32 %v2181, %v2293
        %2295 = vmatmul.f32.gmra.mxu0 %v1809
        %v2296 = vpop.f32.mrf.mxu0
        %v2297 = vadd.f32 %v2184, %v2296
        %2298 = vmatmul.f32.gmra.mxu0 %v1813
        %v2299 = vpop.f32.mrf.mxu0
        %v2300 = vadd.f32 %v2187, %v2299
        %2301 = vmatmul.f32.gmra.mxu0 %v1817
        %v2302 = vpop.f32.mrf.mxu0
        %v2303 = vadd.f32 %v2190, %v2302
        %2304 = vmatmul.f32.gmra.mxu0 %v1821
        %v2305 = vpop.f32.mrf.mxu0
        %v2306 = vadd.f32 %v2193, %v2305
        %2307 = vmatmul.f32.gmra.mxu0 %v1825
        %v2308 = vpop.f32.mrf.mxu0
        %v2309 = vadd.f32 %v2196, %v2308
        %2310 = vmatmul.f32.gmra.mxu0 %v1829
        %v2311 = vpop.f32.mrf.mxu0
        %v2312 = vadd.f32 %v2199, %v2311
        %2313 = vmatmul.f32.gmra.mxu0 %v1833
        %v2314 = vpop.f32.mrf.mxu0
        %v2315 = vadd.f32 %v2202, %v2314
        %2316 = vdwg.mxu0
        %2317 = vmatpush.msra.mxu0 %v1977
        %2318 = vmatpush.msra.mxu0 %v1974
        %2319 = vmatpush.msra.mxu0 %v1971
        %2320 = vmatpush.msra.mxu0 %v1968
        %2321 = vmatpush.msra.mxu0 %v1965
        %2322 = vmatpush.msra.mxu0 %v1962
        %2323 = vmatpush.msra.mxu0 %v1959
        %2324 = vmatpush.msra.mxu0 %v1956
        %2325 = vmatpush.msra.mxu0 %v1953
        %2326 = vmatpush.msra.mxu0 %v1950
        %2327 = vmatpush.msra.mxu0 %v1947
        %2328 = vmatpush.msra.mxu0 %v1944
        %2329 = vmatpush.msra.mxu0 %v1941
        %2330 = vmatpush.msra.mxu0 %v1938
        %2331 = vmatpush.msra.mxu0 %v1935
        %2332 = vmatpush.msra.mxu0 %v1932
        %2333 = vmatmul.f32.gmra.mxu0 %v1710
        %v2334 = vpop.f32.mrf.mxu0
        %v2335 = vadd.f32 %v2222, %v2334
        %2336 = vmatmul.f32.gmra.mxu0 %v1714
        %v2337 = vpop.f32.mrf.mxu0
        %v2338 = vadd.f32 %v2225, %v2337
        %2339 = vmatmul.f32.gmra.mxu0 %v1718
        %v2340 = vpop.f32.mrf.mxu0
        %v2341 = vadd.f32 %v2228, %v2340
        %2342 = vmatmul.f32.gmra.mxu0 %v1722
        %v2343 = vpop.f32.mrf.mxu0
        %v2344 = vadd.f32 %v2231, %v2343
        %2345 = vmatmul.f32.gmra.mxu0 %v1726
        %v2346 = vpop.f32.mrf.mxu0
        %v2347 = vadd.f32 %v2234, %v2346
        %2348 = vmatmul.f32.gmra.mxu0 %v1730
        %v2349 = vpop.f32.mrf.mxu0
        %v2350 = vadd.f32 %v2237, %v2349
        %2351 = vmatmul.f32.gmra.mxu0 %v1734
        %v2352 = vpop.f32.mrf.mxu0
        %v2353 = vadd.f32 %v2240, %v2352
        %2354 = vmatmul.f32.gmra.mxu0 %v1738
        %v2355 = vpop.f32.mrf.mxu0
        %v2356 = vadd.f32 %v2243, %v2355
        %2357 = vmatmul.f32.gmra.mxu0 %v1742
        %v2358 = vpop.f32.mrf.mxu0
        %v2359 = vadd.f32 %v2246, %v2358
        %2360 = vmatmul.f32.gmra.mxu0 %v1746
        %v2361 = vpop.f32.mrf.mxu0
        %v2362 = vadd.f32 %v2249, %v2361
        %2363 = vmatmul.f32.gmra.mxu0 %v1750
        %v2364 = vpop.f32.mrf.mxu0
        %v2365 = vadd.f32 %v2252, %v2364
        %2366 = vmatmul.f32.gmra.mxu0 %v1754
        %v2367 = vpop.f32.mrf.mxu0
        %v2368 = vadd.f32 %v2255, %v2367
        %2369 = vmatmul.f32.gmra.mxu0 %v1758
        %v2370 = vpop.f32.mrf.mxu0
        %v2371 = vadd.f32 %v2258, %v2370
        %2372 = vmatmul.f32.gmra.mxu0 %v1762
        %v2373 = vpop.f32.mrf.mxu0
        %v2374 = vadd.f32 %v2261, %v2373
        %2375 = vmatmul.f32.gmra.mxu0 %v1766
        %v2376 = vpop.f32.mrf.mxu0
        %v2377 = vadd.f32 %v2264, %v2376
        %2378 = vmatmul.f32.gmra.mxu0 %v1770
        %v2379 = vpop.f32.mrf.mxu0
        %v2380 = vadd.f32 %v2267, %v2379
        %2381 = vmatmul.f32.gmra.mxu0 %v1774
        %v2382 = vpop.f32.mrf.mxu0
        %v2383 = vadd.f32 %v2270, %v2382
        %2384 = vmatmul.f32.gmra.mxu0 %v1778
        %v2385 = vpop.f32.mrf.mxu0
        %v2386 = vadd.f32 %v2273, %v2385
        %2387 = vmatmul.f32.gmra.mxu0 %v1782
        %v2388 = vpop.f32.mrf.mxu0
        %v2389 = vadd.f32 %v2276, %v2388
        %2390 = vmatmul.f32.gmra.mxu0 %v1786
        %v2391 = vpop.f32.mrf.mxu0
        %v2392 = vadd.f32 %v2279, %v2391
        %2393 = vmatmul.f32.gmra.mxu0 %v1790
        %v2394 = vpop.f32.mrf.mxu0
        %v2395 = vadd.f32 %v2282, %v2394
        %2396 = vmatmul.f32.gmra.mxu0 %v1794
        %v2397 = vpop.f32.mrf.mxu0
        %v2398 = vadd.f32 %v2285, %v2397
        %2399 = vmatmul.f32.gmra.mxu0 %v1798
        %v2400 = vpop.f32.mrf.mxu0
        %v2401 = vadd.f32 %v2288, %v2400
        %2402 = vmatmul.f32.gmra.mxu0 %v1802
        %v2403 = vpop.f32.mrf.mxu0
        %v2404 = vadd.f32 %v2291, %v2403
        %2405 = vmatmul.f32.gmra.mxu0 %v1806
        %v2406 = vpop.f32.mrf.mxu0
        %v2407 = vadd.f32 %v2294, %v2406
        %2408 = vmatmul.f32.gmra.mxu0 %v1810
        %v2409 = vpop.f32.mrf.mxu0
        %v2410 = vadd.f32 %v2297, %v2409
        %2411 = vmatmul.f32.gmra.mxu0 %v1814
        %v2412 = vpop.f32.mrf.mxu0
        %v2413 = vadd.f32 %v2300, %v2412
        %2414 = vmatmul.f32.gmra.mxu0 %v1818
        %v2415 = vpop.f32.mrf.mxu0
        %v2416 = vadd.f32 %v2303, %v2415
        %2417 = vmatmul.f32.gmra.mxu0 %v1822
        %v2418 = vpop.f32.mrf.mxu0
        %v2419 = vadd.f32 %v2306, %v2418
        %2420 = vmatmul.f32.gmra.mxu0 %v1826
        %v2421 = vpop.f32.mrf.mxu0
        %v2422 = vadd.f32 %v2309, %v2421
        %2423 = vmatmul.f32.gmra.mxu0 %v1830
        %v2424 = vpop.f32.mrf.mxu0
        %v2425 = vadd.f32 %v2312, %v2424
        %2426 = vmatmul.f32.gmra.mxu0 %v1834
        %v2427 = vpop.f32.mrf.mxu0
        %v2428 = vadd.f32 %v2315, %v2427
        %2429 = vdwg.mxu0
        %2430 = vmatpush.msra.mxu0 0.0
        %2431 = vmatpush.msra.mxu0 0.0
        %2432 = vmatpush.msra.mxu0 0.0
        %2433 = vmatpush.msra.mxu0 0.0
        %2434 = vmatpush.msra.mxu0 0.0
        %2435 = vmatpush.msra.mxu0 0.0
        %2436 = vmatpush.msra.mxu0 0.0
        %2437 = vmatpush.msra.mxu0 0.0
        %2438 = vmatpush.msra.mxu0 0.0
        %2439 = vmatpush.msra.mxu0 0.0
        %2440 = vmatpush.msra.mxu0 0.0
        %2441 = vmatpush.msra.mxu0 0.0
        %2442 = vmatpush.msra.mxu0 0.0
        %2443 = vmatpush.msra.mxu0 0.0
        %2444 = vmatpush.msra.mxu0 %v1983
        %2445 = vmatpush.msra.mxu0 %v1980
        %2446 = vmatmul.f32.gmra.mxu0 %v1996
        %v2447 = vpop.f32.mrf.mxu0
        %v2448 = vadd.f32 %v2335, %v2447
        %2449 = vmatmul.f32.gmra.mxu0 %v1999
        %v2450 = vpop.f32.mrf.mxu0
        %v2451 = vadd.f32 %v2338, %v2450
        %2452 = vmatmul.f32.gmra.mxu0 %v2002
        %v2453 = vpop.f32.mrf.mxu0
        %v2454 = vadd.f32 %v2341, %v2453
        %2455 = vmatmul.f32.gmra.mxu0 %v2005
        %v2456 = vpop.f32.mrf.mxu0
        %v2457 = vadd.f32 %v2344, %v2456
        %2458 = vmatmul.f32.gmra.mxu0 %v2008
        %v2459 = vpop.f32.mrf.mxu0
        %v2460 = vadd.f32 %v2347, %v2459
        %2461 = vmatmul.f32.gmra.mxu0 %v2011
        %v2462 = vpop.f32.mrf.mxu0
        %v2463 = vadd.f32 %v2350, %v2462
        %2464 = vmatmul.f32.gmra.mxu0 %v2014
        %v2465 = vpop.f32.mrf.mxu0
        %v2466 = vadd.f32 %v2353, %v2465
        %2467 = vmatmul.f32.gmra.mxu0 %v2017
        %v2468 = vpop.f32.mrf.mxu0
        %v2469 = vadd.f32 %v2356, %v2468
        %2470 = vmatmul.f32.gmra.mxu0 %v2020
        %v2471 = vpop.f32.mrf.mxu0
        %v2472 = vadd.f32 %v2359, %v2471
        %2473 = vmatmul.f32.gmra.mxu0 %v2023
        %v2474 = vpop.f32.mrf.mxu0
        %v2475 = vadd.f32 %v2362, %v2474
        %2476 = vmatmul.f32.gmra.mxu0 %v2026
        %v2477 = vpop.f32.mrf.mxu0
        %v2478 = vadd.f32 %v2365, %v2477
        %2479 = vmatmul.f32.gmra.mxu0 %v2029
        %v2480 = vpop.f32.mrf.mxu0
        %v2481 = vadd.f32 %v2368, %v2480
        %2482 = vmatmul.f32.gmra.mxu0 %v2032
        %v2483 = vpop.f32.mrf.mxu0
        %v2484 = vadd.f32 %v2371, %v2483
        %2485 = vmatmul.f32.gmra.mxu0 %v2035
        %v2486 = vpop.f32.mrf.mxu0
        %v2487 = vadd.f32 %v2374, %v2486
        %2488 = vmatmul.f32.gmra.mxu0 %v2038
        %v2489 = vpop.f32.mrf.mxu0
        %v2490 = vadd.f32 %v2377, %v2489
        %2491 = vmatmul.f32.gmra.mxu0 %v2041
        %v2492 = vpop.f32.mrf.mxu0
        %v2493 = vadd.f32 %v2380, %v2492
        %2494 = vmatmul.f32.gmra.mxu0 %v2044
        %v2495 = vpop.f32.mrf.mxu0
        %v2496 = vadd.f32 %v2383, %v2495
        %2497 = vmatmul.f32.gmra.mxu0 %v2047
        %v2498 = vpop.f32.mrf.mxu0
        %v2499 = vadd.f32 %v2386, %v2498
        %2500 = vmatmul.f32.gmra.mxu0 %v2050
        %v2501 = vpop.f32.mrf.mxu0
        %v2502 = vadd.f32 %v2389, %v2501
        %2503 = vmatmul.f32.gmra.mxu0 %v2053
        %v2504 = vpop.f32.mrf.mxu0
        %v2505 = vadd.f32 %v2392, %v2504
        %2506 = vmatmul.f32.gmra.mxu0 %v2056
        %v2507 = vpop.f32.mrf.mxu0
        %v2508 = vadd.f32 %v2395, %v2507
        %2509 = vmatmul.f32.gmra.mxu0 %v2059
        %v2510 = vpop.f32.mrf.mxu0
        %v2511 = vadd.f32 %v2398, %v2510
        %2512 = vmatmul.f32.gmra.mxu0 %v2062
        %v2513 = vpop.f32.mrf.mxu0
        %v2514 = vadd.f32 %v2401, %v2513
        %2515 = vmatmul.f32.gmra.mxu0 %v2065
        %v2516 = vpop.f32.mrf.mxu0
        %v2517 = vadd.f32 %v2404, %v2516
        %2518 = vmatmul.f32.gmra.mxu0 %v2068
        %v2519 = vpop.f32.mrf.mxu0
        %v2520 = vadd.f32 %v2407, %v2519
        %2521 = vmatmul.f32.gmra.mxu0 %v2071
        %v2522 = vpop.f32.mrf.mxu0
        %v2523 = vadd.f32 %v2410, %v2522
        %2524 = vmatmul.f32.gmra.mxu0 %v2074
        %v2525 = vpop.f32.mrf.mxu0
        %v2526 = vadd.f32 %v2413, %v2525
        %2527 = vmatmul.f32.gmra.mxu0 %v2077
        %v2528 = vpop.f32.mrf.mxu0
        %v2529 = vadd.f32 %v2416, %v2528
        %2530 = vmatmul.f32.gmra.mxu0 %v2080
        %v2531 = vpop.f32.mrf.mxu0
        %v2532 = vadd.f32 %v2419, %v2531
        %2533 = vmatmul.f32.gmra.mxu0 %v2083
        %v2534 = vpop.f32.mrf.mxu0
        %v2535 = vadd.f32 %v2422, %v2534
        %2536 = vmatmul.f32.gmra.mxu0 %v2086
        %v2537 = vpop.f32.mrf.mxu0
        %v2538 = vadd.f32 %v2425, %v2537
        %2539 = vmatmul.f32.gmra.mxu0 %v2089
        %v2540 = vpop.f32.mrf.mxu0
        %v2541 = vadd.f32 %v2428, %v2540
        %2542 = vdwg.mxu0
        %2543 = vmatpush.msra.mxu0 %v1882
        %2544 = vmatpush.msra.mxu0 %v1879
        %2545 = vmatpush.msra.mxu0 %v1876
        %2546 = vmatpush.msra.mxu0 %v1873
        %2547 = vmatpush.msra.mxu0 %v1870
        %2548 = vmatpush.msra.mxu0 %v1867
        %2549 = vmatpush.msra.mxu0 %v1864
        %2550 = vmatpush.msra.mxu0 %v1861
        %2551 = vmatpush.msra.mxu0 %v1858
        %2552 = vmatpush.msra.mxu0 %v1855
        %2553 = vmatpush.msra.mxu0 %v1852
        %2554 = vmatpush.msra.mxu0 %v1849
        %2555 = vmatpush.msra.mxu0 %v1846
        %2556 = vmatpush.msra.mxu0 %v1843
        %2557 = vmatpush.msra.mxu0 %v1840
        %2558 = vmatpush.msra.mxu0 %v1837
        %2559 = vmatmul.f32.gmra.mxu0 %v1708
        %v2560 = vpop.f32.mrf.mxu0
        %v2561 = vadd.f32 %v1989, %v2560
        %2562 = vmatmul.f32.gmra.mxu0 %v1712
        %v2563 = vpop.f32.mrf.mxu0
        %v2564 = vadd.f32 %v1989, %v2563
        %2565 = vmatmul.f32.gmra.mxu0 %v1716
        %v2566 = vpop.f32.mrf.mxu0
        %v2567 = vadd.f32 %v1989, %v2566
        %2568 = vmatmul.f32.gmra.mxu0 %v1720
        %v2569 = vpop.f32.mrf.mxu0
        %v2570 = vadd.f32 %v1989, %v2569
        %2571 = vmatmul.f32.gmra.mxu0 %v1724
        %v2572 = vpop.f32.mrf.mxu0
        %v2573 = vadd.f32 %v1989, %v2572
        %2574 = vmatmul.f32.gmra.mxu0 %v1728
        %v2575 = vpop.f32.mrf.mxu0
        %v2576 = vadd.f32 %v1989, %v2575
        %2577 = vmatmul.f32.gmra.mxu0 %v1732
        %v2578 = vpop.f32.mrf.mxu0
        %v2579 = vadd.f32 %v1989, %v2578
        %2580 = vmatmul.f32.gmra.mxu0 %v1736
        %v2581 = vpop.f32.mrf.mxu0
        %v2582 = vadd.f32 %v1989, %v2581
        %2583 = vmatmul.f32.gmra.mxu0 %v1740
        %v2584 = vpop.f32.mrf.mxu0
        %v2585 = vadd.f32 %v1989, %v2584
        %2586 = vmatmul.f32.gmra.mxu0 %v1744
        %v2587 = vpop.f32.mrf.mxu0
        %v2588 = vadd.f32 %v1989, %v2587
        %2589 = vmatmul.f32.gmra.mxu0 %v1748
        %v2590 = vpop.f32.mrf.mxu0
        %v2591 = vadd.f32 %v1989, %v2590
        %2592 = vmatmul.f32.gmra.mxu0 %v1752
        %v2593 = vpop.f32.mrf.mxu0
        %v2594 = vadd.f32 %v1989, %v2593
        %2595 = vmatmul.f32.gmra.mxu0 %v1756
        %v2596 = vpop.f32.mrf.mxu0
        %v2597 = vadd.f32 %v1989, %v2596
        %2598 = vmatmul.f32.gmra.mxu0 %v1760
        %v2599 = vpop.f32.mrf.mxu0
        %v2600 = vadd.f32 %v1989, %v2599
        %2601 = vmatmul.f32.gmra.mxu0 %v1764
        %v2602 = vpop.f32.mrf.mxu0
        %v2603 = vadd.f32 %v1989, %v2602
        %2604 = vmatmul.f32.gmra.mxu0 %v1768
        %v2605 = vpop.f32.mrf.mxu0
        %v2606 = vadd.f32 %v1989, %v2605
        %2607 = vmatmul.f32.gmra.mxu0 %v1772
        %v2608 = vpop.f32.mrf.mxu0
        %v2609 = vadd.f32 %v1989, %v2608
        %2610 = vmatmul.f32.gmra.mxu0 %v1776
        %v2611 = vpop.f32.mrf.mxu0
        %v2612 = vadd.f32 %v1989, %v2611
        %2613 = vmatmul.f32.gmra.mxu0 %v1780
        %v2614 = vpop.f32.mrf.mxu0
        %v2615 = vadd.f32 %v1989, %v2614
        %2616 = vmatmul.f32.gmra.mxu0 %v1784
        %v2617 = vpop.f32.mrf.mxu0
        %v2618 = vadd.f32 %v1989, %v2617
        %2619 = vmatmul.f32.gmra.mxu0 %v1788
        %v2620 = vpop.f32.mrf.mxu0
        %v2621 = vadd.f32 %v1989, %v2620
        %2622 = vmatmul.f32.gmra.mxu0 %v1792
        %v2623 = vpop.f32.mrf.mxu0
        %v2624 = vadd.f32 %v1989, %v2623
        %2625 = vmatmul.f32.gmra.mxu0 %v1796
        %v2626 = vpop.f32.mrf.mxu0
        %v2627 = vadd.f32 %v1989, %v2626
        %2628 = vmatmul.f32.gmra.mxu0 %v1800
        %v2629 = vpop.f32.mrf.mxu0
        %v2630 = vadd.f32 %v1989, %v2629
        %2631 = vmatmul.f32.gmra.mxu0 %v1804
        %v2632 = vpop.f32.mrf.mxu0
        %v2633 = vadd.f32 %v1989, %v2632
        %2634 = vmatmul.f32.gmra.mxu0 %v1808
        %v2635 = vpop.f32.mrf.mxu0
        %v2636 = vadd.f32 %v1989, %v2635
        %2637 = vmatmul.f32.gmra.mxu0 %v1812
        %v2638 = vpop.f32.mrf.mxu0
        %v2639 = vadd.f32 %v1989, %v2638
        %2640 = vmatmul.f32.gmra.mxu0 %v1816
        %v2641 = vpop.f32.mrf.mxu0
        %v2642 = vadd.f32 %v1989, %v2641
        %2643 = vmatmul.f32.gmra.mxu0 %v1820
        %v2644 = vpop.f32.mrf.mxu0
        %v2645 = vadd.f32 %v1989, %v2644
        %2646 = vmatmul.f32.gmra.mxu0 %v1824
        %v2647 = vpop.f32.mrf.mxu0
        %v2648 = vadd.f32 %v1989, %v2647
        %2649 = vmatmul.f32.gmra.mxu0 %v1828
        %v2650 = vpop.f32.mrf.mxu0
        %v2651 = vadd.f32 %v1989, %v2650
        %2652 = vmatmul.f32.gmra.mxu0 %v1832
        %v2653 = vpop.f32.mrf.mxu0
        %v2654 = vadd.f32 %v1989, %v2653
        %2655 = vdwg.mxu0
        %2656 = vmatpush.msra.mxu0 %v1930
        %2657 = vmatpush.msra.mxu0 %v1927
        %2658 = vmatpush.msra.mxu0 %v1924
        %2659 = vmatpush.msra.mxu0 %v1921
        %2660 = vmatpush.msra.mxu0 %v1918
        %2661 = vmatpush.msra.mxu0 %v1915
        %2662 = vmatpush.msra.mxu0 %v1912
        %2663 = vmatpush.msra.mxu0 %v1909
        %2664 = vmatpush.msra.mxu0 %v1906
        %2665 = vmatpush.msra.mxu0 %v1903
        %2666 = vmatpush.msra.mxu0 %v1900
        %2667 = vmatpush.msra.mxu0 %v1897
        %2668 = vmatpush.msra.mxu0 %v1894
        %2669 = vmatpush.msra.mxu0 %v1891
        %2670 = vmatpush.msra.mxu0 %v1888
        %2671 = vmatpush.msra.mxu0 %v1885
        %2672 = vmatmul.f32.gmra.mxu0 %v1709
        %v2673 = vpop.f32.mrf.mxu0
        %v2674 = vadd.f32 %v2561, %v2673
        %2675 = vmatmul.f32.gmra.mxu0 %v1713
        %v2676 = vpop.f32.mrf.mxu0
        %v2677 = vadd.f32 %v2564, %v2676
        %2678 = vmatmul.f32.gmra.mxu0 %v1717
        %v2679 = vpop.f32.mrf.mxu0
        %v2680 = vadd.f32 %v2567, %v2679
        %2681 = vmatmul.f32.gmra.mxu0 %v1721
        %v2682 = vpop.f32.mrf.mxu0
        %v2683 = vadd.f32 %v2570, %v2682
        %2684 = vmatmul.f32.gmra.mxu0 %v1725
        %v2685 = vpop.f32.mrf.mxu0
        %v2686 = vadd.f32 %v2573, %v2685
        %2687 = vmatmul.f32.gmra.mxu0 %v1729
        %v2688 = vpop.f32.mrf.mxu0
        %v2689 = vadd.f32 %v2576, %v2688
        %2690 = vmatmul.f32.gmra.mxu0 %v1733
        %v2691 = vpop.f32.mrf.mxu0
        %v2692 = vadd.f32 %v2579, %v2691
        %2693 = vmatmul.f32.gmra.mxu0 %v1737
        %v2694 = vpop.f32.mrf.mxu0
        %v2695 = vadd.f32 %v2582, %v2694
        %2696 = vmatmul.f32.gmra.mxu0 %v1741
        %v2697 = vpop.f32.mrf.mxu0
        %v2698 = vadd.f32 %v2585, %v2697
        %2699 = vmatmul.f32.gmra.mxu0 %v1745
        %v2700 = vpop.f32.mrf.mxu0
        %v2701 = vadd.f32 %v2588, %v2700
        %2702 = vmatmul.f32.gmra.mxu0 %v1749
        %v2703 = vpop.f32.mrf.mxu0
        %v2704 = vadd.f32 %v2591, %v2703
        %2705 = vmatmul.f32.gmra.mxu0 %v1753
        %v2706 = vpop.f32.mrf.mxu0
        %v2707 = vadd.f32 %v2594, %v2706
        %2708 = vmatmul.f32.gmra.mxu0 %v1757
        %v2709 = vpop.f32.mrf.mxu0
        %v2710 = vadd.f32 %v2597, %v2709
        %2711 = vmatmul.f32.gmra.mxu0 %v1761
        %v2712 = vpop.f32.mrf.mxu0
        %v2713 = vadd.f32 %v2600, %v2712
        %2714 = vmatmul.f32.gmra.mxu0 %v1765
        %v2715 = vpop.f32.mrf.mxu0
        %v2716 = vadd.f32 %v2603, %v2715
        %2717 = vmatmul.f32.gmra.mxu0 %v1769
        %v2718 = vpop.f32.mrf.mxu0
        %v2719 = vadd.f32 %v2606, %v2718
        %2720 = vmatmul.f32.gmra.mxu0 %v1773
        %v2721 = vpop.f32.mrf.mxu0
        %v2722 = vadd.f32 %v2609, %v2721
        %2723 = vmatmul.f32.gmra.mxu0 %v1777
        %v2724 = vpop.f32.mrf.mxu0
        %v2725 = vadd.f32 %v2612, %v2724
        %2726 = vmatmul.f32.gmra.mxu0 %v1781
        %v2727 = vpop.f32.mrf.mxu0
        %v2728 = vadd.f32 %v2615, %v2727
        %2729 = vmatmul.f32.gmra.mxu0 %v1785
        %v2730 = vpop.f32.mrf.mxu0
        %v2731 = vadd.f32 %v2618, %v2730
        %2732 = vmatmul.f32.gmra.mxu0 %v1789
        %v2733 = vpop.f32.mrf.mxu0
        %v2734 = vadd.f32 %v2621, %v2733
        %2735 = vmatmul.f32.gmra.mxu0 %v1793
        %v2736 = vpop.f32.mrf.mxu0
        %v2737 = vadd.f32 %v2624, %v2736
        %2738 = vmatmul.f32.gmra.mxu0 %v1797
        %v2739 = vpop.f32.mrf.mxu0
        %v2740 = vadd.f32 %v2627, %v2739
        %2741 = vmatmul.f32.gmra.mxu0 %v1801
        %v2742 = vpop.f32.mrf.mxu0
        %v2743 = vadd.f32 %v2630, %v2742
        %2744 = vmatmul.f32.gmra.mxu0 %v1805
        %v2745 = vpop.f32.mrf.mxu0
        %v2746 = vadd.f32 %v2633, %v2745
        %2747 = vmatmul.f32.gmra.mxu0 %v1809
        %v2748 = vpop.f32.mrf.mxu0
        %v2749 = vadd.f32 %v2636, %v2748
        %2750 = vmatmul.f32.gmra.mxu0 %v1813
        %v2751 = vpop.f32.mrf.mxu0
        %v2752 = vadd.f32 %v2639, %v2751
        %2753 = vmatmul.f32.gmra.mxu0 %v1817
        %v2754 = vpop.f32.mrf.mxu0
        %v2755 = vadd.f32 %v2642, %v2754
        %2756 = vmatmul.f32.gmra.mxu0 %v1821
        %v2757 = vpop.f32.mrf.mxu0
        %v2758 = vadd.f32 %v2645, %v2757
        %2759 = vmatmul.f32.gmra.mxu0 %v1825
        %v2760 = vpop.f32.mrf.mxu0
        %v2761 = vadd.f32 %v2648, %v2760
        %2762 = vmatmul.f32.gmra.mxu0 %v1829
        %v2763 = vpop.f32.mrf.mxu0
        %v2764 = vadd.f32 %v2651, %v2763
        %2765 = vmatmul.f32.gmra.mxu0 %v1833
        %v2766 = vpop.f32.mrf.mxu0
        %v2767 = vadd.f32 %v2654, %v2766
        %2768 = vdwg.mxu0
        %2769 = vmatpush.msra.mxu0 %v1978
        %2770 = vmatpush.msra.mxu0 %v1975
        %2771 = vmatpush.msra.mxu0 %v1972
        %2772 = vmatpush.msra.mxu0 %v1969
        %2773 = vmatpush.msra.mxu0 %v1966
        %2774 = vmatpush.msra.mxu0 %v1963
        %2775 = vmatpush.msra.mxu0 %v1960
        %2776 = vmatpush.msra.mxu0 %v1957
        %2777 = vmatpush.msra.mxu0 %v1954
        %2778 = vmatpush.msra.mxu0 %v1951
        %2779 = vmatpush.msra.mxu0 %v1948
        %2780 = vmatpush.msra.mxu0 %v1945
        %2781 = vmatpush.msra.mxu0 %v1942
        %2782 = vmatpush.msra.mxu0 %v1939
        %2783 = vmatpush.msra.mxu0 %v1936
        %2784 = vmatpush.msra.mxu0 %v1933
        %2785 = vmatmul.f32.gmra.mxu0 %v1710
        %v2786 = vpop.f32.mrf.mxu0
        %v2787 = vadd.f32 %v2674, %v2786
        %2788 = vmatmul.f32.gmra.mxu0 %v1714
        %v2789 = vpop.f32.mrf.mxu0
        %v2790 = vadd.f32 %v2677, %v2789
        %2791 = vmatmul.f32.gmra.mxu0 %v1718
        %v2792 = vpop.f32.mrf.mxu0
        %v2793 = vadd.f32 %v2680, %v2792
        %2794 = vmatmul.f32.gmra.mxu0 %v1722
        %v2795 = vpop.f32.mrf.mxu0
        %v2796 = vadd.f32 %v2683, %v2795
        %2797 = vmatmul.f32.gmra.mxu0 %v1726
        %v2798 = vpop.f32.mrf.mxu0
        %v2799 = vadd.f32 %v2686, %v2798
        %2800 = vmatmul.f32.gmra.mxu0 %v1730
        %v2801 = vpop.f32.mrf.mxu0
        %v2802 = vadd.f32 %v2689, %v2801
        %2803 = vmatmul.f32.gmra.mxu0 %v1734
        %v2804 = vpop.f32.mrf.mxu0
        %v2805 = vadd.f32 %v2692, %v2804
        %2806 = vmatmul.f32.gmra.mxu0 %v1738
        %v2807 = vpop.f32.mrf.mxu0
        %v2808 = vadd.f32 %v2695, %v2807
        %2809 = vmatmul.f32.gmra.mxu0 %v1742
        %v2810 = vpop.f32.mrf.mxu0
        %v2811 = vadd.f32 %v2698, %v2810
        %2812 = vmatmul.f32.gmra.mxu0 %v1746
        %v2813 = vpop.f32.mrf.mxu0
        %v2814 = vadd.f32 %v2701, %v2813
        %2815 = vmatmul.f32.gmra.mxu0 %v1750
        %v2816 = vpop.f32.mrf.mxu0
        %v2817 = vadd.f32 %v2704, %v2816
        %2818 = vmatmul.f32.gmra.mxu0 %v1754
        %v2819 = vpop.f32.mrf.mxu0
        %v2820 = vadd.f32 %v2707, %v2819
        %2821 = vmatmul.f32.gmra.mxu0 %v1758
        %v2822 = vpop.f32.mrf.mxu0
        %v2823 = vadd.f32 %v2710, %v2822
        %2824 = vmatmul.f32.gmra.mxu0 %v1762
        %v2825 = vpop.f32.mrf.mxu0
        %v2826 = vadd.f32 %v2713, %v2825
        %2827 = vmatmul.f32.gmra.mxu0 %v1766
        %v2828 = vpop.f32.mrf.mxu0
        %v2829 = vadd.f32 %v2716, %v2828
        %2830 = vmatmul.f32.gmra.mxu0 %v1770
        %v2831 = vpop.f32.mrf.mxu0
        %v2832 = vadd.f32 %v2719, %v2831
        %2833 = vmatmul.f32.gmra.mxu0 %v1774
        %v2834 = vpop.f32.mrf.mxu0
        %v2835 = vadd.f32 %v2722, %v2834
        %2836 = vmatmul.f32.gmra.mxu0 %v1778
        %v2837 = vpop.f32.mrf.mxu0
        %v2838 = vadd.f32 %v2725, %v2837
        %2839 = vmatmul.f32.gmra.mxu0 %v1782
        %v2840 = vpop.f32.mrf.mxu0
        %v2841 = vadd.f32 %v2728, %v2840
        %2842 = vmatmul.f32.gmra.mxu0 %v1786
        %v2843 = vpop.f32.mrf.mxu0
        %v2844 = vadd.f32 %v2731, %v2843
        %2845 = vmatmul.f32.gmra.mxu0 %v1790
        %v2846 = vpop.f32.mrf.mxu0
        %v2847 = vadd.f32 %v2734, %v2846
        %2848 = vmatmul.f32.gmra.mxu0 %v1794
        %v2849 = vpop.f32.mrf.mxu0
        %v2850 = vadd.f32 %v2737, %v2849
        %2851 = vmatmul.f32.gmra.mxu0 %v1798
        %v2852 = vpop.f32.mrf.mxu0
        %v2853 = vadd.f32 %v2740, %v2852
        %2854 = vmatmul.f32.gmra.mxu0 %v1802
        %v2855 = vpop.f32.mrf.mxu0
        %v2856 = vadd.f32 %v2743, %v2855
        %2857 = vmatmul.f32.gmra.mxu0 %v1806
        %v2858 = vpop.f32.mrf.mxu0
        %v2859 = vadd.f32 %v2746, %v2858
        %2860 = vmatmul.f32.gmra.mxu0 %v1810
        %v2861 = vpop.f32.mrf.mxu0
        %v2862 = vadd.f32 %v2749, %v2861
        %2863 = vmatmul.f32.gmra.mxu0 %v1814
        %v2864 = vpop.f32.mrf.mxu0
        %v2865 = vadd.f32 %v2752, %v2864
        %2866 = vmatmul.f32.gmra.mxu0 %v1818
        %v2867 = vpop.f32.mrf.mxu0
        %v2868 = vadd.f32 %v2755, %v2867
        %2869 = vmatmul.f32.gmra.mxu0 %v1822
        %v2870 = vpop.f32.mrf.mxu0
        %v2871 = vadd.f32 %v2758, %v2870
        %2872 = vmatmul.f32.gmra.mxu0 %v1826
        %v2873 = vpop.f32.mrf.mxu0
        %v2874 = vadd.f32 %v2761, %v2873
        %2875 = vmatmul.f32.gmra.mxu0 %v1830
        %v2876 = vpop.f32.mrf.mxu0
        %v2877 = vadd.f32 %v2764, %v2876
        %2878 = vmatmul.f32.gmra.mxu0 %v1834
        %v2879 = vpop.f32.mrf.mxu0
        %v2880 = vadd.f32 %v2767, %v2879
        %2881 = vdwg.mxu0
        %2882 = vmatpush.msra.mxu0 0.0
        %2883 = vmatpush.msra.mxu0 0.0
        %2884 = vmatpush.msra.mxu0 0.0
        %2885 = vmatpush.msra.mxu0 0.0
        %2886 = vmatpush.msra.mxu0 0.0
        %2887 = vmatpush.msra.mxu0 0.0
        %2888 = vmatpush.msra.mxu0 0.0
        %2889 = vmatpush.msra.mxu0 0.0
        %2890 = vmatpush.msra.mxu0 0.0
        %2891 = vmatpush.msra.mxu0 0.0
        %2892 = vmatpush.msra.mxu0 0.0
        %2893 = vmatpush.msra.mxu0 0.0
        %2894 = vmatpush.msra.mxu0 0.0
        %2895 = vmatpush.msra.mxu0 0.0
        %2896 = vmatpush.msra.mxu0 %v1984
        %2897 = vmatpush.msra.mxu0 %v1981
        %2898 = vmatmul.f32.gmra.mxu0 %v1996
        %v2899 = vpop.f32.mrf.mxu0
        %v2900 = vadd.f32 %v2787, %v2899
        %2901 = vmatmul.f32.gmra.mxu0 %v1999
        %v2902 = vpop.f32.mrf.mxu0
        %v2903 = vadd.f32 %v2790, %v2902
        %2904 = vmatmul.f32.gmra.mxu0 %v2002
        %v2905 = vpop.f32.mrf.mxu0
        %v2906 = vadd.f32 %v2793, %v2905
        %2907 = vmatmul.f32.gmra.mxu0 %v2005
        %v2908 = vpop.f32.mrf.mxu0
        %v2909 = vadd.f32 %v2796, %v2908
        %2910 = vmatmul.f32.gmra.mxu0 %v2008
        %v2911 = vpop.f32.mrf.mxu0
        %v2912 = vadd.f32 %v2799, %v2911
        %2913 = vmatmul.f32.gmra.mxu0 %v2011
        %v2914 = vpop.f32.mrf.mxu0
        %v2915 = vadd.f32 %v2802, %v2914
        %2916 = vmatmul.f32.gmra.mxu0 %v2014
        %v2917 = vpop.f32.mrf.mxu0
        %v2918 = vadd.f32 %v2805, %v2917
        %2919 = vmatmul.f32.gmra.mxu0 %v2017
        %v2920 = vpop.f32.mrf.mxu0
        %v2921 = vadd.f32 %v2808, %v2920
        %2922 = vmatmul.f32.gmra.mxu0 %v2020
        %v2923 = vpop.f32.mrf.mxu0
        %v2924 = vadd.f32 %v2811, %v2923
        %2925 = vmatmul.f32.gmra.mxu0 %v2023
        %v2926 = vpop.f32.mrf.mxu0
        %v2927 = vadd.f32 %v2814, %v2926
        %2928 = vmatmul.f32.gmra.mxu0 %v2026
        %v2929 = vpop.f32.mrf.mxu0
        %v2930 = vadd.f32 %v2817, %v2929
        %2931 = vmatmul.f32.gmra.mxu0 %v2029
        %v2932 = vpop.f32.mrf.mxu0
        %v2933 = vadd.f32 %v2820, %v2932
        %2934 = vmatmul.f32.gmra.mxu0 %v2032
        %v2935 = vpop.f32.mrf.mxu0
        %v2936 = vadd.f32 %v2823, %v2935
        %2937 = vmatmul.f32.gmra.mxu0 %v2035
        %v2938 = vpop.f32.mrf.mxu0
        %v2939 = vadd.f32 %v2826, %v2938
        %2940 = vmatmul.f32.gmra.mxu0 %v2038
        %v2941 = vpop.f32.mrf.mxu0
        %v2942 = vadd.f32 %v2829, %v2941
        %2943 = vmatmul.f32.gmra.mxu0 %v2041
        %v2944 = vpop.f32.mrf.mxu0
        %v2945 = vadd.f32 %v2832, %v2944
        %2946 = vmatmul.f32.gmra.mxu0 %v2044
        %v2947 = vpop.f32.mrf.mxu0
        %v2948 = vadd.f32 %v2835, %v2947
        %2949 = vmatmul.f32.gmra.mxu0 %v2047
        %v2950 = vpop.f32.mrf.mxu0
        %v2951 = vadd.f32 %v2838, %v2950
        %2952 = vmatmul.f32.gmra.mxu0 %v2050
        %v2953 = vpop.f32.mrf.mxu0
        %v2954 = vadd.f32 %v2841, %v2953
        %2955 = vmatmul.f32.gmra.mxu0 %v2053
        %v2956 = vpop.f32.mrf.mxu0
        %v2957 = vadd.f32 %v2844, %v2956
        %2958 = vmatmul.f32.gmra.mxu0 %v2056
        %v2959 = vpop.f32.mrf.mxu0
        %v2960 = vadd.f32 %v2847, %v2959
        %2961 = vmatmul.f32.gmra.mxu0 %v2059
        %v2962 = vpop.f32.mrf.mxu0
        %v2963 = vadd.f32 %v2850, %v2962
        %2964 = vmatmul.f32.gmra.mxu0 %v2062
        %v2965 = vpop.f32.mrf.mxu0
        %v2966 = vadd.f32 %v2853, %v2965
        %2967 = vmatmul.f32.gmra.mxu0 %v2065
        %v2968 = vpop.f32.mrf.mxu0
        %v2969 = vadd.f32 %v2856, %v2968
        %2970 = vmatmul.f32.gmra.mxu0 %v2068
        %v2971 = vpop.f32.mrf.mxu0
        %v2972 = vadd.f32 %v2859, %v2971
        %2973 = vmatmul.f32.gmra.mxu0 %v2071
        %v2974 = vpop.f32.mrf.mxu0
        %v2975 = vadd.f32 %v2862, %v2974
        %2976 = vmatmul.f32.gmra.mxu0 %v2074
        %v2977 = vpop.f32.mrf.mxu0
        %v2978 = vadd.f32 %v2865, %v2977
        %2979 = vmatmul.f32.gmra.mxu0 %v2077
        %v2980 = vpop.f32.mrf.mxu0
        %v2981 = vadd.f32 %v2868, %v2980
        %2982 = vmatmul.f32.gmra.mxu0 %v2080
        %v2983 = vpop.f32.mrf.mxu0
        %v2984 = vadd.f32 %v2871, %v2983
        %2985 = vmatmul.f32.gmra.mxu0 %v2083
        %v2986 = vpop.f32.mrf.mxu0
        %v2987 = vadd.f32 %v2874, %v2986
        %2988 = vmatmul.f32.gmra.mxu0 %v2086
        %v2989 = vpop.f32.mrf.mxu0
        %v2990 = vadd.f32 %v2877, %v2989
        %2991 = vmatmul.f32.gmra.mxu0 %v2089
        %v2992 = vpop.f32.mrf.mxu0
        %v2993 = vadd.f32 %v2880, %v2992
        %2994 = vdwg.mxu0
        %2995 = vmatpush.msra.mxu0 %v1883
        %2996 = vmatpush.msra.mxu0 %v1880
        %2997 = vmatpush.msra.mxu0 %v1877
        %2998 = vmatpush.msra.mxu0 %v1874
        %2999 = vmatpush.msra.mxu0 %v1871
        %3000 = vmatpush.msra.mxu0 %v1868
        %3001 = vmatpush.msra.mxu0 %v1865
        %3002 = vmatpush.msra.mxu0 %v1862
        %3003 = vmatpush.msra.mxu0 %v1859
        %3004 = vmatpush.msra.mxu0 %v1856
        %3005 = vmatpush.msra.mxu0 %v1853
        %3006 = vmatpush.msra.mxu0 %v1850
        %3007 = vmatpush.msra.mxu0 %v1847
        %3008 = vmatpush.msra.mxu0 %v1844
        %3009 = vmatpush.msra.mxu0 %v1841
        %3010 = vmatpush.msra.mxu0 %v1838
        %3011 = vmatmul.f32.gmra.mxu0 %v1708
        %v3012 = vpop.f32.mrf.mxu0
        %v3013 = vadd.f32 %v1990, %v3012
        %3014 = vmatmul.f32.gmra.mxu0 %v1712
        %v3015 = vpop.f32.mrf.mxu0
        %v3016 = vadd.f32 %v1990, %v3015
        %3017 = vmatmul.f32.gmra.mxu0 %v1716
        %v3018 = vpop.f32.mrf.mxu0
        %v3019 = vadd.f32 %v1990, %v3018
        %3020 = vmatmul.f32.gmra.mxu0 %v1720
        %v3021 = vpop.f32.mrf.mxu0
        %v3022 = vadd.f32 %v1990, %v3021
        %3023 = vmatmul.f32.gmra.mxu0 %v1724
        %v3024 = vpop.f32.mrf.mxu0
        %v3025 = vadd.f32 %v1990, %v3024
        %3026 = vmatmul.f32.gmra.mxu0 %v1728
        %v3027 = vpop.f32.mrf.mxu0
        %v3028 = vadd.f32 %v1990, %v3027
        %3029 = vmatmul.f32.gmra.mxu0 %v1732
        %v3030 = vpop.f32.mrf.mxu0
        %v3031 = vadd.f32 %v1990, %v3030
        %3032 = vmatmul.f32.gmra.mxu0 %v1736
        %v3033 = vpop.f32.mrf.mxu0
        %v3034 = vadd.f32 %v1990, %v3033
        %3035 = vmatmul.f32.gmra.mxu0 %v1740
        %v3036 = vpop.f32.mrf.mxu0
        %v3037 = vadd.f32 %v1990, %v3036
        %3038 = vmatmul.f32.gmra.mxu0 %v1744
        %v3039 = vpop.f32.mrf.mxu0
        %v3040 = vadd.f32 %v1990, %v3039
        %3041 = vmatmul.f32.gmra.mxu0 %v1748
        %v3042 = vpop.f32.mrf.mxu0
        %v3043 = vadd.f32 %v1990, %v3042
        %3044 = vmatmul.f32.gmra.mxu0 %v1752
        %v3045 = vpop.f32.mrf.mxu0
        %v3046 = vadd.f32 %v1990, %v3045
        %3047 = vmatmul.f32.gmra.mxu0 %v1756
        %v3048 = vpop.f32.mrf.mxu0
        %v3049 = vadd.f32 %v1990, %v3048
        %3050 = vmatmul.f32.gmra.mxu0 %v1760
        %v3051 = vpop.f32.mrf.mxu0
        %v3052 = vadd.f32 %v1990, %v3051
        %3053 = vmatmul.f32.gmra.mxu0 %v1764
        %v3054 = vpop.f32.mrf.mxu0
        %v3055 = vadd.f32 %v1990, %v3054
        %3056 = vmatmul.f32.gmra.mxu0 %v1768
        %v3057 = vpop.f32.mrf.mxu0
        %v3058 = vadd.f32 %v1990, %v3057
        %3059 = vmatmul.f32.gmra.mxu0 %v1772
        %v3060 = vpop.f32.mrf.mxu0
        %v3061 = vadd.f32 %v1990, %v3060
        %3062 = vmatmul.f32.gmra.mxu0 %v1776
        %v3063 = vpop.f32.mrf.mxu0
        %v3064 = vadd.f32 %v1990, %v3063
        %3065 = vmatmul.f32.gmra.mxu0 %v1780
        %v3066 = vpop.f32.mrf.mxu0
        %v3067 = vadd.f32 %v1990, %v3066
        %3068 = vmatmul.f32.gmra.mxu0 %v1784
        %v3069 = vpop.f32.mrf.mxu0
        %v3070 = vadd.f32 %v1990, %v3069
        %3071 = vmatmul.f32.gmra.mxu0 %v1788
        %v3072 = vpop.f32.mrf.mxu0
        %v3073 = vadd.f32 %v1990, %v3072
        %3074 = vmatmul.f32.gmra.mxu0 %v1792
        %v3075 = vpop.f32.mrf.mxu0
        %v3076 = vadd.f32 %v1990, %v3075
        %3077 = vmatmul.f32.gmra.mxu0 %v1796
        %v3078 = vpop.f32.mrf.mxu0
        %v3079 = vadd.f32 %v1990, %v3078
        %3080 = vmatmul.f32.gmra.mxu0 %v1800
        %v3081 = vpop.f32.mrf.mxu0
        %v3082 = vadd.f32 %v1990, %v3081
        %3083 = vmatmul.f32.gmra.mxu0 %v1804
        %v3084 = vpop.f32.mrf.mxu0
        %v3085 = vadd.f32 %v1990, %v3084
        %3086 = vmatmul.f32.gmra.mxu0 %v1808
        %v3087 = vpop.f32.mrf.mxu0
        %v3088 = vadd.f32 %v1990, %v3087
        %3089 = vmatmul.f32.gmra.mxu0 %v1812
        %v3090 = vpop.f32.mrf.mxu0
        %v3091 = vadd.f32 %v1990, %v3090
        %3092 = vmatmul.f32.gmra.mxu0 %v1816
        %v3093 = vpop.f32.mrf.mxu0
        %v3094 = vadd.f32 %v1990, %v3093
        %3095 = vmatmul.f32.gmra.mxu0 %v1820
        %v3096 = vpop.f32.mrf.mxu0
        %v3097 = vadd.f32 %v1990, %v3096
        %3098 = vmatmul.f32.gmra.mxu0 %v1824
        %v3099 = vpop.f32.mrf.mxu0
        %v3100 = vadd.f32 %v1990, %v3099
        %3101 = vmatmul.f32.gmra.mxu0 %v1828
        %v3102 = vpop.f32.mrf.mxu0
        %v3103 = vadd.f32 %v1990, %v3102
        %3104 = vmatmul.f32.gmra.mxu0 %v1832
        %v3105 = vpop.f32.mrf.mxu0
        %v3106 = vadd.f32 %v1990, %v3105
        %3107 = vdwg.mxu0
        %3108 = vmatpush.msra.mxu0 %v1931
        %3109 = vmatpush.msra.mxu0 %v1928
        %3110 = vmatpush.msra.mxu0 %v1925
        %3111 = vmatpush.msra.mxu0 %v1922
        %3112 = vmatpush.msra.mxu0 %v1919
        %3113 = vmatpush.msra.mxu0 %v1916
        %3114 = vmatpush.msra.mxu0 %v1913
        %3115 = vmatpush.msra.mxu0 %v1910
        %3116 = vmatpush.msra.mxu0 %v1907
        %3117 = vmatpush.msra.mxu0 %v1904
        %3118 = vmatpush.msra.mxu0 %v1901
        %3119 = vmatpush.msra.mxu0 %v1898
        %3120 = vmatpush.msra.mxu0 %v1895
        %3121 = vmatpush.msra.mxu0 %v1892
        %3122 = vmatpush.msra.mxu0 %v1889
        %3123 = vmatpush.msra.mxu0 %v1886
        %3124 = vmatmul.f32.gmra.mxu0 %v1709
        %v3125 = vpop.f32.mrf.mxu0
        %v3126 = vadd.f32 %v3013, %v3125
        %3127 = vmatmul.f32.gmra.mxu0 %v1713
        %v3128 = vpop.f32.mrf.mxu0
        %v3129 = vadd.f32 %v3016, %v3128
        %3130 = vmatmul.f32.gmra.mxu0 %v1717
        %v3131 = vpop.f32.mrf.mxu0
        %v3132 = vadd.f32 %v3019, %v3131
        %3133 = vmatmul.f32.gmra.mxu0 %v1721
        %v3134 = vpop.f32.mrf.mxu0
        %v3135 = vadd.f32 %v3022, %v3134
        %3136 = vmatmul.f32.gmra.mxu0 %v1725
        %v3137 = vpop.f32.mrf.mxu0
        %v3138 = vadd.f32 %v3025, %v3137
        %3139 = vmatmul.f32.gmra.mxu0 %v1729
        %v3140 = vpop.f32.mrf.mxu0
        %v3141 = vadd.f32 %v3028, %v3140
        %3142 = vmatmul.f32.gmra.mxu0 %v1733
        %v3143 = vpop.f32.mrf.mxu0
        %v3144 = vadd.f32 %v3031, %v3143
        %3145 = vmatmul.f32.gmra.mxu0 %v1737
        %v3146 = vpop.f32.mrf.mxu0
        %v3147 = vadd.f32 %v3034, %v3146
        %3148 = vmatmul.f32.gmra.mxu0 %v1741
        %v3149 = vpop.f32.mrf.mxu0
        %v3150 = vadd.f32 %v3037, %v3149
        %3151 = vmatmul.f32.gmra.mxu0 %v1745
        %v3152 = vpop.f32.mrf.mxu0
        %v3153 = vadd.f32 %v3040, %v3152
        %3154 = vmatmul.f32.gmra.mxu0 %v1749
        %v3155 = vpop.f32.mrf.mxu0
        %v3156 = vadd.f32 %v3043, %v3155
        %3157 = vmatmul.f32.gmra.mxu0 %v1753
        %v3158 = vpop.f32.mrf.mxu0
        %v3159 = vadd.f32 %v3046, %v3158
        %3160 = vmatmul.f32.gmra.mxu0 %v1757
        %v3161 = vpop.f32.mrf.mxu0
        %v3162 = vadd.f32 %v3049, %v3161
        %3163 = vmatmul.f32.gmra.mxu0 %v1761
        %v3164 = vpop.f32.mrf.mxu0
        %v3165 = vadd.f32 %v3052, %v3164
        %3166 = vmatmul.f32.gmra.mxu0 %v1765
        %v3167 = vpop.f32.mrf.mxu0
        %v3168 = vadd.f32 %v3055, %v3167
        %3169 = vmatmul.f32.gmra.mxu0 %v1769
        %v3170 = vpop.f32.mrf.mxu0
        %v3171 = vadd.f32 %v3058, %v3170
        %3172 = vmatmul.f32.gmra.mxu0 %v1773
        %v3173 = vpop.f32.mrf.mxu0
        %v3174 = vadd.f32 %v3061, %v3173
        %3175 = vmatmul.f32.gmra.mxu0 %v1777
        %v3176 = vpop.f32.mrf.mxu0
        %v3177 = vadd.f32 %v3064, %v3176
        %3178 = vmatmul.f32.gmra.mxu0 %v1781
        %v3179 = vpop.f32.mrf.mxu0
        %v3180 = vadd.f32 %v3067, %v3179
        %3181 = vmatmul.f32.gmra.mxu0 %v1785
        %v3182 = vpop.f32.mrf.mxu0
        %v3183 = vadd.f32 %v3070, %v3182
        %3184 = vmatmul.f32.gmra.mxu0 %v1789
        %v3185 = vpop.f32.mrf.mxu0
        %v3186 = vadd.f32 %v3073, %v3185
        %3187 = vmatmul.f32.gmra.mxu0 %v1793
        %v3188 = vpop.f32.mrf.mxu0
        %v3189 = vadd.f32 %v3076, %v3188
        %3190 = vmatmul.f32.gmra.mxu0 %v1797
        %v3191 = vpop.f32.mrf.mxu0
        %v3192 = vadd.f32 %v3079, %v3191
        %3193 = vmatmul.f32.gmra.mxu0 %v1801
        %v3194 = vpop.f32.mrf.mxu0
        %v3195 = vadd.f32 %v3082, %v3194
        %3196 = vmatmul.f32.gmra.mxu0 %v1805
        %v3197 = vpop.f32.mrf.mxu0
        %v3198 = vadd.f32 %v3085, %v3197
        %3199 = vmatmul.f32.gmra.mxu0 %v1809
        %v3200 = vpop.f32.mrf.mxu0
        %v3201 = vadd.f32 %v3088, %v3200
        %3202 = vmatmul.f32.gmra.mxu0 %v1813
        %v3203 = vpop.f32.mrf.mxu0
        %v3204 = vadd.f32 %v3091, %v3203
        %3205 = vmatmul.f32.gmra.mxu0 %v1817
        %v3206 = vpop.f32.mrf.mxu0
        %v3207 = vadd.f32 %v3094, %v3206
        %3208 = vmatmul.f32.gmra.mxu0 %v1821
        %v3209 = vpop.f32.mrf.mxu0
        %v3210 = vadd.f32 %v3097, %v3209
        %3211 = vmatmul.f32.gmra.mxu0 %v1825
        %v3212 = vpop.f32.mrf.mxu0
        %v3213 = vadd.f32 %v3100, %v3212
        %3214 = vmatmul.f32.gmra.mxu0 %v1829
        %v3215 = vpop.f32.mrf.mxu0
        %v3216 = vadd.f32 %v3103, %v3215
        %3217 = vmatmul.f32.gmra.mxu0 %v1833
        %v3218 = vpop.f32.mrf.mxu0
        %v3219 = vadd.f32 %v3106, %v3218
        %3220 = vdwg.mxu0
        %3221 = vmatpush.msra.mxu0 %v1979
        %3222 = vmatpush.msra.mxu0 %v1976
        %3223 = vmatpush.msra.mxu0 %v1973
        %3224 = vmatpush.msra.mxu0 %v1970
        %3225 = vmatpush.msra.mxu0 %v1967
        %3226 = vmatpush.msra.mxu0 %v1964
        %3227 = vmatpush.msra.mxu0 %v1961
        %3228 = vmatpush.msra.mxu0 %v1958
        %3229 = vmatpush.msra.mxu0 %v1955
        %3230 = vmatpush.msra.mxu0 %v1952
        %3231 = vmatpush.msra.mxu0 %v1949
        %3232 = vmatpush.msra.mxu0 %v1946
        %3233 = vmatpush.msra.mxu0 %v1943
        %3234 = vmatpush.msra.mxu0 %v1940
        %3235 = vmatpush.msra.mxu0 %v1937
        %3236 = vmatpush.msra.mxu0 %v1934
        %3237 = vmatmul.f32.gmra.mxu0 %v1710
        %v3238 = vpop.f32.mrf.mxu0
        %v3239 = vadd.f32 %v3126, %v3238
        %3240 = vmatmul.f32.gmra.mxu0 %v1714
        %v3241 = vpop.f32.mrf.mxu0
        %v3242 = vadd.f32 %v3129, %v3241
        %3243 = vmatmul.f32.gmra.mxu0 %v1718
        %v3244 = vpop.f32.mrf.mxu0
        %v3245 = vadd.f32 %v3132, %v3244
        %3246 = vmatmul.f32.gmra.mxu0 %v1722
        %v3247 = vpop.f32.mrf.mxu0
        %v3248 = vadd.f32 %v3135, %v3247
        %3249 = vmatmul.f32.gmra.mxu0 %v1726
        %v3250 = vpop.f32.mrf.mxu0
        %v3251 = vadd.f32 %v3138, %v3250
        %3252 = vmatmul.f32.gmra.mxu0 %v1730
        %v3253 = vpop.f32.mrf.mxu0
        %v3254 = vadd.f32 %v3141, %v3253
        %3255 = vmatmul.f32.gmra.mxu0 %v1734
        %v3256 = vpop.f32.mrf.mxu0
        %v3257 = vadd.f32 %v3144, %v3256
        %3258 = vmatmul.f32.gmra.mxu0 %v1738
        %v3259 = vpop.f32.mrf.mxu0
        %v3260 = vadd.f32 %v3147, %v3259
        %3261 = vmatmul.f32.gmra.mxu0 %v1742
        %v3262 = vpop.f32.mrf.mxu0
        %v3263 = vadd.f32 %v3150, %v3262
        %3264 = vmatmul.f32.gmra.mxu0 %v1746
        %v3265 = vpop.f32.mrf.mxu0
        %v3266 = vadd.f32 %v3153, %v3265
        %3267 = vmatmul.f32.gmra.mxu0 %v1750
        %v3268 = vpop.f32.mrf.mxu0
        %v3269 = vadd.f32 %v3156, %v3268
        %3270 = vmatmul.f32.gmra.mxu0 %v1754
        %v3271 = vpop.f32.mrf.mxu0
        %v3272 = vadd.f32 %v3159, %v3271
        %3273 = vmatmul.f32.gmra.mxu0 %v1758
        %v3274 = vpop.f32.mrf.mxu0
        %v3275 = vadd.f32 %v3162, %v3274
        %3276 = vmatmul.f32.gmra.mxu0 %v1762
        %v3277 = vpop.f32.mrf.mxu0
        %v3278 = vadd.f32 %v3165, %v3277
        %3279 = vmatmul.f32.gmra.mxu0 %v1766
        %v3280 = vpop.f32.mrf.mxu0
        %v3281 = vadd.f32 %v3168, %v3280
        %3282 = vmatmul.f32.gmra.mxu0 %v1770
        %v3283 = vpop.f32.mrf.mxu0
        %v3284 = vadd.f32 %v3171, %v3283
        %3285 = vmatmul.f32.gmra.mxu0 %v1774
        %v3286 = vpop.f32.mrf.mxu0
        %v3287 = vadd.f32 %v3174, %v3286
        %3288 = vmatmul.f32.gmra.mxu0 %v1778
        %v3289 = vpop.f32.mrf.mxu0
        %v3290 = vadd.f32 %v3177, %v3289
        %3291 = vmatmul.f32.gmra.mxu0 %v1782
        %v3292 = vpop.f32.mrf.mxu0
        %v3293 = vadd.f32 %v3180, %v3292
        %3294 = vmatmul.f32.gmra.mxu0 %v1786
        %v3295 = vpop.f32.mrf.mxu0
        %v3296 = vadd.f32 %v3183, %v3295
        %3297 = vmatmul.f32.gmra.mxu0 %v1790
        %v3298 = vpop.f32.mrf.mxu0
        %v3299 = vadd.f32 %v3186, %v3298
        %3300 = vmatmul.f32.gmra.mxu0 %v1794
        %v3301 = vpop.f32.mrf.mxu0
        %v3302 = vadd.f32 %v3189, %v3301
        %3303 = vmatmul.f32.gmra.mxu0 %v1798
        %v3304 = vpop.f32.mrf.mxu0
        %v3305 = vadd.f32 %v3192, %v3304
        %3306 = vmatmul.f32.gmra.mxu0 %v1802
        %v3307 = vpop.f32.mrf.mxu0
        %v3308 = vadd.f32 %v3195, %v3307
        %3309 = vmatmul.f32.gmra.mxu0 %v1806
        %v3310 = vpop.f32.mrf.mxu0
        %v3311 = vadd.f32 %v3198, %v3310
        %3312 = vmatmul.f32.gmra.mxu0 %v1810
        %v3313 = vpop.f32.mrf.mxu0
        %v3314 = vadd.f32 %v3201, %v3313
        %3315 = vmatmul.f32.gmra.mxu0 %v1814
        %v3316 = vpop.f32.mrf.mxu0
        %v3317 = vadd.f32 %v3204, %v3316
        %3318 = vmatmul.f32.gmra.mxu0 %v1818
        %v3319 = vpop.f32.mrf.mxu0
        %v3320 = vadd.f32 %v3207, %v3319
        %3321 = vmatmul.f32.gmra.mxu0 %v1822
        %v3322 = vpop.f32.mrf.mxu0
        %v3323 = vadd.f32 %v3210, %v3322
        %3324 = vmatmul.f32.gmra.mxu0 %v1826
        %v3325 = vpop.f32.mrf.mxu0
        %v3326 = vadd.f32 %v3213, %v3325
        %3327 = vmatmul.f32.gmra.mxu0 %v1830
        %v3328 = vpop.f32.mrf.mxu0
        %v3329 = vadd.f32 %v3216, %v3328
        %3330 = vmatmul.f32.gmra.mxu0 %v1834
        %v3331 = vpop.f32.mrf.mxu0
        %v3332 = vadd.f32 %v3219, %v3331
        %3333 = vdwg.mxu0
        %3334 = vmatpush.msra.mxu0 0.0
        %3335 = vmatpush.msra.mxu0 0.0
        %3336 = vmatpush.msra.mxu0 0.0
        %3337 = vmatpush.msra.mxu0 0.0
        %3338 = vmatpush.msra.mxu0 0.0
        %3339 = vmatpush.msra.mxu0 0.0
        %3340 = vmatpush.msra.mxu0 0.0
        %3341 = vmatpush.msra.mxu0 0.0
        %3342 = vmatpush.msra.mxu0 0.0
        %3343 = vmatpush.msra.mxu0 0.0
        %3344 = vmatpush.msra.mxu0 0.0
        %3345 = vmatpush.msra.mxu0 0.0
        %3346 = vmatpush.msra.mxu0 0.0
        %3347 = vmatpush.msra.mxu0 0.0
        %3348 = vmatpush.msra.mxu0 %v1985
        %3349 = vmatpush.msra.mxu0 %v1982
        %3350 = vmatmul.f32.gmra.mxu0 %v1996
        %v3351 = vpop.f32.mrf.mxu0
        %v3352 = vadd.f32 %v3239, %v3351
        %3353 = vmatmul.f32.gmra.mxu0 %v1999
        %v3354 = vpop.f32.mrf.mxu0
        %v3355 = vadd.f32 %v3242, %v3354
        %3356 = vmatmul.f32.gmra.mxu0 %v2002
        %v3357 = vpop.f32.mrf.mxu0
        %v3358 = vadd.f32 %v3245, %v3357
        %3359 = vmatmul.f32.gmra.mxu0 %v2005
        %v3360 = vpop.f32.mrf.mxu0
        %v3361 = vadd.f32 %v3248, %v3360
        %3362 = vmatmul.f32.gmra.mxu0 %v2008
        %v3363 = vpop.f32.mrf.mxu0
        %v3364 = vadd.f32 %v3251, %v3363
        %3365 = vmatmul.f32.gmra.mxu0 %v2011
        %v3366 = vpop.f32.mrf.mxu0
        %v3367 = vadd.f32 %v3254, %v3366
        %3368 = vmatmul.f32.gmra.mxu0 %v2014
        %v3369 = vpop.f32.mrf.mxu0
        %v3370 = vadd.f32 %v3257, %v3369
        %3371 = vmatmul.f32.gmra.mxu0 %v2017
        %v3372 = vpop.f32.mrf.mxu0
        %v3373 = vadd.f32 %v3260, %v3372
        %3374 = vmatmul.f32.gmra.mxu0 %v2020
        %v3375 = vpop.f32.mrf.mxu0
        %v3376 = vadd.f32 %v3263, %v3375
        %3377 = vmatmul.f32.gmra.mxu0 %v2023
        %v3378 = vpop.f32.mrf.mxu0
        %v3379 = vadd.f32 %v3266, %v3378
        %3380 = vmatmul.f32.gmra.mxu0 %v2026
        %v3381 = vpop.f32.mrf.mxu0
        %v3382 = vadd.f32 %v3269, %v3381
        %3383 = vmatmul.f32.gmra.mxu0 %v2029
        %v3384 = vpop.f32.mrf.mxu0
        %v3385 = vadd.f32 %v3272, %v3384
        %3386 = vmatmul.f32.gmra.mxu0 %v2032
        %v3387 = vpop.f32.mrf.mxu0
        %v3388 = vadd.f32 %v3275, %v3387
        %3389 = vmatmul.f32.gmra.mxu0 %v2035
        %v3390 = vpop.f32.mrf.mxu0
        %v3391 = vadd.f32 %v3278, %v3390
        %3392 = vmatmul.f32.gmra.mxu0 %v2038
        %v3393 = vpop.f32.mrf.mxu0
        %v3394 = vadd.f32 %v3281, %v3393
        %3395 = vmatmul.f32.gmra.mxu0 %v2041
        %v3396 = vpop.f32.mrf.mxu0
        %v3397 = vadd.f32 %v3284, %v3396
        %3398 = vmatmul.f32.gmra.mxu0 %v2044
        %v3399 = vpop.f32.mrf.mxu0
        %v3400 = vadd.f32 %v3287, %v3399
        %3401 = vmatmul.f32.gmra.mxu0 %v2047
        %v3402 = vpop.f32.mrf.mxu0
        %v3403 = vadd.f32 %v3290, %v3402
        %3404 = vmatmul.f32.gmra.mxu0 %v2050
        %v3405 = vpop.f32.mrf.mxu0
        %v3406 = vadd.f32 %v3293, %v3405
        %3407 = vmatmul.f32.gmra.mxu0 %v2053
        %v3408 = vpop.f32.mrf.mxu0
        %v3409 = vadd.f32 %v3296, %v3408
        %3410 = vmatmul.f32.gmra.mxu0 %v2056
        %v3411 = vpop.f32.mrf.mxu0
        %v3412 = vadd.f32 %v3299, %v3411
        %3413 = vmatmul.f32.gmra.mxu0 %v2059
        %v3414 = vpop.f32.mrf.mxu0
        %v3415 = vadd.f32 %v3302, %v3414
        %3416 = vmatmul.f32.gmra.mxu0 %v2062
        %v3417 = vpop.f32.mrf.mxu0
        %v3418 = vadd.f32 %v3305, %v3417
        %3419 = vmatmul.f32.gmra.mxu0 %v2065
        %v3420 = vpop.f32.mrf.mxu0
        %v3421 = vadd.f32 %v3308, %v3420
        %3422 = vmatmul.f32.gmra.mxu0 %v2068
        %v3423 = vpop.f32.mrf.mxu0
        %v3424 = vadd.f32 %v3311, %v3423
        %3425 = vmatmul.f32.gmra.mxu0 %v2071
        %v3426 = vpop.f32.mrf.mxu0
        %v3427 = vadd.f32 %v3314, %v3426
        %3428 = vmatmul.f32.gmra.mxu0 %v2074
        %v3429 = vpop.f32.mrf.mxu0
        %v3430 = vadd.f32 %v3317, %v3429
        %3431 = vmatmul.f32.gmra.mxu0 %v2077
        %v3432 = vpop.f32.mrf.mxu0
        %v3433 = vadd.f32 %v3320, %v3432
        %3434 = vmatmul.f32.gmra.mxu0 %v2080
        %v3435 = vpop.f32.mrf.mxu0
        %v3436 = vadd.f32 %v3323, %v3435
        %3437 = vmatmul.f32.gmra.mxu0 %v2083
        %v3438 = vpop.f32.mrf.mxu0
        %v3439 = vadd.f32 %v3326, %v3438
        %3440 = vmatmul.f32.gmra.mxu0 %v2086
        %v3441 = vpop.f32.mrf.mxu0
        %v3442 = vadd.f32 %v3329, %v3441
        %3443 = vmatmul.f32.gmra.mxu0 %v2089
        %v3444 = vpop.f32.mrf.mxu0
        %v3445 = vadd.f32 %v3332, %v3444
        %3446 = vdwg.mxu0
        %v3447 = vmax.f32 %v2448, 0.0
        %v3448 = vmax.f32 %v2900, 0.0
        %v3449 = vmax.f32 %v3352, 0.0
        %v3450 = vmax.f32 %v2451, 0.0
        %v3451 = vmax.f32 %v2903, 0.0
        %v3452 = vmax.f32 %v3355, 0.0
        %v3453 = vmax.f32 %v2454, 0.0
        %v3454 = vmax.f32 %v2906, 0.0
        %v3455 = vmax.f32 %v3358, 0.0
        %v3456 = vmax.f32 %v2457, 0.0
        %v3457 = vmax.f32 %v2909, 0.0
        %v3458 = vmax.f32 %v3361, 0.0
        %v3459 = vmax.f32 %v2460, 0.0
        %v3460 = vmax.f32 %v2912, 0.0
        %v3461 = vmax.f32 %v3364, 0.0
        %v3462 = vmax.f32 %v2463, 0.0
        %v3463 = vmax.f32 %v2915, 0.0
        %v3464 = vmax.f32 %v3367, 0.0
        %v3465 = vmax.f32 %v2466, 0.0
        %v3466 = vmax.f32 %v2918, 0.0
        %v3467 = vmax.f32 %v3370, 0.0
        %v3468 = vmax.f32 %v2469, 0.0
        %v3469 = vmax.f32 %v2921, 0.0
        %v3470 = vmax.f32 %v3373, 0.0
        %v3471 = vmax.f32 %v2472, 0.0
        %v3472 = vmax.f32 %v2924, 0.0
        %v3473 = vmax.f32 %v3376, 0.0
        %v3474 = vmax.f32 %v2475, 0.0
        %v3475 = vmax.f32 %v2927, 0.0
        %v3476 = vmax.f32 %v3379, 0.0
        %v3477 = vmax.f32 %v2478, 0.0
        %v3478 = vmax.f32 %v2930, 0.0
        %v3479 = vmax.f32 %v3382, 0.0
        %v3480 = vmax.f32 %v2481, 0.0
        %v3481 = vmax.f32 %v2933, 0.0
        %v3482 = vmax.f32 %v3385, 0.0
        %v3483 = vmax.f32 %v2484, 0.0
        %v3484 = vmax.f32 %v2936, 0.0
        %v3485 = vmax.f32 %v3388, 0.0
        %v3486 = vmax.f32 %v2487, 0.0
        %v3487 = vmax.f32 %v2939, 0.0
        %v3488 = vmax.f32 %v3391, 0.0
        %v3489 = vmax.f32 %v2490, 0.0
        %v3490 = vmax.f32 %v2942, 0.0
        %v3491 = vmax.f32 %v3394, 0.0
        %v3492 = vmax.f32 %v2493, 0.0
        %v3493 = vmax.f32 %v2945, 0.0
        %v3494 = vmax.f32 %v3397, 0.0
        %v3495 = vmax.f32 %v2496, 0.0
        %v3496 = vmax.f32 %v2948, 0.0
        %v3497 = vmax.f32 %v3400, 0.0
        %v3498 = vmax.f32 %v2499, 0.0
        %v3499 = vmax.f32 %v2951, 0.0
        %v3500 = vmax.f32 %v3403, 0.0
        %v3501 = vmax.f32 %v2502, 0.0
        %v3502 = vmax.f32 %v2954, 0.0
        %v3503 = vmax.f32 %v3406, 0.0
        %v3504 = vmax.f32 %v2505, 0.0
        %v3505 = vmax.f32 %v2957, 0.0
        %v3506 = vmax.f32 %v3409, 0.0
        %v3507 = vmax.f32 %v2508, 0.0
        %v3508 = vmax.f32 %v2960, 0.0
        %v3509 = vmax.f32 %v3412, 0.0
        %v3510 = vmax.f32 %v2511, 0.0
        %v3511 = vmax.f32 %v2963, 0.0
        %v3512 = vmax.f32 %v3415, 0.0
        %v3513 = vmax.f32 %v2514, 0.0
        %v3514 = vmax.f32 %v2966, 0.0
        %v3515 = vmax.f32 %v3418, 0.0
        %v3516 = vmax.f32 %v2517, 0.0
        %v3517 = vmax.f32 %v2969, 0.0
        %v3518 = vmax.f32 %v3421, 0.0
        %v3519 = vmax.f32 %v2520, 0.0
        %v3520 = vmax.f32 %v2972, 0.0
        %v3521 = vmax.f32 %v3424, 0.0
        %v3522 = vmax.f32 %v2523, 0.0
        %v3523 = vmax.f32 %v2975, 0.0
        %v3524 = vmax.f32 %v3427, 0.0
        %v3525 = vmax.f32 %v2526, 0.0
        %v3526 = vmax.f32 %v2978, 0.0
        %v3527 = vmax.f32 %v3430, 0.0
        %v3528 = vmax.f32 %v2529, 0.0
        %v3529 = vmax.f32 %v2981, 0.0
        %v3530 = vmax.f32 %v3433, 0.0
        %v3531 = vmax.f32 %v2532, 0.0
        %v3532 = vmax.f32 %v2984, 0.0
        %v3533 = vmax.f32 %v3436, 0.0
        %v3534 = vmax.f32 %v2535, 0.0
        %v3535 = vmax.f32 %v2987, 0.0
        %v3536 = vmax.f32 %v3439, 0.0
        %v3537 = vmax.f32 %v2538, 0.0
        %v3538 = vmax.f32 %v2990, 0.0
        %v3539 = vmax.f32 %v3442, 0.0
        %v3540 = vmax.f32 %v2541, 0.0
        %v3541 = vmax.f32 %v2993, 0.0
        %v3542 = vmax.f32 %v3445, 0.0
        %v3543 = vld [vmem:[%s7] sm:$0xff]
        %v3544 = vld [vmem:[%s7 + $0x8] sm:$0xff]
        %v3545 = vld [vmem:[%s7 + $0x10] sm:$0xff]
        %v3546 = vld [vmem:[%s7 + $0x18] sm:$0xff]
        %v3547 = vld [vmem:[%s7 + $0x20] sm:$0xff]
        %v3548 = vld [vmem:[%s7 + $0x28] sm:$0xff]
        %v3549 = vld [vmem:[%s7 + $0x30] sm:$0xff]
        %v3550 = vld [vmem:[%s7 + $0x38] sm:$0xff]
        %v3551 = vld [vmem:[%s7 + $0x40] sm:$0xff]
        %v3552 = vld [vmem:[%s7 + $0x48] sm:$0xff]
        %v3553 = vld [vmem:[%s7 + $0x50] sm:$0xff]
        %v3554 = vld [vmem:[%s7 + $0x58] sm:$0xff]
        %v3555 = vld [vmem:[%s7 + $0x60] sm:$0xff]
        %v3556 = vld [vmem:[%s7 + $0x68] sm:$0xff]
        %v3557 = vld [vmem:[%s7 + $0x70] sm:$0xff]
        %v3558 = vld [vmem:[%s7 + $0x78] sm:$0xff]
        %v3559 = vld [vmem:[%s7 + $0x80] sm:$0xff]
        %v3560 = vld [vmem:[%s7 + $0x88] sm:$0xff]
        %v3561 = vld [vmem:[%s7 + $0x90] sm:$0xff]
        %v3562 = vld [vmem:[%s7 + $0x98] sm:$0xff]
        %v3563 = vld [vmem:[%s7 + $0xa0] sm:$0xff]
        %v3564 = vld [vmem:[%s7 + $0xa8] sm:$0xff]
        %v3565 = vld [vmem:[%s7 + $0xb0] sm:$0xff]
        %v3566 = vld [vmem:[%s7 + $0xb8] sm:$0xff]
        %v3567 = vld [vmem:[%s7 + $0xc0] sm:$0xff]
        %v3568 = vld [vmem:[%s7 + $0xc8] sm:$0xff]
        %v3569 = vld [vmem:[%s7 + $0xd0] sm:$0xff]
        %v3570 = vld [vmem:[%s7 + $0xd8] sm:$0xff]
        %v3571 = vld [vmem:[%s7 + $0xe0] sm:$0xff]
        %v3572 = vld [vmem:[%s7 + $0xe8] sm:$0xff]
        %v3573 = vld [vmem:[%s7 + $0xf0] sm:$0xff]
        %v3574 = vld [vmem:[%s7 + $0xf8] sm:$0xff]
        %v3575 = vld [vmem:[%s7 + $0x100] sm:$0xff]
        %v3576 = vld [vmem:[%s7 + $0x108] sm:$0xff]
        %v3577 = vld [vmem:[%s7 + $0x110] sm:$0xff]
        %v3578 = vld [vmem:[%s7 + $0x118] sm:$0xff]
        %v3579 = vld [vmem:[%s7 + $0x120] sm:$0xff]
        %v3580 = vld [vmem:[%s7 + $0x128] sm:$0xf]
        %s3581 = sld [smem:[#allocation2]]
        %v3582 = vstv %s3581
        %vm3583 = vcmask 359424
        %v3585 = vsel %vm3583, %v3449, 0
        %v3588 = vsel %vm3583, %v3452, 0
        %v3591 = vsel %vm3583, %v3455, 0
        %v3594 = vsel %vm3583, %v3458, 0
        %v3597 = vsel %vm3583, %v3461, 0
        %v3600 = vsel %vm3583, %v3464, 0
        %v3603 = vsel %vm3583, %v3467, 0
        %v3606 = vsel %vm3583, %v3470, 0
        %v3609 = vsel %vm3583, %v3473, 0
        %v3612 = vsel %vm3583, %v3476, 0
        %v3615 = vsel %vm3583, %v3479, 0
        %v3618 = vsel %vm3583, %v3482, 0
        %v3621 = vsel %vm3583, %v3485, 0
        %v3624 = vsel %vm3583, %v3488, 0
        %v3627 = vsel %vm3583, %v3491, 0
        %v3630 = vsel %vm3583, %v3494, 0
        %v3633 = vsel %vm3583, %v3497, 0
        %v3636 = vsel %vm3583, %v3500, 0
        %v3639 = vsel %vm3583, %v3503, 0
        %v3642 = vsel %vm3583, %v3506, 0
        %v3645 = vsel %vm3583, %v3509, 0
        %v3648 = vsel %vm3583, %v3512, 0
        %v3651 = vsel %vm3583, %v3515, 0
        %v3654 = vsel %vm3583, %v3518, 0
        %v3657 = vsel %vm3583, %v3521, 0
        %v3660 = vsel %vm3583, %v3524, 0
        %v3663 = vsel %vm3583, %v3527, 0
        %v3666 = vsel %vm3583, %v3530, 0
        %v3669 = vsel %vm3583, %v3533, 0
        %v3672 = vsel %vm3583, %v3536, 0
        %v3675 = vsel %vm3583, %v3539, 0
        %v3678 = vsel %vm3583, %v3542, 0
        %v3681 = vsel %vm560, %v3580, 0
        %3683 = vmatpush.msra.mxu0 %v3558
        %3684 = vmatpush.msra.mxu0 %v3557
        %3685 = vmatpush.msra.mxu0 %v3556
        %3686 = vmatpush.msra.mxu0 %v3555
        %3687 = vmatpush.msra.mxu0 %v3554
        %3688 = vmatpush.msra.mxu0 %v3553
        %3689 = vmatpush.msra.mxu0 %v3552
        %3690 = vmatpush.msra.mxu0 %v3551
        %3691 = vmatpush.msra.mxu0 %v3550
        %3692 = vmatpush.msra.mxu0 %v3549
        %3693 = vmatpush.msra.mxu0 %v3548
        %3694 = vmatpush.msra.mxu0 %v3547
        %3695 = vmatpush.msra.mxu0 %v3546
        %3696 = vmatpush.msra.mxu0 %v3545
        %3697 = vmatpush.msra.mxu0 %v3544
        %3698 = vmatpush.msra.mxu0 %v3543
        %3699 = vmatmul.f32.gmra.mxu0 %v3447
        %v3700 = vpop.f32.mrf.mxu0
        %v3701 = vadd.f32 %v3582, %v3700
        %3702 = vmatmul.f32.gmra.mxu0 %v3450
        %v3703 = vpop.f32.mrf.mxu0
        %v3704 = vadd.f32 %v3582, %v3703
        %3705 = vmatmul.f32.gmra.mxu0 %v3453
        %v3706 = vpop.f32.mrf.mxu0
        %v3707 = vadd.f32 %v3582, %v3706
        %3708 = vmatmul.f32.gmra.mxu0 %v3456
        %v3709 = vpop.f32.mrf.mxu0
        %v3710 = vadd.f32 %v3582, %v3709
        %3711 = vmatmul.f32.gmra.mxu0 %v3459
        %v3712 = vpop.f32.mrf.mxu0
        %v3713 = vadd.f32 %v3582, %v3712
        %3714 = vmatmul.f32.gmra.mxu0 %v3462
        %v3715 = vpop.f32.mrf.mxu0
        %v3716 = vadd.f32 %v3582, %v3715
        %3717 = vmatmul.f32.gmra.mxu0 %v3465
        %v3718 = vpop.f32.mrf.mxu0
        %v3719 = vadd.f32 %v3582, %v3718
        %3720 = vmatmul.f32.gmra.mxu0 %v3468
        %v3721 = vpop.f32.mrf.mxu0
        %v3722 = vadd.f32 %v3582, %v3721
        %3723 = vmatmul.f32.gmra.mxu0 %v3471
        %v3724 = vpop.f32.mrf.mxu0
        %v3725 = vadd.f32 %v3582, %v3724
        %3726 = vmatmul.f32.gmra.mxu0 %v3474
        %v3727 = vpop.f32.mrf.mxu0
        %v3728 = vadd.f32 %v3582, %v3727
        %3729 = vmatmul.f32.gmra.mxu0 %v3477
        %v3730 = vpop.f32.mrf.mxu0
        %v3731 = vadd.f32 %v3582, %v3730
        %3732 = vmatmul.f32.gmra.mxu0 %v3480
        %v3733 = vpop.f32.mrf.mxu0
        %v3734 = vadd.f32 %v3582, %v3733
        %3735 = vmatmul.f32.gmra.mxu0 %v3483
        %v3736 = vpop.f32.mrf.mxu0
        %v3737 = vadd.f32 %v3582, %v3736
        %3738 = vmatmul.f32.gmra.mxu0 %v3486
        %v3739 = vpop.f32.mrf.mxu0
        %v3740 = vadd.f32 %v3582, %v3739
        %3741 = vmatmul.f32.gmra.mxu0 %v3489
        %v3742 = vpop.f32.mrf.mxu0
        %v3743 = vadd.f32 %v3582, %v3742
        %3744 = vmatmul.f32.gmra.mxu0 %v3492
        %v3745 = vpop.f32.mrf.mxu0
        %v3746 = vadd.f32 %v3582, %v3745
        %3747 = vmatmul.f32.gmra.mxu0 %v3495
        %v3748 = vpop.f32.mrf.mxu0
        %v3749 = vadd.f32 %v3582, %v3748
        %3750 = vmatmul.f32.gmra.mxu0 %v3498
        %v3751 = vpop.f32.mrf.mxu0
        %v3752 = vadd.f32 %v3582, %v3751
        %3753 = vmatmul.f32.gmra.mxu0 %v3501
        %v3754 = vpop.f32.mrf.mxu0
        %v3755 = vadd.f32 %v3582, %v3754
        %3756 = vmatmul.f32.gmra.mxu0 %v3504
        %v3757 = vpop.f32.mrf.mxu0
        %v3758 = vadd.f32 %v3582, %v3757
        %3759 = vmatmul.f32.gmra.mxu0 %v3507
        %v3760 = vpop.f32.mrf.mxu0
        %v3761 = vadd.f32 %v3582, %v3760
        %3762 = vmatmul.f32.gmra.mxu0 %v3510
        %v3763 = vpop.f32.mrf.mxu0
        %v3764 = vadd.f32 %v3582, %v3763
        %3765 = vmatmul.f32.gmra.mxu0 %v3513
        %v3766 = vpop.f32.mrf.mxu0
        %v3767 = vadd.f32 %v3582, %v3766
        %3768 = vmatmul.f32.gmra.mxu0 %v3516
        %v3769 = vpop.f32.mrf.mxu0
        %v3770 = vadd.f32 %v3582, %v3769
        %3771 = vmatmul.f32.gmra.mxu0 %v3519
        %v3772 = vpop.f32.mrf.mxu0
        %v3773 = vadd.f32 %v3582, %v3772
        %3774 = vmatmul.f32.gmra.mxu0 %v3522
        %v3775 = vpop.f32.mrf.mxu0
        %v3776 = vadd.f32 %v3582, %v3775
        %3777 = vmatmul.f32.gmra.mxu0 %v3525
        %v3778 = vpop.f32.mrf.mxu0
        %v3779 = vadd.f32 %v3582, %v3778
        %3780 = vmatmul.f32.gmra.mxu0 %v3528
        %v3781 = vpop.f32.mrf.mxu0
        %v3782 = vadd.f32 %v3582, %v3781
        %3783 = vmatmul.f32.gmra.mxu0 %v3531
        %v3784 = vpop.f32.mrf.mxu0
        %v3785 = vadd.f32 %v3582, %v3784
        %3786 = vmatmul.f32.gmra.mxu0 %v3534
        %v3787 = vpop.f32.mrf.mxu0
        %v3788 = vadd.f32 %v3582, %v3787
        %3789 = vmatmul.f32.gmra.mxu0 %v3537
        %v3790 = vpop.f32.mrf.mxu0
        %v3791 = vadd.f32 %v3582, %v3790
        %3792 = vmatmul.f32.gmra.mxu0 %v3540
        %v3793 = vpop.f32.mrf.mxu0
        %v3794 = vadd.f32 %v3582, %v3793
        %3795 = vdwg.mxu0
        %3796 = vmatpush.msra.mxu0 %v3574
        %3797 = vmatpush.msra.mxu0 %v3573
        %3798 = vmatpush.msra.mxu0 %v3572
        %3799 = vmatpush.msra.mxu0 %v3571
        %3800 = vmatpush.msra.mxu0 %v3570
        %3801 = vmatpush.msra.mxu0 %v3569
        %3802 = vmatpush.msra.mxu0 %v3568
        %3803 = vmatpush.msra.mxu0 %v3567
        %3804 = vmatpush.msra.mxu0 %v3566
        %3805 = vmatpush.msra.mxu0 %v3565
        %3806 = vmatpush.msra.mxu0 %v3564
        %3807 = vmatpush.msra.mxu0 %v3563
        %3808 = vmatpush.msra.mxu0 %v3562
        %3809 = vmatpush.msra.mxu0 %v3561
        %3810 = vmatpush.msra.mxu0 %v3560
        %3811 = vmatpush.msra.mxu0 %v3559
        %3812 = vmatmul.f32.gmra.mxu0 %v3448
        %v3813 = vpop.f32.mrf.mxu0
        %v3814 = vadd.f32 %v3701, %v3813
        %3815 = vmatmul.f32.gmra.mxu0 %v3451
        %v3816 = vpop.f32.mrf.mxu0
        %v3817 = vadd.f32 %v3704, %v3816
        %3818 = vmatmul.f32.gmra.mxu0 %v3454
        %v3819 = vpop.f32.mrf.mxu0
        %v3820 = vadd.f32 %v3707, %v3819
        %3821 = vmatmul.f32.gmra.mxu0 %v3457
        %v3822 = vpop.f32.mrf.mxu0
        %v3823 = vadd.f32 %v3710, %v3822
        %3824 = vmatmul.f32.gmra.mxu0 %v3460
        %v3825 = vpop.f32.mrf.mxu0
        %v3826 = vadd.f32 %v3713, %v3825
        %3827 = vmatmul.f32.gmra.mxu0 %v3463
        %v3828 = vpop.f32.mrf.mxu0
        %v3829 = vadd.f32 %v3716, %v3828
        %3830 = vmatmul.f32.gmra.mxu0 %v3466
        %v3831 = vpop.f32.mrf.mxu0
        %v3832 = vadd.f32 %v3719, %v3831
        %3833 = vmatmul.f32.gmra.mxu0 %v3469
        %v3834 = vpop.f32.mrf.mxu0
        %v3835 = vadd.f32 %v3722, %v3834
        %3836 = vmatmul.f32.gmra.mxu0 %v3472
        %v3837 = vpop.f32.mrf.mxu0
        %v3838 = vadd.f32 %v3725, %v3837
        %3839 = vmatmul.f32.gmra.mxu0 %v3475
        %v3840 = vpop.f32.mrf.mxu0
        %v3841 = vadd.f32 %v3728, %v3840
        %3842 = vmatmul.f32.gmra.mxu0 %v3478
        %v3843 = vpop.f32.mrf.mxu0
        %v3844 = vadd.f32 %v3731, %v3843
        %3845 = vmatmul.f32.gmra.mxu0 %v3481
        %v3846 = vpop.f32.mrf.mxu0
        %v3847 = vadd.f32 %v3734, %v3846
        %3848 = vmatmul.f32.gmra.mxu0 %v3484
        %v3849 = vpop.f32.mrf.mxu0
        %v3850 = vadd.f32 %v3737, %v3849
        %3851 = vmatmul.f32.gmra.mxu0 %v3487
        %v3852 = vpop.f32.mrf.mxu0
        %v3853 = vadd.f32 %v3740, %v3852
        %3854 = vmatmul.f32.gmra.mxu0 %v3490
        %v3855 = vpop.f32.mrf.mxu0
        %v3856 = vadd.f32 %v3743, %v3855
        %3857 = vmatmul.f32.gmra.mxu0 %v3493
        %v3858 = vpop.f32.mrf.mxu0
        %v3859 = vadd.f32 %v3746, %v3858
        %3860 = vmatmul.f32.gmra.mxu0 %v3496
        %v3861 = vpop.f32.mrf.mxu0
        %v3862 = vadd.f32 %v3749, %v3861
        %3863 = vmatmul.f32.gmra.mxu0 %v3499
        %v3864 = vpop.f32.mrf.mxu0
        %v3865 = vadd.f32 %v3752, %v3864
        %3866 = vmatmul.f32.gmra.mxu0 %v3502
        %v3867 = vpop.f32.mrf.mxu0
        %v3868 = vadd.f32 %v3755, %v3867
        %3869 = vmatmul.f32.gmra.mxu0 %v3505
        %v3870 = vpop.f32.mrf.mxu0
        %v3871 = vadd.f32 %v3758, %v3870
        %3872 = vmatmul.f32.gmra.mxu0 %v3508
        %v3873 = vpop.f32.mrf.mxu0
        %v3874 = vadd.f32 %v3761, %v3873
        %3875 = vmatmul.f32.gmra.mxu0 %v3511
        %v3876 = vpop.f32.mrf.mxu0
        %v3877 = vadd.f32 %v3764, %v3876
        %3878 = vmatmul.f32.gmra.mxu0 %v3514
        %v3879 = vpop.f32.mrf.mxu0
        %v3880 = vadd.f32 %v3767, %v3879
        %3881 = vmatmul.f32.gmra.mxu0 %v3517
        %v3882 = vpop.f32.mrf.mxu0
        %v3883 = vadd.f32 %v3770, %v3882
        %3884 = vmatmul.f32.gmra.mxu0 %v3520
        %v3885 = vpop.f32.mrf.mxu0
        %v3886 = vadd.f32 %v3773, %v3885
        %3887 = vmatmul.f32.gmra.mxu0 %v3523
        %v3888 = vpop.f32.mrf.mxu0
        %v3889 = vadd.f32 %v3776, %v3888
        %3890 = vmatmul.f32.gmra.mxu0 %v3526
        %v3891 = vpop.f32.mrf.mxu0
        %v3892 = vadd.f32 %v3779, %v3891
        %3893 = vmatmul.f32.gmra.mxu0 %v3529
        %v3894 = vpop.f32.mrf.mxu0
        %v3895 = vadd.f32 %v3782, %v3894
        %3896 = vmatmul.f32.gmra.mxu0 %v3532
        %v3897 = vpop.f32.mrf.mxu0
        %v3898 = vadd.f32 %v3785, %v3897
        %3899 = vmatmul.f32.gmra.mxu0 %v3535
        %v3900 = vpop.f32.mrf.mxu0
        %v3901 = vadd.f32 %v3788, %v3900
        %3902 = vmatmul.f32.gmra.mxu0 %v3538
        %v3903 = vpop.f32.mrf.mxu0
        %v3904 = vadd.f32 %v3791, %v3903
        %3905 = vmatmul.f32.gmra.mxu0 %v3541
        %v3906 = vpop.f32.mrf.mxu0
        %v3907 = vadd.f32 %v3794, %v3906
        %3908 = vdwg.mxu0
        %3909 = vmatpush.msra.mxu0 0.0
        %3910 = vmatpush.msra.mxu0 0.0
        %3911 = vmatpush.msra.mxu0 0.0
        %3912 = vmatpush.msra.mxu0 0.0
        %3913 = vmatpush.msra.mxu0 0.0
        %3914 = vmatpush.msra.mxu0 0.0
        %3915 = vmatpush.msra.mxu0 0.0
        %3916 = vmatpush.msra.mxu0 0.0
        %3917 = vmatpush.msra.mxu0 0.0
        %3918 = vmatpush.msra.mxu0 0.0
        %3919 = vmatpush.msra.mxu0 %v3681
        %3920 = vmatpush.msra.mxu0 %v3579
        %3921 = vmatpush.msra.mxu0 %v3578
        %3922 = vmatpush.msra.mxu0 %v3577
        %3923 = vmatpush.msra.mxu0 %v3576
        %3924 = vmatpush.msra.mxu0 %v3575
        %3925 = vmatmul.f32.gmra.mxu0 %v3585
        %v3926 = vpop.f32.mrf.mxu0
        %v3927 = vadd.f32 %v3814, %v3926
        %3928 = vmatmul.f32.gmra.mxu0 %v3588
        %v3929 = vpop.f32.mrf.mxu0
        %v3930 = vadd.f32 %v3817, %v3929
        %3931 = vmatmul.f32.gmra.mxu0 %v3591
        %v3932 = vpop.f32.mrf.mxu0
        %v3933 = vadd.f32 %v3820, %v3932
        %3934 = vmatmul.f32.gmra.mxu0 %v3594
        %v3935 = vpop.f32.mrf.mxu0
        %v3936 = vadd.f32 %v3823, %v3935
        %3937 = vmatmul.f32.gmra.mxu0 %v3597
        %v3938 = vpop.f32.mrf.mxu0
        %v3939 = vadd.f32 %v3826, %v3938
        %3940 = vmatmul.f32.gmra.mxu0 %v3600
        %v3941 = vpop.f32.mrf.mxu0
        %v3942 = vadd.f32 %v3829, %v3941
        %3943 = vmatmul.f32.gmra.mxu0 %v3603
        %v3944 = vpop.f32.mrf.mxu0
        %v3945 = vadd.f32 %v3832, %v3944
        %3946 = vmatmul.f32.gmra.mxu0 %v3606
        %v3947 = vpop.f32.mrf.mxu0
        %v3948 = vadd.f32 %v3835, %v3947
        %3949 = vmatmul.f32.gmra.mxu0 %v3609
        %v3950 = vpop.f32.mrf.mxu0
        %v3951 = vadd.f32 %v3838, %v3950
        %3952 = vmatmul.f32.gmra.mxu0 %v3612
        %v3953 = vpop.f32.mrf.mxu0
        %v3954 = vadd.f32 %v3841, %v3953
        %3955 = vmatmul.f32.gmra.mxu0 %v3615
        %v3956 = vpop.f32.mrf.mxu0
        %v3957 = vadd.f32 %v3844, %v3956
        %3958 = vmatmul.f32.gmra.mxu0 %v3618
        %v3959 = vpop.f32.mrf.mxu0
        %v3960 = vadd.f32 %v3847, %v3959
        %3961 = vmatmul.f32.gmra.mxu0 %v3621
        %v3962 = vpop.f32.mrf.mxu0
        %v3963 = vadd.f32 %v3850, %v3962
        %3964 = vmatmul.f32.gmra.mxu0 %v3624
        %v3965 = vpop.f32.mrf.mxu0
        %v3966 = vadd.f32 %v3853, %v3965
        %3967 = vmatmul.f32.gmra.mxu0 %v3627
        %v3968 = vpop.f32.mrf.mxu0
        %v3969 = vadd.f32 %v3856, %v3968
        %3970 = vmatmul.f32.gmra.mxu0 %v3630
        %v3971 = vpop.f32.mrf.mxu0
        %v3972 = vadd.f32 %v3859, %v3971
        %3973 = vmatmul.f32.gmra.mxu0 %v3633
        %v3974 = vpop.f32.mrf.mxu0
        %v3975 = vadd.f32 %v3862, %v3974
        %3976 = vmatmul.f32.gmra.mxu0 %v3636
        %v3977 = vpop.f32.mrf.mxu0
        %v3978 = vadd.f32 %v3865, %v3977
        %3979 = vmatmul.f32.gmra.mxu0 %v3639
        %v3980 = vpop.f32.mrf.mxu0
        %v3981 = vadd.f32 %v3868, %v3980
        %3982 = vmatmul.f32.gmra.mxu0 %v3642
        %v3983 = vpop.f32.mrf.mxu0
        %v3984 = vadd.f32 %v3871, %v3983
        %3985 = vmatmul.f32.gmra.mxu0 %v3645
        %v3986 = vpop.f32.mrf.mxu0
        %v3987 = vadd.f32 %v3874, %v3986
        %3988 = vmatmul.f32.gmra.mxu0 %v3648
        %v3989 = vpop.f32.mrf.mxu0
        %v3990 = vadd.f32 %v3877, %v3989
        %3991 = vmatmul.f32.gmra.mxu0 %v3651
        %v3992 = vpop.f32.mrf.mxu0
        %v3993 = vadd.f32 %v3880, %v3992
        %3994 = vmatmul.f32.gmra.mxu0 %v3654
        %v3995 = vpop.f32.mrf.mxu0
        %v3996 = vadd.f32 %v3883, %v3995
        %3997 = vmatmul.f32.gmra.mxu0 %v3657
        %v3998 = vpop.f32.mrf.mxu0
        %v3999 = vadd.f32 %v3886, %v3998
        %4000 = vmatmul.f32.gmra.mxu0 %v3660
        %v4001 = vpop.f32.mrf.mxu0
        %v4002 = vadd.f32 %v3889, %v4001
        %4003 = vmatmul.f32.gmra.mxu0 %v3663
        %v4004 = vpop.f32.mrf.mxu0
        %v4005 = vadd.f32 %v3892, %v4004
        %4006 = vmatmul.f32.gmra.mxu0 %v3666
        %v4007 = vpop.f32.mrf.mxu0
        %v4008 = vadd.f32 %v3895, %v4007
        %4009 = vmatmul.f32.gmra.mxu0 %v3669
        %v4010 = vpop.f32.mrf.mxu0
        %v4011 = vadd.f32 %v3898, %v4010
        %4012 = vmatmul.f32.gmra.mxu0 %v3672
        %v4013 = vpop.f32.mrf.mxu0
        %v4014 = vadd.f32 %v3901, %v4013
        %4015 = vmatmul.f32.gmra.mxu0 %v3675
        %v4016 = vpop.f32.mrf.mxu0
        %v4017 = vadd.f32 %v3904, %v4016
        %4018 = vmatmul.f32.gmra.mxu0 %v3678
        %v4019 = vpop.f32.mrf.mxu0
        %v4020 = vadd.f32 %v3907, %v4019
        %4021 = vdwg.mxu0
        %vm4022 = vcmask 7168
        %4023 = vst.msk [vmem:[%s374] sm:$0xff] %vm4022, %v3927
        %4024 = vst.msk [vmem:[%s374 + $0x8] sm:$0xff] %vm4022, %v3930
        %4025 = vst.msk [vmem:[%s374 + $0x10] sm:$0xff] %vm4022, %v3933
        %4026 = vst.msk [vmem:[%s374 + $0x18] sm:$0xff] %vm4022, %v3936
        %4027 = vst.msk [vmem:[%s374 + $0x20] sm:$0xff] %vm4022, %v3939
        %4028 = vst.msk [vmem:[%s374 + $0x28] sm:$0xff] %vm4022, %v3942
        %4029 = vst.msk [vmem:[%s374 + $0x30] sm:$0xff] %vm4022, %v3945
        %4030 = vst.msk [vmem:[%s374 + $0x38] sm:$0xff] %vm4022, %v3948
        %4031 = vst.msk [vmem:[%s374 + $0x40] sm:$0xff] %vm4022, %v3951
        %4032 = vst.msk [vmem:[%s374 + $0x48] sm:$0xff] %vm4022, %v3954
        %4033 = vst.msk [vmem:[%s374 + $0x50] sm:$0xff] %vm4022, %v3957
        %4034 = vst.msk [vmem:[%s374 + $0x58] sm:$0xff] %vm4022, %v3960
        %4035 = vst.msk [vmem:[%s374 + $0x60] sm:$0xff] %vm4022, %v3963
        %4036 = vst.msk [vmem:[%s374 + $0x68] sm:$0xff] %vm4022, %v3966
        %4037 = vst.msk [vmem:[%s374 + $0x70] sm:$0xff] %vm4022, %v3969
        %4038 = vst.msk [vmem:[%s374 + $0x78] sm:$0xff] %vm4022, %v3972
        %4039 = vst.msk [vmem:[%s374 + $0x80] sm:$0xff] %vm4022, %v3975
        %4040 = vst.msk [vmem:[%s374 + $0x88] sm:$0xff] %vm4022, %v3978
        %4041 = vst.msk [vmem:[%s374 + $0x90] sm:$0xff] %vm4022, %v3981
        %4042 = vst.msk [vmem:[%s374 + $0x98] sm:$0xff] %vm4022, %v3984
        %4043 = vst.msk [vmem:[%s374 + $0xa0] sm:$0xff] %vm4022, %v3987
        %4044 = vst.msk [vmem:[%s374 + $0xa8] sm:$0xff] %vm4022, %v3990
        %4045 = vst.msk [vmem:[%s374 + $0xb0] sm:$0xff] %vm4022, %v3993
        %4046 = vst.msk [vmem:[%s374 + $0xb8] sm:$0xff] %vm4022, %v3996
        %4047 = vst.msk [vmem:[%s374 + $0xc0] sm:$0xff] %vm4022, %v3999
        %4048 = vst.msk [vmem:[%s374 + $0xc8] sm:$0xff] %vm4022, %v4002
        %4049 = vst.msk [vmem:[%s374 + $0xd0] sm:$0xff] %vm4022, %v4005
        %4050 = vst.msk [vmem:[%s374 + $0xd8] sm:$0xff] %vm4022, %v4008
        %4051 = vst.msk [vmem:[%s374 + $0xe0] sm:$0xff] %vm4022, %v4011
        %4052 = vst.msk [vmem:[%s374 + $0xe8] sm:$0xff] %vm4022, %v4014
        %4053 = vst.msk [vmem:[%s374 + $0xf0] sm:$0xff] %vm4022, %v4017
        %4054 = vst.msk [vmem:[%s374 + $0xf8] sm:$0xff] %vm4022, %v4020
        %s4055 = smul.u32 32, %s22
        %p4056 = scmp.lt.s32.totalorder %s4055, 63
        %s4057 = scalar_select %p4056, %s4055, 63
        %s4058 = smul.addr %s4057, 8
        %s4059 = scalar_lea.vmem %s9, %s4058
        // Predicated region
        $region61: #{tpu_custom_call.1} parent=55 // pred_check
          %p4060 = pneg %p239
        $region62: #{tpu_custom_call.1} parent=55 // pred_check_branch
          %4062 = sbr.rel (%p4060) target = $region64
        $region63: #{tpu_custom_call.1} parent=55 // pred_region
          %s4063 = smul.u32 32, %s22
        $region64: #{tpu_custom_call.1} parent=55 // pred_fallthru
          _
      $region56: #{tpu_custom_call.1} parent=5 // pred_fallthru
        _
      %p4064 = scmp.le.s32.totalorder 2, %s17
      // Predicated region
      $region65: #{tpu_custom_call.1} parent=5 // pred_check
        %p4065 = pneg %p4064
      $region66: #{tpu_custom_call.1} parent=5 // pred_check_branch
        %4067 = sbr.rel (%p4065) target = $region68
      $region67: #{tpu_custom_call.1} parent=5 // pred_region
        %s4068 = ssub.s32 %s17, 2
        // Predicated region
        $region69: #{tpu_custom_call.1} parent=67 // pred_check
          %p4069 = pneg %p245
        $region70: #{tpu_custom_call.1} parent=67 // pred_check_branch
          %4071 = sbr.rel (%p4069) target = $region72
        $region71: #{tpu_custom_call.1} parent=67 // pred_region
          %s4072 = smul.u32 32, %s23
          %p4073 = scmp.lt.s32.totalorder %s4072, 63
          %s4074 = scalar_select %p4073, %s4072, 63
          %s4075 = smul.addr %s4074, 8
          %s4076 = scalar_lea.vmem %s9, %s4075
        $region72: #{tpu_custom_call.1} parent=67 // pred_fallthru
          _
      $region68: #{tpu_custom_call.1} parent=5 // pred_fallthru
        _
    $region6: #{tpu_custom_call.1} parent=1 // loop_footer
      %s21 = sadd.s32 1, %s17
    $region7: #{tpu_custom_call.1} parent=1 // loop_footer_branch
      %16 = sbr.rel target = $region3
    $region8: #{tpu_custom_call.1} parent=1 // loop_exit
      _
    %4077 = vsyncpa [#allocation4], 1
    %s4078 = scalar_lea.sflag [#allocation4], 1
    %4079 = vsyncpa %s4078, 1

</llo_original>
